<compile_context>
chip_gen: v6e
topology: v6e:2x2x1
jax: 0.10.0
libtpu: 0.0.40
codegen_flags: <defaults>
</compile_context>

<pallas_src>
import numpy as np
import jax
import jax.numpy as jnp
from jax import lax
from jax.experimental import pallas as pl
from jax.experimental.pallas import tpu as pltpu


# ---------------------------------------------------------------------------
# Host-side weight packing (plain numpy / jnp, trace-friendly)
# ---------------------------------------------------------------------------
def _conv3x3_band(w_oihw, W):
    """PyTorch OIHW (Cout, Cin, 3, 3) -> (3, W*Cin, W*Cout) per-dy banded matrices so a
    3x3 'SAME' conv over the merged (W*C) lane axis becomes 3 matmuls (W-boundary zeros
    are built into the band)."""
    Cout, Cin = int(w_oihw.shape[0]), int(w_oihw.shape[1])
    w = jnp.transpose(w_oihw, (2, 3, 1, 0)).astype(jnp.float32)          # (ky, kx, Cin, Cout)
    jj = np.arange(W)[:, None]
    j = np.arange(W)[None, :]
    sel = ((jj - j)[:, :, None] == (np.arange(3) - 1)[None, None, :]).astype(np.float32)
    S = jnp.asarray(sel)                                                 # (W_in, W_out, kx)
    band = jnp.einsum('jkd,ydab->yjakb', S, w)                           # (ky, W_in, Cin, W_out, Cout)
    return band.reshape(3, W * Cin, W * Cout)


def _conv1x1_band(ws_oihw, W):
    """1x1 conv weights (Cout, Cin, 1, 1) -> block-diagonal (W*Cin, W*Cout) matrix."""
    wm = jnp.transpose(ws_oihw[:, :, 0, 0], (1, 0)).astype(jnp.float32)  # (Cin, Cout)
    eye = jnp.asarray(np.eye(W, dtype=np.float32))
    band = jnp.einsum('jk,ab->jakb', eye, wm)                            # (W, Cin, W, Cout)
    return band.reshape(W * wm.shape[0], W * wm.shape[1])


def _tile_lanes(v, W):
    """(C,) per-channel vector -> (1, W*C) merged-lane row (lane index j*C + c)."""
    return jnp.tile(v.astype(jnp.float32), W).reshape(1, -1)


def _channel_sum_matrix(C, W):
    """(W*C, W*C) 0/1 matrix G with G[a,b] = (a%C == b%C): (1,W*C) @ G gives, in every lane,
    the sum over all W positions of that lane's channel (per-channel sum + lane broadcast)."""
    idx = np.arange(W * C)
    return jnp.asarray((idx[:, None] % C == idx[None, :] % C).astype(np.float32))


# ---------------------------------------------------------------------------
# Fused DownBlock kernel (single invocation, whole batch resident in VMEM)
# ---------------------------------------------------------------------------
def _make_downblock_kernel(N, H, W, block_meta):
    Hp = H + 2                       # per-image padded height (zero halo row above/below)
    Np = N * Hp                      # stacked padded rows (matmul M dimension)
    Ho, Wo = H // 2, W // 2

    def _shift_rows(q, k):
        # result[r] = q[r - k] with zero fill (k in {+1, -1}); tiny sublane copy.
        if k == 0:
            return q
        z = jnp.zeros((abs(k), q.shape[1]), q.dtype)
        if k > 0:
            return jnp.concatenate([z, q[:-k]], axis=0)
        return jnp.concatenate([q[-k:], z], axis=0)

    def _conv3x3(p, band_ref, bias, mask):
        """3x3/stride1/pad1 conv on a padded-stacked slab p (Np, W*Cin) with zero halo rows.
        bf16 MXU operands, f32 accumulation. Returns (Np, W*Cout) with halo rows re-zeroed."""
        pb = p.astype(jnp.bfloat16)
        q0 = jnp.dot(pb, band_ref[0], preferred_element_type=jnp.float32)
        q1 = jnp.dot(pb, band_ref[1], preferred_element_type=jnp.float32)
        q2 = jnp.dot(pb, band_ref[2], preferred_element_type=jnp.float32)
        # out[r] = q0[r-1] + q1[r] + q2[r+1]; halo-row contamination killed by the mask.
        return (_shift_rows(q0, 1) + q1 + _shift_rows(q2, -1) + bias) * mask

    def kernel(*refs):
        # ---- parse refs: x, per-block params, pool matrices, then outputs ----
        idx = 0
        x_ref = refs[idx]; idx += 1
        blk_refs = []
        for m in block_meta:
            k = 9 if m["has_proj"] else 7
            blk_refs.append(refs[idx: idx + k]); idx += k
        ph_ref = refs[idx]; pw_ref = refs[idx + 1]; idx += 2
        skip_refs = refs[idx: idx + len(block_meta)]
        pooled_ref = refs[idx + len(block_meta)]

        # interior-row mask: 1 for real image rows, 0 for the per-image halo rows
        r = lax.broadcasted_iota(jnp.int32, (Np, 1), 0) % Hp
        mask = jnp.logical_and(r >= 1, r <= H).astype(jnp.float32)        # (Np, 1)

        inv_count = 1.0 / float(N * H * W)
        A = x_ref[...].astype(jnp.float32)            # (Np, W*C0) padded-stacked, halos zero

        for bi, (m, br) in enumerate(zip(block_meta, blk_refs)):
            if m["has_proj"]:
                (g_ref, be_ref, G_ref, b1_ref, c1b_ref, b2_ref, c2b_ref, bs_ref, sb_ref) = br
            else:
                (g_ref, be_ref, G_ref, b1_ref, c1b_ref, b2_ref, c2b_ref) = br

            # ---- BatchNorm2d (training-mode batch stats) fused in-kernel ----
            # Halo rows are zero so full-column sums equal interior sums; per-channel
            # reduce + lane-broadcast via the tiny same-channel matmul G.
            s1 = jnp.sum(A, axis=0, keepdims=True)                        # (1, W*Cin)
            s2 = jnp.sum(A * A, axis=0, keepdims=True)
            S1 = jnp.dot(s1, G_ref[...], preferred_element_type=jnp.float32)
            S2 = jnp.dot(s2, G_ref[...], preferred_element_type=jnp.float32)
            mean = S1 * inv_count
            var = S2 * inv_count - mean * mean                            # biased var (BN normalizer)
            scale = g_ref[...] * lax.rsqrt(var + 1e-5)
            shift = be_ref[...] - mean * scale
            xn = (A * scale + shift) * mask                               # re-zero halos (conv padding)

            # ---- conv1 (3x3) -> Swish -> conv2 (3x3), all on the stacked slab ----
            y = _conv3x3(xn, b1_ref, c1b_ref[...], mask)
            y = y * jax.nn.sigmoid(y)                                     # swish(0)=0: halos stay zero
            y = _conv3x3(y, b2_ref, c2b_ref[...], mask)

            # ---- shortcut on the ORIGINAL (pre-BN) activation ----
            if m["has_proj"]:
                res = (jnp.dot(A.astype(jnp.bfloat16), bs_ref[...],
                               preferred_element_type=jnp.float32) + sb_ref[...]) * mask
            else:
                res = A
            A = y + res                                                   # halo rows remain zero

            # ---- skip output: lane-dense (H, W*Cout) interior rows per image ----
            for n in range(N):
                skip_refs[bi][n] = A[n * Hp + 1: n * Hp + 1 + H, :].astype(skip_refs[bi].dtype)

        # ---- fused AvgPool2d(2): row pool + lane pool as two small f32 matmuls ----
        t = jnp.dot(ph_ref[...], A, preferred_element_type=jnp.float32)   # (N*Ho, W*C)
        pld = 0.25 * jnp.dot(t, pw_ref[...], preferred_element_type=jnp.float32)
        for n in range(N):
            pooled_ref[n] = pld[n * Ho:(n + 1) * Ho, :].astype(pooled_ref.dtype)

    return kernel


# ---------------------------------------------------------------------------
# DownBlock forward: res_blocks (appending skips) -> avg_pool, all in one kernel
# ---------------------------------------------------------------------------
def down_block(inputs, params_list):
    """inputs = (x_nchw, skips). Returns (pooled_nchw, skips) where the skips appended by
    this block are in NHWC layout (perf review: avoid per-skip NCHW transposes)."""
    x_nchw, skips = inputs
    skips = list(skips)
    N, C0, H, W = (int(d) for d in x_nchw.shape)
    Ho, Wo = H // 2, W // 2
    Hp, Np = H + 2, N * (H + 2)

    # Input -> padded-stacked merged-lane layout (N*(H+2), W*C0), zero halo rows per image.
    x_nhwc = jnp.transpose(x_nchw, (0, 2, 3, 1))
    x_padded = jnp.pad(x_nhwc, ((0, 0), (1, 1), (0, 0), (0, 0))).reshape(Np, W * C0)

    block_meta = []
    flat_args = []
    C = C0
    for p in params_list:
        Cout, Cin = int(p["w1"].shape[0]), int(p["w1"].shape[1])
        assert Cin == C, "channel chain mismatch in params_list"
        has_proj = (Cin != Cout)
        block_meta.append(dict(has_proj=has_proj, cin=Cin, cout=Cout))
        flat_args += [
            _tile_lanes(p["bn_w"], W),                         # gamma   (1, W*Cin) f32
            _tile_lanes(p["bn_b"], W),                         # beta    (1, W*Cin) f32
            _channel_sum_matrix(Cin, W),                       # G       (W*Cin, W*Cin) f32
            _conv3x3_band(p["w1"], W).astype(jnp.bfloat16),    # band1   (3, W*Cin, W*Cout) bf16
            _tile_lanes(p["b1"], W),                           # bias1   (1, W*Cout) f32
            _conv3x3_band(p["w2"], W).astype(jnp.bfloat16),    # band2   (3, W*Cout, W*Cout) bf16
            _tile_lanes(p["b2"], W),                           # bias2   (1, W*Cout) f32
        ]
        if has_proj:
            flat_args += [
                _conv1x1_band(p["ws"], W).astype(jnp.bfloat16),  # shortcut (W*Cin, W*Cout) bf16
                _tile_lanes(p["bs"], W),                         # shortcut bias (1, W*Cout) f32
            ]
        C = Cout

    # Pooling matrices (act on padded-stacked rows / merged lanes of the LAST block output).
    ph = np.zeros((N * Ho, Np), np.float32)
    for n in range(N):
        for i in range(Ho):
            ph[n * Ho + i, n * Hp + 1 + 2 * i] = 1.0
            ph[n * Ho + i, n * Hp + 2 + 2 * i] = 1.0
    pw = np.zeros((W * C, Wo * C), np.float32)
    cols = np.arange(Wo * C)
    k, c = cols // C, cols % C
    pw[2 * k * C + c, cols] = 1.0
    pw[(2 * k + 1) * C + c, cols] = 1.0

    args = [x_padded] + flat_args + [jnp.asarray(ph), jnp.asarray(pw)]

    out_shapes = tuple(jax.ShapeDtypeStruct((N, H, W * m["cout"]), jnp.float32)
                       for m in block_meta)
    out_shapes = out_shapes + (jax.ShapeDtypeStruct((N, Ho, Wo * C), jnp.float32),)

    vmem_spec = pl.BlockSpec(memory_space=pltpu.MemorySpace.VMEM)
    outs = pl.pallas_call(
        _make_downblock_kernel(N, H, W, block_meta),
        out_shape=out_shapes,
        in_specs=[vmem_spec] * len(args),
        out_specs=tuple(vmem_spec for _ in out_shapes),
    )(*args)

    skip_ms = outs[:-1]
    pooled_m = outs[-1]
    for m, sm in zip(block_meta, skip_ms):
        skips.append(sm.reshape(N, H, W, m["cout"]))            # NHWC (free reshape of merged lanes)
    pooled = jnp.transpose(pooled_m.reshape(N, Ho, Wo, C), (0, 3, 1, 2))   # NCHW module output
    return pooled, skips


# ---------------------------------------------------------------------------
# Pure-JAX reference (NCHW) for validation
# ---------------------------------------------------------------------------
def reference_down_block(x, params_list):
    dn = ("NCHW", "OIHW", "NCHW")
    eps = 1e-5
    skips = []
    for p in params_list:
        Cout, Cin = p["w1"].shape[0], p["w1"].shape[1]
        if Cin != Cout:
            res = lax.conv_general_dilated(x, p["ws"], (1, 1), "SAME",
                                           dimension_numbers=dn) + p["bs"].reshape(1, -1, 1, 1)
        else:
            res = x
        mean = x.mean(axis=(0, 2, 3), keepdims=True)
        var = ((x - mean) ** 2).mean(axis=(0, 2, 3), keepdims=True)
        xn = (x - mean) / jnp.sqrt(var + eps)
        xn = xn * p["bn_w"].reshape(1, -1, 1, 1) + p["bn_b"].reshape(1, -1, 1, 1)
        y = lax.conv_general_dilated(xn, p["w1"], (1, 1), "SAME",
                                     dimension_numbers=dn) + p["b1"].reshape(1, -1, 1, 1)
        y = y * jax.nn.sigmoid(y)
        y = lax.conv_general_dilated(y, p["w2"], (1, 1), "SAME",
                                     dimension_numbers=dn) + p["b2"].reshape(1, -1, 1, 1)
        x = y + res
        skips.append(x)
    Nn, Cc, Hh, Ww = x.shape
    pooled = x.reshape(Nn, Cc, Hh // 2, 2, Ww // 2, 2).mean(axis=(3, 5))
    return pooled, skips


def make_block_params(key, cin, cout):
    ks = jax.random.split(key, 8)
    p = {
        "bn_w": 1.0 + 0.1 * jax.random.normal(ks[0], (cin,), jnp.float32),
        "bn_b": 0.1 * jax.random.normal(ks[1], (cin,), jnp.float32),
        "w1": 0.1 * jax.random.normal(ks[2], (cout, cin, 3, 3), jnp.float32),
        "b1": 0.05 * jax.random.normal(ks[3], (cout,), jnp.float32),
        "w2": 0.1 * jax.random.normal(ks[4], (cout, cout, 3, 3), jnp.float32),
        "b2": 0.05 * jax.random.normal(ks[5], (cout,), jnp.float32),
    }
    if cin != cout:
        p["ws"] = 0.1 * jax.random.normal(ks[6], (cout, cin, 1, 1), jnp.float32)
        p["bs"] = 0.05 * jax.random.normal(ks[7], (cout,), jnp.float32)
    return p


if __name__ == "__main__":
    # DownBlock with res_block_in_out_channels = [(4, 8), (8, 8)]:
    # exercises both the 1x1-projection shortcut and the identity shortcut.
    N, H, W = 2, 16, 16
    channels = [(4, 8), (8, 8)]

    key = jax.random.PRNGKey(0)
    kx, *pkeys = jax.random.split(key, 1 + len(channels))
    x = jax.random.normal(kx, (N, channels[0][0], H, W), jnp.float32)
    params_list = [make_block_params(k, cin, cout) for k, (cin, cout) in zip(pkeys, channels)]

    out, skip_list = down_block((x, []), params_list)
    out = jax.block_until_ready(out)

    ref_out, ref_skips = reference_down_block(x, params_list)

    # Tolerances sized for bf16 MXU operands with f32 accumulation (per the perf review).
    rtol = atol = 1e-2
    assert out.shape == (N, channels[-1][1], H // 2, W // 2), out.shape
    assert len(skip_list) == len(channels)
    for i, (s, rs) in enumerate(zip(skip_list, ref_skips)):
        rs_nhwc = jnp.transpose(rs, (0, 2, 3, 1))            # skips are returned in NHWC
        assert s.shape == rs_nhwc.shape, (s.shape, rs_nhwc.shape)
        err = float(jnp.max(jnp.abs(s - rs_nhwc)))
        assert jnp.allclose(s, rs_nhwc, rtol=rtol, atol=atol), (i, err)
    err = float(jnp.max(jnp.abs(out - ref_out)))
    assert jnp.allclose(out, ref_out, rtol=rtol, atol=atol), err

    print("KERNEL_OK")
</pallas_src>

<mosaic_0001>
module attributes {stable_mosaic.version = 11 : i64} {
  func.func @kernel(%arg0: memref<36x64xf32, #tpu.memory_space<vmem>>, %arg1: memref<1x64xf32, #tpu.memory_space<vmem>>, %arg2: memref<1x64xf32, #tpu.memory_space<vmem>>, %arg3: memref<64x64xf32, #tpu.memory_space<vmem>>, %arg4: memref<3x64x128xbf16, #tpu.memory_space<vmem>>, %arg5: memref<1x128xf32, #tpu.memory_space<vmem>>, %arg6: memref<3x128x128xbf16, #tpu.memory_space<vmem>>, %arg7: memref<1x128xf32, #tpu.memory_space<vmem>>, %arg8: memref<64x128xbf16, #tpu.memory_space<vmem>>, %arg9: memref<1x128xf32, #tpu.memory_space<vmem>>, %arg10: memref<1x128xf32, #tpu.memory_space<vmem>>, %arg11: memref<1x128xf32, #tpu.memory_space<vmem>>, %arg12: memref<128x128xf32, #tpu.memory_space<vmem>>, %arg13: memref<3x128x128xbf16, #tpu.memory_space<vmem>>, %arg14: memref<1x128xf32, #tpu.memory_space<vmem>>, %arg15: memref<3x128x128xbf16, #tpu.memory_space<vmem>>, %arg16: memref<1x128xf32, #tpu.memory_space<vmem>>, %arg17: memref<16x36xf32, #tpu.memory_space<vmem>>, %arg18: memref<128x64xf32, #tpu.memory_space<vmem>>, %arg19: memref<2x16x128xf32, #tpu.memory_space<vmem>>, %arg20: memref<2x16x128xf32, #tpu.memory_space<vmem>>, %arg21: memref<2x8x64xf32, #tpu.memory_space<vmem>>) attributes {dimension_semantics = [], scalar_prefetch = 0 : i64, scratch_operands = 0 : i64, tpu.core_type = #tpu.core_type<tc>} {
    %0 = tpu.iota {dimensions = array<i32: 0>} : vector<36x1xi32>
    %c18_i32 = arith.constant 18 : i32
    %c0_i32 = arith.constant 0 : i32
    %1 = arith.cmpi eq, %c18_i32, %c0_i32 : i32
    %c1_i32 = arith.constant 1 : i32
    %2 = arith.select %1, %c1_i32, %c18_i32 : i32
    %3 = vector.broadcast %2 : i32 to vector<36x1xi32>
    %4 = arith.remsi %0, %3 : vector<36x1xi32>
    %c0_i32_0 = arith.constant 0 : i32
    %5 = vector.broadcast %c0_i32_0 : i32 to vector<36x1xi32>
    %6 = arith.cmpi ne, %4, %5 : vector<36x1xi32>
    %c0_i32_1 = arith.constant 0 : i32
    %7 = vector.broadcast %c0_i32_1 : i32 to vector<36x1xi32>
    %8 = arith.cmpi slt, %4, %7 : vector<36x1xi32>
    %c0_i32_2 = arith.constant 0 : i32
    %9 = arith.cmpi slt, %2, %c0_i32_2 : i32
    %10 = vector.broadcast %9 : i1 to vector<36x1xi1>
    %11 = vector.broadcast %10 : vector<36x1xi1> to vector<36x1xi1>
    %12 = arith.xori %8, %11 : vector<36x1xi1>
    %13 = arith.andi %12, %6 : vector<36x1xi1>
    %14 = vector.broadcast %2 : i32 to vector<36x1xi32>
    %15 = arith.addi %4, %14 : vector<36x1xi32>
    %16 = arith.select %13, %15, %4 : vector<36x1xi1>, vector<36x1xi32>
    %c1_i32_3 = arith.constant 1 : i32
    %17 = vector.broadcast %c1_i32_3 : i32 to vector<36x1xi32>
    %18 = arith.cmpi sge, %16, %17 : vector<36x1xi32>
    %c16_i32 = arith.constant 16 : i32
    %19 = vector.broadcast %c16_i32 : i32 to vector<36x1xi32>
    %20 = arith.cmpi sle, %16, %19 : vector<36x1xi32>
    %21 = arith.andi %18, %20 : vector<36x1xi1>
    %22 = arith.extui %21 : vector<36x1xi1> to vector<36x1xi32>
    %23 = arith.sitofp %22 : vector<36x1xi32> to vector<36x1xf32>
    %c0 = arith.constant 0 : index
    %c0_4 = arith.constant 0 : index
    %24 = vector.load %arg0[%c0, %c0_4] : memref<36x64xf32, #tpu.memory_space<vmem>>, vector<36x64xf32>
    %cst = arith.constant dense<0.000000e+00> : vector<64xf32>
    %25 = vector.multi_reduction <add>, %24, %cst [0] : vector<36x64xf32> to vector<64xf32>
    %26 = vector.shape_cast %25 : vector<64xf32> to vector<1x64xf32>
    %27 = arith.mulf %24, %24 : vector<36x64xf32>
    %cst_5 = arith.constant dense<0.000000e+00> : vector<64xf32>
    %28 = vector.multi_reduction <add>, %27, %cst_5 [0] : vector<36x64xf32> to vector<64xf32>
    %29 = vector.shape_cast %28 : vector<64xf32> to vector<1x64xf32>
    %c0_6 = arith.constant 0 : index
    %c0_7 = arith.constant 0 : index
    %30 = vector.load %arg3[%c0_6, %c0_7] : memref<64x64xf32, #tpu.memory_space<vmem>>, vector<64x64xf32>
    %cst_8 = arith.constant dense<0.000000e+00> : vector<1x64xf32>
    %31 = tpu.matmul %26, %30, %cst_8 {dimension_numbers = #tpu.dot_dimension_numbers<[1], [0], [0], [1], [0, 0, 1, 1], [], []>} : vector<1x64xf32>, vector<64x64xf32>, vector<1x64xf32> -> vector<1x64xf32>
    %c0_9 = arith.constant 0 : index
    %c0_10 = arith.constant 0 : index
    %32 = vector.load %arg3[%c0_9, %c0_10] : memref<64x64xf32, #tpu.memory_space<vmem>>, vector<64x64xf32>
    %cst_11 = arith.constant dense<0.000000e+00> : vector<1x64xf32>
    %33 = tpu.matmul %29, %32, %cst_11 {dimension_numbers = #tpu.dot_dimension_numbers<[1], [0], [0], [1], [0, 0, 1, 1], [], []>} : vector<1x64xf32>, vector<64x64xf32>, vector<1x64xf32> -> vector<1x64xf32>
    %cst_12 = arith.constant 0.001953125 : f32
    %34 = vector.broadcast %cst_12 : f32 to vector<1x64xf32>
    %35 = arith.mulf %31, %34 : vector<1x64xf32>
    %cst_13 = arith.constant 0.001953125 : f32
    %36 = vector.broadcast %cst_13 : f32 to vector<1x64xf32>
    %37 = arith.mulf %33, %36 : vector<1x64xf32>
    %38 = arith.mulf %35, %35 : vector<1x64xf32>
    %39 = arith.subf %37, %38 : vector<1x64xf32>
    %c0_14 = arith.constant 0 : index
    %c0_15 = arith.constant 0 : index
    %40 = vector.load %arg1[%c0_14, %c0_15] : memref<1x64xf32, #tpu.memory_space<vmem>>, vector<1x64xf32>
    %cst_16 = arith.constant 9.99999974E-6 : f32
    %41 = vector.broadcast %cst_16 : f32 to vector<1x64xf32>
    %42 = arith.addf %39, %41 : vector<1x64xf32>
    %43 = math.rsqrt %42 : vector<1x64xf32>
    %44 = arith.mulf %40, %43 : vector<1x64xf32>
    %c0_17 = arith.constant 0 : index
    %c0_18 = arith.constant 0 : index
    %45 = vector.load %arg2[%c0_17, %c0_18] : memref<1x64xf32, #tpu.memory_space<vmem>>, vector<1x64xf32>
    %46 = arith.mulf %35, %44 : vector<1x64xf32>
    %47 = arith.subf %45, %46 : vector<1x64xf32>
    %48 = vector.broadcast %44 : vector<1x64xf32> to vector<36x64xf32>
    %49 = arith.mulf %24, %48 : vector<36x64xf32>
    %50 = vector.broadcast %47 : vector<1x64xf32> to vector<36x64xf32>
    %51 = arith.addf %49, %50 : vector<36x64xf32>
    %52 = vector.broadcast %23 : vector<36x1xf32> to vector<36x64xf32>
    %53 = arith.mulf %51, %52 : vector<36x64xf32>
    %c0_19 = arith.constant 0 : index
    %c0_20 = arith.constant 0 : index
    %54 = vector.load %arg5[%c0_19, %c0_20] : memref<1x128xf32, #tpu.memory_space<vmem>>, vector<1x128xf32>
    %55 = arith.truncf %53 : vector<36x64xf32> to vector<36x64xbf16>
    %c0_21 = arith.constant 0 : index
    %c0_22 = arith.constant 0 : index
    %c0_23 = arith.constant 0 : index
    %56 = vector.load %arg4[%c0_21, %c0_22, %c0_23] : memref<3x64x128xbf16, #tpu.memory_space<vmem>>, vector<1x64x128xbf16>
    %57 = vector.shape_cast %56 : vector<1x64x128xbf16> to vector<64x128xbf16>
    %cst_24 = arith.constant dense<0.000000e+00> : vector<36x128xf32>
    %58 = tpu.matmul %55, %57, %cst_24 {dimension_numbers = #tpu.dot_dimension_numbers<[1], [0], [0], [1], [0, 0, 1, 1], [], []>} : vector<36x64xbf16>, vector<64x128xbf16>, vector<36x128xf32> -> vector<36x128xf32>
    %c1 = arith.constant 1 : index
    %c0_25 = arith.constant 0 : index
    %c0_26 = arith.constant 0 : index
    %59 = vector.load %arg4[%c1, %c0_25, %c0_26] : memref<3x64x128xbf16, #tpu.memory_space<vmem>>, vector<1x64x128xbf16>
    %60 = vector.shape_cast %59 : vector<1x64x128xbf16> to vector<64x128xbf16>
    %cst_27 = arith.constant dense<0.000000e+00> : vector<36x128xf32>
    %61 = tpu.matmul %55, %60, %cst_27 {dimension_numbers = #tpu.dot_dimension_numbers<[1], [0], [0], [1], [0, 0, 1, 1], [], []>} : vector<36x64xbf16>, vector<64x128xbf16>, vector<36x128xf32> -> vector<36x128xf32>
    %c2 = arith.constant 2 : index
    %c0_28 = arith.constant 0 : index
    %c0_29 = arith.constant 0 : index
    %62 = vector.load %arg4[%c2, %c0_28, %c0_29] : memref<3x64x128xbf16, #tpu.memory_space<vmem>>, vector<1x64x128xbf16>
    %63 = vector.shape_cast %62 : vector<1x64x128xbf16> to vector<64x128xbf16>
    %cst_30 = arith.constant dense<0.000000e+00> : vector<36x128xf32>
    %64 = tpu.matmul %55, %63, %cst_30 {dimension_numbers = #tpu.dot_dimension_numbers<[1], [0], [0], [1], [0, 0, 1, 1], [], []>} : vector<36x64xbf16>, vector<64x128xbf16>, vector<36x128xf32> -> vector<36x128xf32>
    %cst_31 = arith.constant 0.000000e+00 : f32
    %65 = vector.broadcast %cst_31 : f32 to vector<1x128xf32>
    %66 = vector.extract_strided_slice %58 {offsets = [0, 0], sizes = [35, 128], strides = [1, 1]} : vector<36x128xf32> to vector<35x128xf32>
    %67 = tpu.concatenate %65, %66 in 0 : vector<1x128xf32>, vector<35x128xf32> -> vector<36x128xf32>
    %68 = arith.addf %67, %61 : vector<36x128xf32>
    %cst_32 = arith.constant 0.000000e+00 : f32
    %69 = vector.broadcast %cst_32 : f32 to vector<1x128xf32>
    %70 = vector.extract_strided_slice %64 {offsets = [1, 0], sizes = [35, 128], strides = [1, 1]} : vector<36x128xf32> to vector<35x128xf32>
    %71 = tpu.concatenate %70, %69 in 0 : vector<35x128xf32>, vector<1x128xf32> -> vector<36x128xf32>
    %72 = arith.addf %68, %71 : vector<36x128xf32>
    %73 = vector.broadcast %54 : vector<1x128xf32> to vector<36x128xf32>
    %74 = arith.addf %72, %73 : vector<36x128xf32>
    %75 = vector.broadcast %23 : vector<36x1xf32> to vector<36x128xf32>
    %76 = arith.mulf %74, %75 : vector<36x128xf32>
    %77 = arith.negf %76 : vector<36x128xf32>
    %78 = math.exp %77 : vector<36x128xf32>
    %cst_33 = arith.constant 1.000000e+00 : f32
    %79 = vector.broadcast %cst_33 : f32 to vector<36x128xf32>
    %80 = arith.addf %79, %78 : vector<36x128xf32>
    %81 = arith.divf %79, %80 : vector<36x128xf32>
    %82 = arith.mulf %76, %81 : vector<36x128xf32>
    %c0_34 = arith.constant 0 : index
    %c0_35 = arith.constant 0 : index
    %83 = vector.load %arg7[%c0_34, %c0_35] : memref<1x128xf32, #tpu.memory_space<vmem>>, vector<1x128xf32>
    %84 = arith.truncf %82 : vector<36x128xf32> to vector<36x128xbf16>
    %c0_36 = arith.constant 0 : index
    %c0_37 = arith.constant 0 : index
    %c0_38 = arith.constant 0 : index
    %85 = vector.load %arg6[%c0_36, %c0_37, %c0_38] : memref<3x128x128xbf16, #tpu.memory_space<vmem>>, vector<1x128x128xbf16>
    %86 = vector.shape_cast %85 : vector<1x128x128xbf16> to vector<128x128xbf16>
    %cst_39 = arith.constant dense<0.000000e+00> : vector<36x128xf32>
    %87 = tpu.matmul %84, %86, %cst_39 {dimension_numbers = #tpu.dot_dimension_numbers<[1], [0], [0], [1], [0, 0, 1, 1], [], []>} : vector<36x128xbf16>, vector<128x128xbf16>, vector<36x128xf32> -> vector<36x128xf32>
    %c1_40 = arith.constant 1 : index
    %c0_41 = arith.constant 0 : index
    %c0_42 = arith.constant 0 : index
    %88 = vector.load %arg6[%c1_40, %c0_41, %c0_42] : memref<3x128x128xbf16, #tpu.memory_space<vmem>>, vector<1x128x128xbf16>
    %89 = vector.shape_cast %88 : vector<1x128x128xbf16> to vector<128x128xbf16>
    %cst_43 = arith.constant dense<0.000000e+00> : vector<36x128xf32>
    %90 = tpu.matmul %84, %89, %cst_43 {dimension_numbers = #tpu.dot_dimension_numbers<[1], [0], [0], [1], [0, 0, 1, 1], [], []>} : vector<36x128xbf16>, vector<128x128xbf16>, vector<36x128xf32> -> vector<36x128xf32>
    %c2_44 = arith.constant 2 : index
    %c0_45 = arith.constant 0 : index
    %c0_46 = arith.constant 0 : index
    %91 = vector.load %arg6[%c2_44, %c0_45, %c0_46] : memref<3x128x128xbf16, #tpu.memory_space<vmem>>, vector<1x128x128xbf16>
    %92 = vector.shape_cast %91 : vector<1x128x128xbf16> to vector<128x128xbf16>
    %cst_47 = arith.constant dense<0.000000e+00> : vector<36x128xf32>
    %93 = tpu.matmul %84, %92, %cst_47 {dimension_numbers = #tpu.dot_dimension_numbers<[1], [0], [0], [1], [0, 0, 1, 1], [], []>} : vector<36x128xbf16>, vector<128x128xbf16>, vector<36x128xf32> -> vector<36x128xf32>
    %cst_48 = arith.constant 0.000000e+00 : f32
    %94 = vector.broadcast %cst_48 : f32 to vector<1x128xf32>
    %95 = vector.extract_strided_slice %87 {offsets = [0, 0], sizes = [35, 128], strides = [1, 1]} : vector<36x128xf32> to vector<35x128xf32>
    %96 = tpu.concatenate %94, %95 in 0 : vector<1x128xf32>, vector<35x128xf32> -> vector<36x128xf32>
    %97 = arith.addf %96, %90 : vector<36x128xf32>
    %cst_49 = arith.constant 0.000000e+00 : f32
    %98 = vector.broadcast %cst_49 : f32 to vector<1x128xf32>
    %99 = vector.extract_strided_slice %93 {offsets = [1, 0], sizes = [35, 128], strides = [1, 1]} : vector<36x128xf32> to vector<35x128xf32>
    %100 = tpu.concatenate %99, %98 in 0 : vector<35x128xf32>, vector<1x128xf32> -> vector<36x128xf32>
    %101 = arith.addf %97, %100 : vector<36x128xf32>
    %102 = vector.broadcast %83 : vector<1x128xf32> to vector<36x128xf32>
    %103 = arith.addf %101, %102 : vector<36x128xf32>
    %104 = vector.broadcast %23 : vector<36x1xf32> to vector<36x128xf32>
    %105 = arith.mulf %103, %104 : vector<36x128xf32>
    %106 = arith.truncf %24 : vector<36x64xf32> to vector<36x64xbf16>
    %c0_50 = arith.constant 0 : index
    %c0_51 = arith.constant 0 : index
    %107 = vector.load %arg8[%c0_50, %c0_51] : memref<64x128xbf16, #tpu.memory_space<vmem>>, vector<64x128xbf16>
    %cst_52 = arith.constant dense<0.000000e+00> : vector<36x128xf32>
    %108 = tpu.matmul %106, %107, %cst_52 {dimension_numbers = #tpu.dot_dimension_numbers<[1], [0], [0], [1], [0, 0, 1, 1], [], []>} : vector<36x64xbf16>, vector<64x128xbf16>, vector<36x128xf32> -> vector<36x128xf32>
    %c0_53 = arith.constant 0 : index
    %c0_54 = arith.constant 0 : index
    %109 = vector.load %arg9[%c0_53, %c0_54] : memref<1x128xf32, #tpu.memory_space<vmem>>, vector<1x128xf32>
    %110 = vector.broadcast %109 : vector<1x128xf32> to vector<36x128xf32>
    %111 = arith.addf %108, %110 : vector<36x128xf32>
    %112 = vector.broadcast %23 : vector<36x1xf32> to vector<36x128xf32>
    %113 = arith.mulf %111, %112 : vector<36x128xf32>
    %114 = arith.addf %105, %113 : vector<36x128xf32>
    %115 = vector.extract_strided_slice %114 {offsets = [1, 0], sizes = [16, 128], strides = [1, 1]} : vector<36x128xf32> to vector<16x128xf32>
    %c0_55 = arith.constant 0 : index
    %c0_56 = arith.constant 0 : index
    %c0_57 = arith.constant 0 : index
    %116 = vector.load %arg19[%c0_55, %c0_56, %c0_57] : memref<2x16x128xf32, #tpu.memory_space<vmem>>, vector<1x16x128xf32>
    %117 = vector.shape_cast %116 : vector<1x16x128xf32> to vector<16x128xf32>
    %118 = vector.shape_cast %115 : vector<16x128xf32> to vector<1x16x128xf32>
    tpu.vector_store %arg19[%c0_55, %c0_56, %c0_57], %118 {strides = array<i32>} : memref<2x16x128xf32, #tpu.memory_space<vmem>>, vector<1x16x128xf32>,
    %119 = vector.extract_strided_slice %114 {offsets = [19, 0], sizes = [16, 128], strides = [1, 1]} : vector<36x128xf32> to vector<16x128xf32>
    %c1_58 = arith.constant 1 : index
    %c0_59 = arith.constant 0 : index
    %c0_60 = arith.constant 0 : index
    %120 = vector.load %arg19[%c1_58, %c0_59, %c0_60] : memref<2x16x128xf32, #tpu.memory_space<vmem>>, vector<1x16x128xf32>
    %121 = vector.shape_cast %120 : vector<1x16x128xf32> to vector<16x128xf32>
    %122 = vector.shape_cast %119 : vector<16x128xf32> to vector<1x16x128xf32>
    tpu.vector_store %arg19[%c1_58, %c0_59, %c0_60], %122 {strides = array<i32>} : memref<2x16x128xf32, #tpu.memory_space<vmem>>, vector<1x16x128xf32>,
    %cst_61 = arith.constant dense<0.000000e+00> : vector<128xf32>
    %123 = vector.multi_reduction <add>, %114, %cst_61 [0] : vector<36x128xf32> to vector<128xf32>
    %124 = vector.shape_cast %123 : vector<128xf32> to vector<1x128xf32>
    %125 = arith.mulf %114, %114 : vector<36x128xf32>
    %cst_62 = arith.constant dense<0.000000e+00> : vector<128xf32>
    %126 = vector.multi_reduction <add>, %125, %cst_62 [0] : vector<36x128xf32> to vector<128xf32>
    %127 = vector.shape_cast %126 : vector<128xf32> to vector<1x128xf32>
    %c0_63 = arith.constant 0 : index
    %c0_64 = arith.constant 0 : index
    %128 = vector.load %arg12[%c0_63, %c0_64] : memref<128x128xf32, #tpu.memory_space<vmem>>, vector<128x128xf32>
    %cst_65 = arith.constant dense<0.000000e+00> : vector<1x128xf32>
    %129 = tpu.matmul %124, %128, %cst_65 {dimension_numbers = #tpu.dot_dimension_numbers<[1], [0], [0], [1], [0, 0, 1, 1], [], []>} : vector<1x128xf32>, vector<128x128xf32>, vector<1x128xf32> -> vector<1x128xf32>
    %c0_66 = arith.constant 0 : index
    %c0_67 = arith.constant 0 : index
    %130 = vector.load %arg12[%c0_66, %c0_67] : memref<128x128xf32, #tpu.memory_space<vmem>>, vector<128x128xf32>
    %cst_68 = arith.constant dense<0.000000e+00> : vector<1x128xf32>
    %131 = tpu.matmul %127, %130, %cst_68 {dimension_numbers = #tpu.dot_dimension_numbers<[1], [0], [0], [1], [0, 0, 1, 1], [], []>} : vector<1x128xf32>, vector<128x128xf32>, vector<1x128xf32> -> vector<1x128xf32>
    %cst_69 = arith.constant 0.001953125 : f32
    %132 = vector.broadcast %cst_69 : f32 to vector<1x128xf32>
    %133 = arith.mulf %129, %132 : vector<1x128xf32>
    %cst_70 = arith.constant 0.001953125 : f32
    %134 = vector.broadcast %cst_70 : f32 to vector<1x128xf32>
    %135 = arith.mulf %131, %134 : vector<1x128xf32>
    %136 = arith.mulf %133, %133 : vector<1x128xf32>
    %137 = arith.subf %135, %136 : vector<1x128xf32>
    %c0_71 = arith.constant 0 : index
    %c0_72 = arith.constant 0 : index
    %138 = vector.load %arg10[%c0_71, %c0_72] : memref<1x128xf32, #tpu.memory_space<vmem>>, vector<1x128xf32>
    %cst_73 = arith.constant 9.99999974E-6 : f32
    %139 = vector.broadcast %cst_73 : f32 to vector<1x128xf32>
    %140 = arith.addf %137, %139 : vector<1x128xf32>
    %141 = math.rsqrt %140 : vector<1x128xf32>
    %142 = arith.mulf %138, %141 : vector<1x128xf32>
    %c0_74 = arith.constant 0 : index
    %c0_75 = arith.constant 0 : index
    %143 = vector.load %arg11[%c0_74, %c0_75] : memref<1x128xf32, #tpu.memory_space<vmem>>, vector<1x128xf32>
    %144 = arith.mulf %133, %142 : vector<1x128xf32>
    %145 = arith.subf %143, %144 : vector<1x128xf32>
    %146 = vector.broadcast %142 : vector<1x128xf32> to vector<36x128xf32>
    %147 = arith.mulf %114, %146 : vector<36x128xf32>
    %148 = vector.broadcast %145 : vector<1x128xf32> to vector<36x128xf32>
    %149 = arith.addf %147, %148 : vector<36x128xf32>
    %150 = vector.broadcast %23 : vector<36x1xf32> to vector<36x128xf32>
    %151 = arith.mulf %149, %150 : vector<36x128xf32>
    %c0_76 = arith.constant 0 : index
    %c0_77 = arith.constant 0 : index
    %152 = vector.load %arg14[%c0_76, %c0_77] : memref<1x128xf32, #tpu.memory_space<vmem>>, vector<1x128xf32>
    %153 = arith.truncf %151 : vector<36x128xf32> to vector<36x128xbf16>
    %c0_78 = arith.constant 0 : index
    %c0_79 = arith.constant 0 : index
    %c0_80 = arith.constant 0 : index
    %154 = vector.load %arg13[%c0_78, %c0_79, %c0_80] : memref<3x128x128xbf16, #tpu.memory_space<vmem>>, vector<1x128x128xbf16>
    %155 = vector.shape_cast %154 : vector<1x128x128xbf16> to vector<128x128xbf16>
    %cst_81 = arith.constant dense<0.000000e+00> : vector<36x128xf32>
    %156 = tpu.matmul %153, %155, %cst_81 {dimension_numbers = #tpu.dot_dimension_numbers<[1], [0], [0], [1], [0, 0, 1, 1], [], []>} : vector<36x128xbf16>, vector<128x128xbf16>, vector<36x128xf32> -> vector<36x128xf32>
    %c1_82 = arith.constant 1 : index
    %c0_83 = arith.constant 0 : index
    %c0_84 = arith.constant 0 : index
    %157 = vector.load %arg13[%c1_82, %c0_83, %c0_84] : memref<3x128x128xbf16, #tpu.memory_space<vmem>>, vector<1x128x128xbf16>
    %158 = vector.shape_cast %157 : vector<1x128x128xbf16> to vector<128x128xbf16>
    %cst_85 = arith.constant dense<0.000000e+00> : vector<36x128xf32>
    %159 = tpu.matmul %153, %158, %cst_85 {dimension_numbers = #tpu.dot_dimension_numbers<[1], [0], [0], [1], [0, 0, 1, 1], [], []>} : vector<36x128xbf16>, vector<128x128xbf16>, vector<36x128xf32> -> vector<36x128xf32>
    %c2_86 = arith.constant 2 : index
    %c0_87 = arith.constant 0 : index
    %c0_88 = arith.constant 0 : index
    %160 = vector.load %arg13[%c2_86, %c0_87, %c0_88] : memref<3x128x128xbf16, #tpu.memory_space<vmem>>, vector<1x128x128xbf16>
    %161 = vector.shape_cast %160 : vector<1x128x128xbf16> to vector<128x128xbf16>
    %cst_89 = arith.constant dense<0.000000e+00> : vector<36x128xf32>
    %162 = tpu.matmul %153, %161, %cst_89 {dimension_numbers = #tpu.dot_dimension_numbers<[1], [0], [0], [1], [0, 0, 1, 1], [], []>} : vector<36x128xbf16>, vector<128x128xbf16>, vector<36x128xf32> -> vector<36x128xf32>
    %cst_90 = arith.constant 0.000000e+00 : f32
    %163 = vector.broadcast %cst_90 : f32 to vector<1x128xf32>
    %164 = vector.extract_strided_slice %156 {offsets = [0, 0], sizes = [35, 128], strides = [1, 1]} : vector<36x128xf32> to vector<35x128xf32>
    %165 = tpu.concatenate %163, %164 in 0 : vector<1x128xf32>, vector<35x128xf32> -> vector<36x128xf32>
    %166 = arith.addf %165, %159 : vector<36x128xf32>
    %cst_91 = arith.constant 0.000000e+00 : f32
    %167 = vector.broadcast %cst_91 : f32 to vector<1x128xf32>
    %168 = vector.extract_strided_slice %162 {offsets = [1, 0], sizes = [35, 128], strides = [1, 1]} : vector<36x128xf32> to vector<35x128xf32>
    %169 = tpu.concatenate %168, %167 in 0 : vector<35x128xf32>, vector<1x128xf32> -> vector<36x128xf32>
    %170 = arith.addf %166, %169 : vector<36x128xf32>
    %171 = vector.broadcast %152 : vector<1x128xf32> to vector<36x128xf32>
    %172 = arith.addf %170, %171 : vector<36x128xf32>
    %173 = vector.broadcast %23 : vector<36x1xf32> to vector<36x128xf32>
    %174 = arith.mulf %172, %173 : vector<36x128xf32>
    %175 = arith.negf %174 : vector<36x128xf32>
    %176 = math.exp %175 : vector<36x128xf32>
    %cst_92 = arith.constant 1.000000e+00 : f32
    %177 = vector.broadcast %cst_92 : f32 to vector<36x128xf32>
    %178 = arith.addf %177, %176 : vector<36x128xf32>
    %179 = arith.divf %177, %178 : vector<36x128xf32>
    %180 = arith.mulf %174, %179 : vector<36x128xf32>
    %c0_93 = arith.constant 0 : index
    %c0_94 = arith.constant 0 : index
    %181 = vector.load %arg16[%c0_93, %c0_94] : memref<1x128xf32, #tpu.memory_space<vmem>>, vector<1x128xf32>
    %182 = arith.truncf %180 : vector<36x128xf32> to vector<36x128xbf16>
    %c0_95 = arith.constant 0 : index
    %c0_96 = arith.constant 0 : index
    %c0_97 = arith.constant 0 : index
    %183 = vector.load %arg15[%c0_95, %c0_96, %c0_97] : memref<3x128x128xbf16, #tpu.memory_space<vmem>>, vector<1x128x128xbf16>
    %184 = vector.shape_cast %183 : vector<1x128x128xbf16> to vector<128x128xbf16>
    %cst_98 = arith.constant dense<0.000000e+00> : vector<36x128xf32>
    %185 = tpu.matmul %182, %184, %cst_98 {dimension_numbers = #tpu.dot_dimension_numbers<[1], [0], [0], [1], [0, 0, 1, 1], [], []>} : vector<36x128xbf16>, vector<128x128xbf16>, vector<36x128xf32> -> vector<36x128xf32>
    %c1_99 = arith.constant 1 : index
    %c0_100 = arith.constant 0 : index
    %c0_101 = arith.constant 0 : index
    %186 = vector.load %arg15[%c1_99, %c0_100, %c0_101] : memref<3x128x128xbf16, #tpu.memory_space<vmem>>, vector<1x128x128xbf16>
    %187 = vector.shape_cast %186 : vector<1x128x128xbf16> to vector<128x128xbf16>
    %cst_102 = arith.constant dense<0.000000e+00> : vector<36x128xf32>
    %188 = tpu.matmul %182, %187, %cst_102 {dimension_numbers = #tpu.dot_dimension_numbers<[1], [0], [0], [1], [0, 0, 1, 1], [], []>} : vector<36x128xbf16>, vector<128x128xbf16>, vector<36x128xf32> -> vector<36x128xf32>
    %c2_103 = arith.constant 2 : index
    %c0_104 = arith.constant 0 : index
    %c0_105 = arith.constant 0 : index
    %189 = vector.load %arg15[%c2_103, %c0_104, %c0_105] : memref<3x128x128xbf16, #tpu.memory_space<vmem>>, vector<1x128x128xbf16>
    %190 = vector.shape_cast %189 : vector<1x128x128xbf16> to vector<128x128xbf16>
    %cst_106 = arith.constant dense<0.000000e+00> : vector<36x128xf32>
    %191 = tpu.matmul %182, %190, %cst_106 {dimension_numbers = #tpu.dot_dimension_numbers<[1], [0], [0], [1], [0, 0, 1, 1], [], []>} : vector<36x128xbf16>, vector<128x128xbf16>, vector<36x128xf32> -> vector<36x128xf32>
    %cst_107 = arith.constant 0.000000e+00 : f32
    %192 = vector.broadcast %cst_107 : f32 to vector<1x128xf32>
    %193 = vector.extract_strided_slice %185 {offsets = [0, 0], sizes = [35, 128], strides = [1, 1]} : vector<36x128xf32> to vector<35x128xf32>
    %194 = tpu.concatenate %192, %193 in 0 : vector<1x128xf32>, vector<35x128xf32> -> vector<36x128xf32>
    %195 = arith.addf %194, %188 : vector<36x128xf32>
    %cst_108 = arith.constant 0.000000e+00 : f32
    %196 = vector.broadcast %cst_108 : f32 to vector<1x128xf32>
    %197 = vector.extract_strided_slice %191 {offsets = [1, 0], sizes = [35, 128], strides = [1, 1]} : vector<36x128xf32> to vector<35x128xf32>
    %198 = tpu.concatenate %197, %196 in 0 : vector<35x128xf32>, vector<1x128xf32> -> vector<36x128xf32>
    %199 = arith.addf %195, %198 : vector<36x128xf32>
    %200 = vector.broadcast %181 : vector<1x128xf32> to vector<36x128xf32>
    %201 = arith.addf %199, %200 : vector<36x128xf32>
    %202 = vector.broadcast %23 : vector<36x1xf32> to vector<36x128xf32>
    %203 = arith.mulf %201, %202 : vector<36x128xf32>
    %204 = arith.addf %203, %114 : vector<36x128xf32>
    %205 = vector.extract_strided_slice %204 {offsets = [1, 0], sizes = [16, 128], strides = [1, 1]} : vector<36x128xf32> to vector<16x128xf32>
    %c0_109 = arith.constant 0 : index
    %c0_110 = arith.constant 0 : index
    %c0_111 = arith.constant 0 : index
    %206 = vector.load %arg20[%c0_109, %c0_110, %c0_111] : memref<2x16x128xf32, #tpu.memory_space<vmem>>, vector<1x16x128xf32>
    %207 = vector.shape_cast %206 : vector<1x16x128xf32> to vector<16x128xf32>
    %208 = vector.shape_cast %205 : vector<16x128xf32> to vector<1x16x128xf32>
    tpu.vector_store %arg20[%c0_109, %c0_110, %c0_111], %208 {strides = array<i32>} : memref<2x16x128xf32, #tpu.memory_space<vmem>>, vector<1x16x128xf32>,
    %209 = vector.extract_strided_slice %204 {offsets = [19, 0], sizes = [16, 128], strides = [1, 1]} : vector<36x128xf32> to vector<16x128xf32>
    %c1_112 = arith.constant 1 : index
    %c0_113 = arith.constant 0 : index
    %c0_114 = arith.constant 0 : index
    %210 = vector.load %arg20[%c1_112, %c0_113, %c0_114] : memref<2x16x128xf32, #tpu.memory_space<vmem>>, vector<1x16x128xf32>
    %211 = vector.shape_cast %210 : vector<1x16x128xf32> to vector<16x128xf32>
    %212 = vector.shape_cast %209 : vector<16x128xf32> to vector<1x16x128xf32>
    tpu.vector_store %arg20[%c1_112, %c0_113, %c0_114], %212 {strides = array<i32>} : memref<2x16x128xf32, #tpu.memory_space<vmem>>, vector<1x16x128xf32>,
    %c0_115 = arith.constant 0 : index
    %c0_116 = arith.constant 0 : index
    %213 = vector.load %arg17[%c0_115, %c0_116] : memref<16x36xf32, #tpu.memory_space<vmem>>, vector<16x36xf32>
    %cst_117 = arith.constant dense<0.000000e+00> : vector<16x128xf32>
    %214 = tpu.matmul %213, %204, %cst_117 {dimension_numbers = #tpu.dot_dimension_numbers<[1], [0], [0], [1], [0, 0, 1, 1], [], []>} : vector<16x36xf32>, vector<36x128xf32>, vector<16x128xf32> -> vector<16x128xf32>
    %c0_118 = arith.constant 0 : index
    %c0_119 = arith.constant 0 : index
    %215 = vector.load %arg18[%c0_118, %c0_119] : memref<128x64xf32, #tpu.memory_space<vmem>>, vector<128x64xf32>
    %cst_120 = arith.constant dense<0.000000e+00> : vector<16x64xf32>
    %216 = tpu.matmul %214, %215, %cst_120 {dimension_numbers = #tpu.dot_dimension_numbers<[1], [0], [0], [1], [0, 0, 1, 1], [], []>} : vector<16x128xf32>, vector<128x64xf32>, vector<16x64xf32> -> vector<16x64xf32>
    %cst_121 = arith.constant 2.500000e-01 : f32
    %217 = vector.broadcast %cst_121 : f32 to vector<16x64xf32>
    %218 = arith.mulf %217, %216 : vector<16x64xf32>
    %219 = vector.extract_strided_slice %218 {offsets = [0, 0], sizes = [8, 64], strides = [1, 1]} : vector<16x64xf32> to vector<8x64xf32>
    %c0_122 = arith.constant 0 : index
    %c0_123 = arith.constant 0 : index
    %c0_124 = arith.constant 0 : index
    %220 = vector.load %arg21[%c0_122, %c0_123, %c0_124] : memref<2x8x64xf32, #tpu.memory_space<vmem>>, vector<1x8x64xf32>
    %221 = vector.shape_cast %220 : vector<1x8x64xf32> to vector<8x64xf32>
    %222 = vector.shape_cast %219 : vector<8x64xf32> to vector<1x8x64xf32>
    tpu.vector_store %arg21[%c0_122, %c0_123, %c0_124], %222 {strides = array<i32>} : memref<2x8x64xf32, #tpu.memory_space<vmem>>, vector<1x8x64xf32>,
    %223 = vector.extract_strided_slice %218 {offsets = [8, 0], sizes = [8, 64], strides = [1, 1]} : vector<16x64xf32> to vector<8x64xf32>
    %c1_125 = arith.constant 1 : index
    %c0_126 = arith.constant 0 : index
    %c0_127 = arith.constant 0 : index
    %224 = vector.load %arg21[%c1_125, %c0_126, %c0_127] : memref<2x8x64xf32, #tpu.memory_space<vmem>>, vector<1x8x64xf32>
    %225 = vector.shape_cast %224 : vector<1x8x64xf32> to vector<8x64xf32>
    %226 = vector.shape_cast %223 : vector<8x64xf32> to vector<1x8x64xf32>
    tpu.vector_store %arg21[%c1_125, %c0_126, %c0_127], %226 {strides = array<i32>} : memref<2x8x64xf32, #tpu.memory_space<vmem>>, vector<1x8x64xf32>,
    return
  }
}

</mosaic_0001>

<llo_original>
// kernel: tpu_custom_call.1
$region0: #{tpu_custom_call.1}
  #allocation0 [shape = 'u32[]', space=smem, size = 0x4, offset = 0x4, fixed_abs, tag = 'smem constant byte address 0x4 - core index']
  #allocation1 [shape = 'u32[144,128]{1,0:T(1,128)}', space=vmem, size = 0x12000, scoped, tag = 'internal scratch']
  %s0 = inlined_call_operand.hbm [shape: f32[36,64], index: 0, kind: input, shape index: {}]
  %s1 = inlined_call_operand.vmem [shape: f32[1,64], index: 1, kind: input, shape index: {}]
  %s2 = inlined_call_operand.vmem [shape: f32[1,64], index: 2, kind: input, shape index: {}]
  %s3 = inlined_call_operand.hbm [shape: f32[64,64], index: 3, kind: input, shape index: {}]
  %s4 = inlined_call_operand.hbm [shape: bf16[3,64,128], index: 4, kind: input, shape index: {}]
  %s5 = inlined_call_operand.hbm [shape: f32[1,128], index: 5, kind: input, shape index: {}]
  %s6 = inlined_call_operand.vmem [shape: bf16[3,128,128], index: 6, kind: input, shape index: {}]
  %s7 = inlined_call_operand.hbm [shape: f32[1,128], index: 7, kind: input, shape index: {}]
  %s8 = inlined_call_operand.hbm [shape: bf16[64,128], index: 8, kind: input, shape index: {}]
  %s9 = inlined_call_operand.hbm [shape: f32[1,128], index: 9, kind: input, shape index: {}]
  %s10 = inlined_call_operand.hbm [shape: f32[1,128], index: 10, kind: input, shape index: {}]
  %s11 = inlined_call_operand.hbm [shape: f32[1,128], index: 11, kind: input, shape index: {}]
  %s12 = inlined_call_operand.hbm [shape: f32[128,128], index: 12, kind: input, shape index: {}]
  %s13 = inlined_call_operand.hbm [shape: bf16[3,128,128], index: 13, kind: input, shape index: {}]
  %s14 = inlined_call_operand.vmem [shape: f32[1,128], index: 14, kind: input, shape index: {}]
  %s15 = inlined_call_operand.hbm [shape: bf16[3,128,128], index: 15, kind: input, shape index: {}]
  %s16 = inlined_call_operand.vmem [shape: f32[1,128], index: 16, kind: input, shape index: {}]
  %s17 = inlined_call_operand.vmem [shape: f32[16,36], index: 17, kind: input, shape index: {}]
  %s18 = inlined_call_operand.vmem [shape: f32[128,64], index: 18, kind: input, shape index: {}]
  %s19 = inlined_call_operand.hbm [shape: f32[2,16,128], index: 19, kind: output, shape index: {0}]
  %s20 = inlined_call_operand.hbm [shape: f32[2,16,128], index: 20, kind: output, shape index: {1}]
  %s21 = inlined_call_operand.hbm [shape: f32[2,8,64], index: 21, kind: output, shape index: {2}]
  %22 = xla_tuple %s19, %s20, %s21
  %s23 = sld [smem:[#allocation0]]
  $region150: #{tpu_custom_call.1} parent=0
    _
  %s25 = ssub.s32 1, %s23
  %s26 = scalar_select 0, %s25, %s23
  $region1: #{tpu_custom_call.1} parent=0
    #allocation2 [shape = 'u8[20480]{0}', space=vmem, size = 0x5000, scoped, tag = 'input window, operand 0, single buffered']
    #allocation3 [shape = 's32[1]{0}', space=sflag, size = 0x4, scoped, tag = 'scoped memory for tpu_custom_call.1']
    #allocation4 [shape = 's32[1]{0}', space=sflag, size = 0x4, scoped, tag = 'scoped memory for tpu_custom_call.1']
    #allocation5 [shape = 'u8[32768]{0}', space=vmem, size = 0x8000, scoped, tag = 'input window, operand 3, single buffered']
    #allocation6 [shape = 's32[1]{0}', space=sflag, size = 0x4, scoped, tag = 'scoped memory for tpu_custom_call.1']
    #allocation7 [shape = 'u8[49152]{0}', space=vmem, size = 0xc000, scoped, tag = 'input window, operand 4, single buffered']
    #allocation8 [shape = 'u8[512]{0}', space=vmem, size = 0x400, scoped, tag = 'input window, operand 5, single buffered']
    #allocation9 [shape = 's32[1]{0}', space=sflag, size = 0x4, scoped, tag = 'scoped memory for tpu_custom_call.1']
    #allocation10 [shape = 'u8[512]{0}', space=vmem, size = 0x400, scoped, tag = 'input window, operand 7, single buffered']
    #allocation11 [shape = 'u8[16384]{0}', space=vmem, size = 0x4000, scoped, tag = 'input window, operand 8, single buffered']
    #allocation12 [shape = 's32[1]{0}', space=sflag, size = 0x4, scoped, tag = 'scoped memory for tpu_custom_call.1']
    #allocation13 [shape = 'u8[512]{0}', space=vmem, size = 0x400, scoped, tag = 'input window, operand 9, single buffered']
    #allocation14 [shape = 'u8[512]{0}', space=vmem, size = 0x400, scoped, tag = 'input window, operand 10, single buffered']
    #allocation15 [shape = 's32[1]{0}', space=sflag, size = 0x4, scoped, tag = 'scoped memory for tpu_custom_call.1']
    #allocation16 [shape = 'u8[512]{0}', space=vmem, size = 0x400, scoped, tag = 'input window, operand 11, single buffered']
    #allocation17 [shape = 'u8[65536]{0}', space=vmem, size = 0x10000, scoped, tag = 'input window, operand 12, single buffered']
    #allocation18 [shape = 's32[1]{0}', space=sflag, size = 0x4, scoped, tag = 'scoped memory for tpu_custom_call.1']
    #allocation19 [shape = 'u8[98304]{0}', space=vmem, size = 0x18000, scoped, tag = 'input window, operand 13, single buffered']
    #allocation20 [shape = 'u8[98304]{0}', space=vmem, size = 0x18000, scoped, tag = 'input window, operand 15, single buffered']
    #allocation21 [shape = 's32[1]{0}', space=sflag, size = 0x4, scoped, tag = 'scoped memory for tpu_custom_call.1']
    #allocation22 [shape = 'u8[16384]{0}', space=vmem, size = 0x4000, scoped, tag = 'output window, operand 0, single buffered']
    #allocation23 [shape = 'u8[16384]{0}', space=vmem, size = 0x4000, scoped, tag = 'output window, operand 1, single buffered']
    #allocation24 [shape = 's32[1]{0}', space=sflag, size = 0x4, scoped, tag = 'scoped memory for tpu_custom_call.1']
    #allocation25 [shape = 'u8[8192]{0}', space=vmem, size = 0x2000, scoped, tag = 'output window, operand 2, single buffered']
    %27 = vsyncpa [#allocation3], 0
    %28 = vsyncpa [#allocation6], 0
    %29 = vsyncpa [#allocation9], 0
    %30 = vsyncpa [#allocation12], 0
    %31 = vsyncpa [#allocation15], 0
    %32 = vsyncpa [#allocation18], 0
    %33 = vsyncpa [#allocation21], 0
    %34 = vsyncpa [#allocation4], 0
    %35 = vsyncpa [#allocation24], 0
    // Predicated region
    $region2: #{tpu_custom_call.1} parent=1 // pred_check
      _
    $region3: #{tpu_custom_call.1} parent=1 // pred_check_branch
      %37 = sbr.rel (0) target = $region5
    $region4: #{tpu_custom_call.1} parent=1 // pred_region
      %s39 = ssub.s32 640, 640
      %40 = vsyncadd [#allocation3], %s39
      %s41 = sshll.u32 [#allocation2], 4
      %s42 = int_to_ptr.vmem [resolvable:$true] %s41
      %47 = dma.hbm_to_vmem [thread:$0]  %s0, 640, %s42, [#allocation3], 128, 128, 8
    $region5: #{tpu_custom_call.1} parent=1 // pred_fallthru
      _
    // Predicated region
    $region6: #{tpu_custom_call.1} parent=1 // pred_check
      _
    $region7: #{tpu_custom_call.1} parent=1 // pred_check_branch
      %49 = sbr.rel (0) target = $region9
    $region8: #{tpu_custom_call.1} parent=1 // pred_region
      _
    $region9: #{tpu_custom_call.1} parent=1 // pred_fallthru
      _
    // Predicated region
    $region10: #{tpu_custom_call.1} parent=1 // pred_check
      _
    $region11: #{tpu_custom_call.1} parent=1 // pred_check_branch
      %51 = sbr.rel (0) target = $region13
    $region12: #{tpu_custom_call.1} parent=1 // pred_region
      _
    $region13: #{tpu_custom_call.1} parent=1 // pred_fallthru
      _
    // Predicated region
    $region14: #{tpu_custom_call.1} parent=1 // pred_check
      _
    $region15: #{tpu_custom_call.1} parent=1 // pred_check_branch
      %53 = sbr.rel (0) target = $region17
    $region16: #{tpu_custom_call.1} parent=1 // pred_region
      %s55 = ssub.s32 1024, 1024
      %56 = vsyncadd [#allocation6], %s55
      %s57 = sshll.u32 [#allocation5], 4
      %s58 = int_to_ptr.vmem [resolvable:$true] %s57
      %63 = dma.hbm_to_vmem [thread:$0]  %s3, 1024, %s58, [#allocation6], 128, 128, 8
    $region17: #{tpu_custom_call.1} parent=1 // pred_fallthru
      _
    // Predicated region
    $region18: #{tpu_custom_call.1} parent=1 // pred_check
      _
    $region19: #{tpu_custom_call.1} parent=1 // pred_check_branch
      %65 = sbr.rel (0) target = $region21
    $region20: #{tpu_custom_call.1} parent=1 // pred_region
      %s67 = ssub.s32 1536, 1536
      %68 = vsyncadd [#allocation6], %s67
      %s69 = sshll.u32 [#allocation7], 4
      %s70 = int_to_ptr.vmem [resolvable:$true] %s69
      %75 = dma.hbm_to_vmem [thread:$0]  %s4, 1536, %s70, [#allocation6], 64, 64, 4
    $region21: #{tpu_custom_call.1} parent=1 // pred_fallthru
      _
    // Predicated region
    $region22: #{tpu_custom_call.1} parent=1 // pred_check
      _
    $region23: #{tpu_custom_call.1} parent=1 // pred_check_branch
      %77 = sbr.rel (0) target = $region25
    $region24: #{tpu_custom_call.1} parent=1 // pred_region
      %s79 = ssub.s32 16, 16
      %80 = vsyncadd [#allocation9], %s79
      %s82 = sshll.u32 [#allocation8], 4
      %s83 = int_to_ptr.vmem [resolvable:$true] %s82
      %85 = dma.hbm_to_vmem [thread:$0]  %s5, 16, %s83, [#allocation9]
    $region25: #{tpu_custom_call.1} parent=1 // pred_fallthru
      _
    // Predicated region
    $region26: #{tpu_custom_call.1} parent=1 // pred_check
      _
    $region27: #{tpu_custom_call.1} parent=1 // pred_check_branch
      %87 = sbr.rel (0) target = $region29
    $region28: #{tpu_custom_call.1} parent=1 // pred_region
      _
    $region29: #{tpu_custom_call.1} parent=1 // pred_fallthru
      _
    // Predicated region
    $region30: #{tpu_custom_call.1} parent=1 // pred_check
      _
    $region31: #{tpu_custom_call.1} parent=1 // pred_check_branch
      %89 = sbr.rel (0) target = $region33
    $region32: #{tpu_custom_call.1} parent=1 // pred_region
      %s91 = ssub.s32 16, 16
      %92 = vsyncadd [#allocation9], %s91
      %s94 = sshll.u32 [#allocation10], 4
      %s95 = int_to_ptr.vmem [resolvable:$true] %s94
      %97 = dma.hbm_to_vmem [thread:$0]  %s7, 16, %s95, [#allocation9]
    $region33: #{tpu_custom_call.1} parent=1 // pred_fallthru
      _
    // Predicated region
    $region34: #{tpu_custom_call.1} parent=1 // pred_check
      _
    $region35: #{tpu_custom_call.1} parent=1 // pred_check_branch
      %99 = sbr.rel (0) target = $region37
    $region36: #{tpu_custom_call.1} parent=1 // pred_region
      %s101 = ssub.s32 512, 512
      %102 = vsyncadd [#allocation12], %s101
      %s103 = sshll.u32 [#allocation11], 4
      %s104 = int_to_ptr.vmem [resolvable:$true] %s103
      %109 = dma.hbm_to_vmem [thread:$0]  %s8, 512, %s104, [#allocation12], 64, 64, 4
    $region37: #{tpu_custom_call.1} parent=1 // pred_fallthru
      _
    // Predicated region
    $region38: #{tpu_custom_call.1} parent=1 // pred_check
      _
    $region39: #{tpu_custom_call.1} parent=1 // pred_check_branch
      %111 = sbr.rel (0) target = $region41
    $region40: #{tpu_custom_call.1} parent=1 // pred_region
      %s113 = ssub.s32 16, 16
      %114 = vsyncadd [#allocation12], %s113
      %s116 = sshll.u32 [#allocation13], 4
      %s117 = int_to_ptr.vmem [resolvable:$true] %s116
      %119 = dma.hbm_to_vmem [thread:$0]  %s9, 16, %s117, [#allocation12]
    $region41: #{tpu_custom_call.1} parent=1 // pred_fallthru
      _
    // Predicated region
    $region42: #{tpu_custom_call.1} parent=1 // pred_check
      _
    $region43: #{tpu_custom_call.1} parent=1 // pred_check_branch
      %121 = sbr.rel (0) target = $region45
    $region44: #{tpu_custom_call.1} parent=1 // pred_region
      %s123 = ssub.s32 16, 16
      %124 = vsyncadd [#allocation15], %s123
      %s126 = sshll.u32 [#allocation14], 4
      %s127 = int_to_ptr.vmem [resolvable:$true] %s126
      %129 = dma.hbm_to_vmem [thread:$0]  %s10, 16, %s127, [#allocation15]
    $region45: #{tpu_custom_call.1} parent=1 // pred_fallthru
      _
    // Predicated region
    $region46: #{tpu_custom_call.1} parent=1 // pred_check
      _
    $region47: #{tpu_custom_call.1} parent=1 // pred_check_branch
      %131 = sbr.rel (0) target = $region49
    $region48: #{tpu_custom_call.1} parent=1 // pred_region
      %s133 = ssub.s32 16, 16
      %134 = vsyncadd [#allocation15], %s133
      %s136 = sshll.u32 [#allocation16], 4
      %s137 = int_to_ptr.vmem [resolvable:$true] %s136
      %139 = dma.hbm_to_vmem [thread:$0]  %s11, 16, %s137, [#allocation15]
    $region49: #{tpu_custom_call.1} parent=1 // pred_fallthru
      _
    // Predicated region
    $region50: #{tpu_custom_call.1} parent=1 // pred_check
      _
    $region51: #{tpu_custom_call.1} parent=1 // pred_check_branch
      %141 = sbr.rel (0) target = $region53
    $region52: #{tpu_custom_call.1} parent=1 // pred_region
      %s143 = ssub.s32 2048, 2048
      %144 = vsyncadd [#allocation18], %s143
      %s145 = sshll.u32 [#allocation17], 4
      %s146 = int_to_ptr.vmem [resolvable:$true] %s145
      %151 = dma.hbm_to_vmem [thread:$0]  %s12, 2048, %s146, [#allocation18], 128, 128, 8
    $region53: #{tpu_custom_call.1} parent=1 // pred_fallthru
      _
    // Predicated region
    $region54: #{tpu_custom_call.1} parent=1 // pred_check
      _
    $region55: #{tpu_custom_call.1} parent=1 // pred_check_branch
      %153 = sbr.rel (0) target = $region57
    $region56: #{tpu_custom_call.1} parent=1 // pred_region
      %s155 = ssub.s32 3072, 3072
      %156 = vsyncadd [#allocation18], %s155
      %s157 = sshll.u32 [#allocation19], 4
      %s158 = int_to_ptr.vmem [resolvable:$true] %s157
      %163 = dma.hbm_to_vmem [thread:$0]  %s13, 3072, %s158, [#allocation18], 64, 64, 4
    $region57: #{tpu_custom_call.1} parent=1 // pred_fallthru
      _
    // Predicated region
    $region58: #{tpu_custom_call.1} parent=1 // pred_check
      _
    $region59: #{tpu_custom_call.1} parent=1 // pred_check_branch
      %165 = sbr.rel (0) target = $region61
    $region60: #{tpu_custom_call.1} parent=1 // pred_region
      _
    $region61: #{tpu_custom_call.1} parent=1 // pred_fallthru
      _
    // Predicated region
    $region62: #{tpu_custom_call.1} parent=1 // pred_check
      _
    $region63: #{tpu_custom_call.1} parent=1 // pred_check_branch
      %167 = sbr.rel (0) target = $region65
    $region64: #{tpu_custom_call.1} parent=1 // pred_region
      %s169 = ssub.s32 3072, 3072
      %170 = vsyncadd [#allocation21], %s169
      %s171 = sshll.u32 [#allocation20], 4
      %s172 = int_to_ptr.vmem [resolvable:$true] %s171
      %177 = dma.hbm_to_vmem [thread:$0]  %s15, 3072, %s172, [#allocation21], 64, 64, 4
    $region65: #{tpu_custom_call.1} parent=1 // pred_fallthru
      _
    // Predicated region
    $region66: #{tpu_custom_call.1} parent=1 // pred_check
      _
    $region67: #{tpu_custom_call.1} parent=1 // pred_check_branch
      %179 = sbr.rel (0) target = $region69
    $region68: #{tpu_custom_call.1} parent=1 // pred_region
      _
    $region69: #{tpu_custom_call.1} parent=1 // pred_fallthru
      _
    // Predicated region
    $region70: #{tpu_custom_call.1} parent=1 // pred_check
      _
    $region71: #{tpu_custom_call.1} parent=1 // pred_check_branch
      %181 = sbr.rel (0) target = $region73
    $region72: #{tpu_custom_call.1} parent=1 // pred_region
      _
    $region73: #{tpu_custom_call.1} parent=1 // pred_fallthru
      _
    // Predicated region
    $region74: #{tpu_custom_call.1} parent=1 // pred_check
      _
    $region75: #{tpu_custom_call.1} parent=1 // pred_check_branch
      %183 = sbr.rel (0) target = $region77
    $region76: #{tpu_custom_call.1} parent=1 // pred_region
      _
    $region77: #{tpu_custom_call.1} parent=1 // pred_fallthru
      _
    // Predicated region
    $region78: #{tpu_custom_call.1} parent=1 // pred_check
      _
    $region79: #{tpu_custom_call.1} parent=1 // pred_check_branch
      %185 = sbr.rel (0) target = $region81
    $region80: #{tpu_custom_call.1} parent=1 // pred_region
      %186 = dma.done [#allocation3], 640
    $region81: #{tpu_custom_call.1} parent=1 // pred_fallthru
      _
    // Predicated region
    $region82: #{tpu_custom_call.1} parent=1 // pred_check
      _
    $region83: #{tpu_custom_call.1} parent=1 // pred_check_branch
      %188 = sbr.rel (0) target = $region85
    $region84: #{tpu_custom_call.1} parent=1 // pred_region
      %189 = dma.done [#allocation6], 1024
    $region85: #{tpu_custom_call.1} parent=1 // pred_fallthru
      _
    // Predicated region
    $region86: #{tpu_custom_call.1} parent=1 // pred_check
      _
    $region87: #{tpu_custom_call.1} parent=1 // pred_check_branch
      %191 = sbr.rel (0) target = $region89
    $region88: #{tpu_custom_call.1} parent=1 // pred_region
      %192 = dma.done [#allocation6], 1536
    $region89: #{tpu_custom_call.1} parent=1 // pred_fallthru
      _
    // Predicated region
    $region90: #{tpu_custom_call.1} parent=1 // pred_check
      _
    $region91: #{tpu_custom_call.1} parent=1 // pred_check_branch
      %194 = sbr.rel (0) target = $region93
    $region92: #{tpu_custom_call.1} parent=1 // pred_region
      %195 = dma.done [#allocation9], 16
    $region93: #{tpu_custom_call.1} parent=1 // pred_fallthru
      _
    // Predicated region
    $region94: #{tpu_custom_call.1} parent=1 // pred_check
      _
    $region95: #{tpu_custom_call.1} parent=1 // pred_check_branch
      %197 = sbr.rel (0) target = $region97
    $region96: #{tpu_custom_call.1} parent=1 // pred_region
      %198 = dma.done [#allocation9], 16
    $region97: #{tpu_custom_call.1} parent=1 // pred_fallthru
      _
    // Predicated region
    $region98: #{tpu_custom_call.1} parent=1 // pred_check
      _
    $region99: #{tpu_custom_call.1} parent=1 // pred_check_branch
      %200 = sbr.rel (0) target = $region101
    $region100: #{tpu_custom_call.1} parent=1 // pred_region
      %201 = dma.done [#allocation12], 512
    $region101: #{tpu_custom_call.1} parent=1 // pred_fallthru
      _
    // Predicated region
    $region102: #{tpu_custom_call.1} parent=1 // pred_check
      _
    $region103: #{tpu_custom_call.1} parent=1 // pred_check_branch
      %203 = sbr.rel (0) target = $region105
    $region104: #{tpu_custom_call.1} parent=1 // pred_region
      %204 = dma.done [#allocation12], 16
    $region105: #{tpu_custom_call.1} parent=1 // pred_fallthru
      _
    // Predicated region
    $region106: #{tpu_custom_call.1} parent=1 // pred_check
      _
    $region107: #{tpu_custom_call.1} parent=1 // pred_check_branch
      %206 = sbr.rel (0) target = $region109
    $region108: #{tpu_custom_call.1} parent=1 // pred_region
      %207 = dma.done [#allocation15], 16
    $region109: #{tpu_custom_call.1} parent=1 // pred_fallthru
      _
    // Predicated region
    $region110: #{tpu_custom_call.1} parent=1 // pred_check
      _
    $region111: #{tpu_custom_call.1} parent=1 // pred_check_branch
      %209 = sbr.rel (0) target = $region113
    $region112: #{tpu_custom_call.1} parent=1 // pred_region
      %210 = dma.done [#allocation15], 16
    $region113: #{tpu_custom_call.1} parent=1 // pred_fallthru
      _
    // Predicated region
    $region114: #{tpu_custom_call.1} parent=1 // pred_check
      _
    $region115: #{tpu_custom_call.1} parent=1 // pred_check_branch
      %212 = sbr.rel (0) target = $region117
    $region116: #{tpu_custom_call.1} parent=1 // pred_region
      %213 = dma.done [#allocation18], 2048
    $region117: #{tpu_custom_call.1} parent=1 // pred_fallthru
      _
    // Predicated region
    $region118: #{tpu_custom_call.1} parent=1 // pred_check
      _
    $region119: #{tpu_custom_call.1} parent=1 // pred_check_branch
      %215 = sbr.rel (0) target = $region121
    $region120: #{tpu_custom_call.1} parent=1 // pred_region
      %216 = dma.done [#allocation18], 3072
    $region121: #{tpu_custom_call.1} parent=1 // pred_fallthru
      _
    // Predicated region
    $region122: #{tpu_custom_call.1} parent=1 // pred_check
      _
    $region123: #{tpu_custom_call.1} parent=1 // pred_check_branch
      %218 = sbr.rel (0) target = $region125
    $region124: #{tpu_custom_call.1} parent=1 // pred_region
      %219 = dma.done [#allocation21], 3072
    $region125: #{tpu_custom_call.1} parent=1 // pred_fallthru
      _
    %v221 = vlaneseq
    %v222 = vshrl.u32 %v221, 7
    %v223 = vadd.s32 %v222, 8
    %v224 = vadd.s32 %v222, 16
    %v225 = vadd.s32 %v222, 24
    %v226 = vadd.s32 %v222, 32
    %vm227 = vcmp.lt.s32.totalorder %v222, 0
    %v228 = vsub.s32 0, %v222
    %v229 = vsel %vm227, %v228, %v222
    %v230 = vmul.u32.u64.compose %v229, 3817748708
    %v231 = vextract.low.u32 %v230
    %v232 = vextract.high.u32 %v230
    %v233 = vshrl.u32 %v232, 4
    %v234 = vmul.u32 %v233, 18
    %v235 = vsub.s32 %v229, %v234
    %v236 = vsub.s32 0, %v235
    %v237 = vsel %vm227, %v236, %v235
    %vm238 = vcmp.lt.s32.totalorder %v223, 0
    %v239 = vsub.s32 0, %v223
    %v240 = vsel %vm238, %v239, %v223
    %v241 = vmul.u32.u64.compose %v240, 3817748708
    %v242 = vextract.low.u32 %v241
    %v243 = vextract.high.u32 %v241
    %v244 = vshrl.u32 %v243, 4
    %v245 = vmul.u32 %v244, 18
    %v246 = vsub.s32 %v240, %v245
    %v247 = vsub.s32 0, %v246
    %v248 = vsel %vm238, %v247, %v246
    %vm249 = vcmp.lt.s32.totalorder %v224, 0
    %v250 = vsub.s32 0, %v224
    %v251 = vsel %vm249, %v250, %v224
    %v252 = vmul.u32.u64.compose %v251, 3817748708
    %v253 = vextract.low.u32 %v252
    %v254 = vextract.high.u32 %v252
    %v255 = vshrl.u32 %v254, 4
    %v256 = vmul.u32 %v255, 18
    %v257 = vsub.s32 %v251, %v256
    %v258 = vsub.s32 0, %v257
    %v259 = vsel %vm249, %v258, %v257
    %vm260 = vcmp.lt.s32.totalorder %v225, 0
    %v261 = vsub.s32 0, %v225
    %v262 = vsel %vm260, %v261, %v225
    %v263 = vmul.u32.u64.compose %v262, 3817748708
    %v264 = vextract.low.u32 %v263
    %v265 = vextract.high.u32 %v263
    %v266 = vshrl.u32 %v265, 4
    %v267 = vmul.u32 %v266, 18
    %v268 = vsub.s32 %v262, %v267
    %v269 = vsub.s32 0, %v268
    %v270 = vsel %vm260, %v269, %v268
    %vm271 = vcmp.lt.s32.totalorder %v226, 0
    %v272 = vsub.s32 0, %v226
    %v273 = vsel %vm271, %v272, %v226
    %v274 = vmul.u32.u64.compose %v273, 3817748708
    %v275 = vextract.low.u32 %v274
    %v276 = vextract.high.u32 %v274
    %v277 = vshrl.u32 %v276, 4
    %v278 = vmul.u32 %v277, 18
    %v279 = vsub.s32 %v273, %v278
    %v280 = vsub.s32 0, %v279
    %v281 = vsel %vm271, %v280, %v279
    %vm282 = vcmp.ne.s32.totalorder %v237, 0
    %vm283 = vcmp.ne.s32.totalorder %v248, 0
    %vm284 = vcmp.ne.s32.totalorder %v259, 0
    %vm285 = vcmp.ne.s32.totalorder %v270, 0
    %vm286 = vcmp.ne.s32.totalorder %v281, 0
    %vm287 = vcmp.lt.s32.totalorder %v237, 0
    %vm288 = vcmp.lt.s32.totalorder %v248, 0
    %vm289 = vcmp.lt.s32.totalorder %v259, 0
    %vm290 = vcmp.lt.s32.totalorder %v270, 0
    %vm291 = vcmp.lt.s32.totalorder %v281, 0
    %vm292 = vmand %vm287, %vm282
    %vm293 = vmand %vm288, %vm283
    %vm294 = vmand %vm289, %vm284
    %vm295 = vmand %vm290, %vm285
    %vm296 = vmand %vm291, %vm286
    %v297 = vadd.s32 %v237, 18
    %v298 = vadd.s32 %v248, 18
    %v299 = vadd.s32 %v259, 18
    %v300 = vadd.s32 %v270, 18
    %v301 = vadd.s32 %v281, 18
    %v302 = vsel %vm292, %v297, %v237
    %v303 = vsel %vm293, %v298, %v248
    %v304 = vsel %vm294, %v299, %v259
    %v305 = vsel %vm295, %v300, %v270
    %v306 = vsel %vm296, %v301, %v281
    %vm307 = vcmp.ge.s32.totalorder %v302, 1
    %vm308 = vcmp.ge.s32.totalorder %v303, 1
    %vm309 = vcmp.ge.s32.totalorder %v304, 1
    %vm310 = vcmp.ge.s32.totalorder %v305, 1
    %vm311 = vcmp.ge.s32.totalorder %v306, 1
    %vm312 = vcmp.le.s32.totalorder %v302, 16
    %vm313 = vcmp.le.s32.totalorder %v303, 16
    %vm314 = vcmp.le.s32.totalorder %v304, 16
    %vm315 = vcmp.le.s32.totalorder %v305, 16
    %vm316 = vcmp.le.s32.totalorder %v306, 16
    %vm317 = vmand %vm307, %vm312
    %vm318 = vmand %vm308, %vm313
    %vm319 = vmand %vm309, %vm314
    %vm320 = vmand %vm310, %vm315
    %vm321 = vmand %vm311, %vm316
    %v322 = vsel %vm317, 1, 0
    %v323 = vsel %vm318, 1, 0
    %v324 = vsel %vm319, 1, 0
    %v325 = vsel %vm320, 1, 0
    %v326 = vsel %vm321, 1, 0
    %v327 = vcvt.s32.f32 %v322
    %v328 = vcvt.s32.f32 %v323
    %v329 = vcvt.s32.f32 %v324
    %v330 = vcvt.s32.f32 %v325
    %v331 = vcvt.s32.f32 %v326
    %v332 = vld [vmem:[#allocation2] sm:$0xff]
    %v333 = vld [vmem:[#allocation2 + $0x8] sm:$0xff]
    %v334 = vld [vmem:[#allocation2 + $0x10] sm:$0xff]
    %v335 = vld [vmem:[#allocation2 + $0x18] sm:$0xff]
    %v336 = vld [vmem:[#allocation2 + $0x20] sm:$0xf]
    %vm337 = vcmask 523264
    %v338 = vsel %vm337, %v332, 0.0
    %v339 = vsel %vm337, %v333, 0.0
    %v340 = vadd.f32 %v338, %v339
    %v341 = vsel %vm337, %v334, 0.0
    %v342 = vadd.f32 %v340, %v341
    %v343 = vsel %vm337, %v335, 0.0
    %v344 = vadd.f32 %v342, %v343
    %vm345 = vcmask 519168
    %v346 = vsel %vm345, %v336, 0.0
    %v347 = vadd.f32 %v344, %v346
    %v348 = vrot.slane %v347, 4
    %v349 = vadd.f32 %v347, %v348
    %v350 = vrot.slane %v349, 2
    %v351 = vadd.f32 %v349, %v350
    %v352 = vrot.slane %v351, 1
    %v353 = vadd.f32 %v351, %v352
    %v354 = vmul.f32 %v332, %v332
    %v355 = vmul.f32 %v333, %v333
    %v356 = vmul.f32 %v334, %v334
    %v357 = vmul.f32 %v335, %v335
    %v358 = vmul.f32 %v336, %v336
    %v359 = vsel %vm337, %v354, 0.0
    %v360 = vsel %vm337, %v355, 0.0
    %v361 = vadd.f32 %v359, %v360
    %v362 = vsel %vm337, %v356, 0.0
    %v363 = vadd.f32 %v361, %v362
    %v364 = vsel %vm337, %v357, 0.0
    %v365 = vadd.f32 %v363, %v364
    %v366 = vsel %vm345, %v358, 0.0
    %v367 = vadd.f32 %v365, %v366
    %v368 = vrot.slane %v367, 4
    %v369 = vadd.f32 %v367, %v368
    %v370 = vrot.slane %v369, 2
    %v371 = vadd.f32 %v369, %v370
    %v372 = vrot.slane %v371, 1
    %v373 = vadd.f32 %v371, %v372
    %v374 = vld [vmem:[#allocation5] sm:$0xff]
    %v375 = vld [vmem:[#allocation5 + $0x8] sm:$0xff]
    %v376 = vld [vmem:[#allocation5 + $0x10] sm:$0xff]
    %v377 = vld [vmem:[#allocation5 + $0x18] sm:$0xff]
    %v378 = vld [vmem:[#allocation5 + $0x20] sm:$0xff]
    %v379 = vld [vmem:[#allocation5 + $0x28] sm:$0xff]
    %v380 = vld [vmem:[#allocation5 + $0x30] sm:$0xff]
    %v381 = vld [vmem:[#allocation5 + $0x38] sm:$0xff]
    %v383 = vsel %vm337, %v353, 0
    %385 = vmatprep.subr.mxu0 0.0
    %386 = vmatpush1.msra.mxu0 0.0
    %387 = vmatprep.subr.mxu0 0.0
    %388 = vmatpush1.msra.mxu0 0.0
    %389 = vmatprep.subr.mxu0 0.0
    %390 = vmatpush1.msra.mxu0 0.0
    %391 = vmatprep.subr.mxu0 0.0
    %392 = vmatpush1.msra.mxu0 0.0
    %393 = vmatprep.subr.mxu0 0.0
    %394 = vmatpush1.msra.mxu0 0.0
    %395 = vmatprep.subr.mxu0 0.0
    %396 = vmatpush1.msra.mxu0 0.0
    %397 = vmatprep.subr.mxu0 0.0
    %398 = vmatpush1.msra.mxu0 0.0
    %399 = vmatprep.subr.mxu0 0.0
    %400 = vmatpush1.msra.mxu0 0.0
    %401 = vmatprep.subr.mxu0 0.0
    %402 = vmatpush1.msra.mxu0 %v381
    %403 = vmatprep.subr.mxu0 0.0
    %404 = vmatpush1.msra.mxu0 %v380
    %405 = vmatprep.subr.mxu0 0.0
    %406 = vmatpush1.msra.mxu0 %v379
    %407 = vmatprep.subr.mxu0 0.0
    %408 = vmatpush1.msra.mxu0 %v378
    %409 = vmatprep.subr.mxu0 0.0
    %410 = vmatpush1.msra.mxu0 %v377
    %411 = vmatprep.subr.mxu0 0.0
    %412 = vmatpush1.msra.mxu0 %v376
    %413 = vmatprep.subr.mxu0 0.0
    %414 = vmatpush1.msra.mxu0 %v375
    %415 = vmatprep.subr.mxu0 0.0
    %416 = vmatpush1.msra.mxu0 %v374
    %417 = vmatprep.subr.mxu0 0.0
    %418 = vmatpush2.msra.mxu0 0.0
    %419 = vmatprep.subr.mxu0 0.0
    %420 = vmatpush2.msra.mxu0 0.0
    %421 = vmatprep.subr.mxu0 0.0
    %422 = vmatpush2.msra.mxu0 0.0
    %423 = vmatprep.subr.mxu0 0.0
    %424 = vmatpush2.msra.mxu0 0.0
    %425 = vmatprep.subr.mxu0 0.0
    %426 = vmatpush2.msra.mxu0 0.0
    %427 = vmatprep.subr.mxu0 0.0
    %428 = vmatpush2.msra.mxu0 0.0
    %429 = vmatprep.subr.mxu0 0.0
    %430 = vmatpush2.msra.mxu0 0.0
    %431 = vmatprep.subr.mxu0 0.0
    %432 = vmatpush2.msra.mxu0 0.0
    %433 = vmatprep.subr.mxu0 0.0
    %434 = vmatpush2.msra.mxu0 0.0
    %435 = vmatprep.subr.mxu0 0.0
    %436 = vmatpush2.msra.mxu0 0.0
    %437 = vmatprep.subr.mxu0 0.0
    %438 = vmatpush2.msra.mxu0 0.0
    %439 = vmatprep.subr.mxu0 0.0
    %440 = vmatpush2.msra.mxu0 0.0
    %441 = vmatprep.subr.mxu0 0.0
    %442 = vmatpush2.msra.mxu0 0.0
    %443 = vmatprep.subr.mxu0 0.0
    %444 = vmatpush2.msra.mxu0 0.0
    %445 = vmatprep.subr.mxu0 0.0
    %446 = vmatpush2.msra.mxu0 0.0
    %447 = vmatprep.subr.mxu0 0.0
    %448 = vmatpush2.msra.mxu0 0.0
    %449 = vmatprep.mubr.f32.mxu0 0.0
    %450 = vmatmul.mubr.f32.gmra.mxu0 %v383
    %v451 = vpop.f32.mrf.mxu0
    %v452 = vadd.f32 0.0, %v451
    %v453 = vpop.f32.mrf.mxu0
    %454 = vdwg.mxu0
    %v456 = vsel %vm337, %v373, 0
    %458 = vmatprep.subr.mxu0 0.0
    %459 = vmatpush1.msra.mxu0 0.0
    %460 = vmatprep.subr.mxu0 0.0
    %461 = vmatpush1.msra.mxu0 0.0
    %462 = vmatprep.subr.mxu0 0.0
    %463 = vmatpush1.msra.mxu0 0.0
    %464 = vmatprep.subr.mxu0 0.0
    %465 = vmatpush1.msra.mxu0 0.0
    %466 = vmatprep.subr.mxu0 0.0
    %467 = vmatpush1.msra.mxu0 0.0
    %468 = vmatprep.subr.mxu0 0.0
    %469 = vmatpush1.msra.mxu0 0.0
    %470 = vmatprep.subr.mxu0 0.0
    %471 = vmatpush1.msra.mxu0 0.0
    %472 = vmatprep.subr.mxu0 0.0
    %473 = vmatpush1.msra.mxu0 0.0
    %474 = vmatprep.subr.mxu0 0.0
    %475 = vmatpush1.msra.mxu0 %v381
    %476 = vmatprep.subr.mxu0 0.0
    %477 = vmatpush1.msra.mxu0 %v380
    %478 = vmatprep.subr.mxu0 0.0
    %479 = vmatpush1.msra.mxu0 %v379
    %480 = vmatprep.subr.mxu0 0.0
    %481 = vmatpush1.msra.mxu0 %v378
    %482 = vmatprep.subr.mxu0 0.0
    %483 = vmatpush1.msra.mxu0 %v377
    %484 = vmatprep.subr.mxu0 0.0
    %485 = vmatpush1.msra.mxu0 %v376
    %486 = vmatprep.subr.mxu0 0.0
    %487 = vmatpush1.msra.mxu0 %v375
    %488 = vmatprep.subr.mxu0 0.0
    %489 = vmatpush1.msra.mxu0 %v374
    %490 = vmatprep.subr.mxu0 0.0
    %491 = vmatpush2.msra.mxu0 0.0
    %492 = vmatprep.subr.mxu0 0.0
    %493 = vmatpush2.msra.mxu0 0.0
    %494 = vmatprep.subr.mxu0 0.0
    %495 = vmatpush2.msra.mxu0 0.0
    %496 = vmatprep.subr.mxu0 0.0
    %497 = vmatpush2.msra.mxu0 0.0
    %498 = vmatprep.subr.mxu0 0.0
    %499 = vmatpush2.msra.mxu0 0.0
    %500 = vmatprep.subr.mxu0 0.0
    %501 = vmatpush2.msra.mxu0 0.0
    %502 = vmatprep.subr.mxu0 0.0
    %503 = vmatpush2.msra.mxu0 0.0
    %504 = vmatprep.subr.mxu0 0.0
    %505 = vmatpush2.msra.mxu0 0.0
    %506 = vmatprep.subr.mxu0 0.0
    %507 = vmatpush2.msra.mxu0 0.0
    %508 = vmatprep.subr.mxu0 0.0
    %509 = vmatpush2.msra.mxu0 0.0
    %510 = vmatprep.subr.mxu0 0.0
    %511 = vmatpush2.msra.mxu0 0.0
    %512 = vmatprep.subr.mxu0 0.0
    %513 = vmatpush2.msra.mxu0 0.0
    %514 = vmatprep.subr.mxu0 0.0
    %515 = vmatpush2.msra.mxu0 0.0
    %516 = vmatprep.subr.mxu0 0.0
    %517 = vmatpush2.msra.mxu0 0.0
    %518 = vmatprep.subr.mxu0 0.0
    %519 = vmatpush2.msra.mxu0 0.0
    %520 = vmatprep.subr.mxu0 0.0
    %521 = vmatpush2.msra.mxu0 0.0
    %522 = vmatprep.mubr.f32.mxu0 0.0
    %523 = vmatmul.mubr.f32.gmra.mxu0 %v456
    %v524 = vpop.f32.mrf.mxu0
    %v525 = vadd.f32 0.0, %v524
    %v526 = vpop.f32.mrf.mxu0
    %527 = vdwg.mxu0
    %v528 = vmul.f32 %v452, 0.001953125
    %v529 = vmul.f32 %v525, 0.001953125
    %v530 = vmul.f32 %v528, %v528
    %v531 = vsub.f32 %v529, %v530
    %v532 = vld [vmem:[%s1] sm:$0x1]
    %v533 = vadd.f32 %v531, 1e-05
    %v534 = vrsqrt.pop %v533
    %v535 = vmul.f32 %v532, %v534
    %v536 = vld [vmem:[%s2] sm:$0x1]
    %v537 = vmul.f32 %v528, %v535
    %v538 = vsub.f32 %v536, %v537
    %v540 = vlaneseq
    %v541 = vshrl.u32 %v540, 7
    %v542 = vsub.s32 0, %v541
    %v543 = vrot.slane %v535, %v542
    %v545 = vmul.f32 %v332, %v543
    %v546 = vmul.f32 %v333, %v543
    %v547 = vmul.f32 %v334, %v543
    %v548 = vmul.f32 %v335, %v543
    %v549 = vmul.f32 %v336, %v543
    %v551 = vlaneseq
    %v552 = vshrl.u32 %v551, 7
    %v553 = vsub.s32 0, %v552
    %v554 = vrot.slane %v538, %v553
    %v556 = vadd.f32 %v545, %v554
    %v557 = vadd.f32 %v546, %v554
    %v558 = vadd.f32 %v547, %v554
    %v559 = vadd.f32 %v548, %v554
    %v560 = vadd.f32 %v549, %v554
    %v561 = vmul.f32 %v556, %v327
    %v562 = vmul.f32 %v557, %v328
    %v563 = vmul.f32 %v558, %v329
    %v564 = vmul.f32 %v559, %v330
    %v565 = vmul.f32 %v560, %v331
    %v566 = vld [vmem:[#allocation8] sm:$0x1]
    %v567 = vpack.c.bf16 %v562, %v561
    %v568 = vpack.c.bf16 %v564, %v563
    %v569 = vpack.c.bf16 %v565, %v565
    %v570 = vld [vmem:[#allocation7] sm:$0xf]
    %v571 = vld [vmem:[#allocation7 + $0x4] sm:$0xf]
    %v572 = vld [vmem:[#allocation7 + $0x8] sm:$0xf]
    %v573 = vld [vmem:[#allocation7 + $0xc] sm:$0xf]
    %v574 = vld [vmem:[#allocation7 + $0x10] sm:$0xf]
    %v575 = vld [vmem:[#allocation7 + $0x14] sm:$0xf]
    %v576 = vld [vmem:[#allocation7 + $0x18] sm:$0xf]
    %v577 = vld [vmem:[#allocation7 + $0x1c] sm:$0xf]
    %v586 = vunpack.c.l.b16 %v570
    %v587 = vunpack.c.l.b16 %v571
    %v588 = vunpack.c.l.b16 %v572
    %v589 = vunpack.c.l.b16 %v573
    %v590 = vunpack.c.l.b16 %v574
    %v591 = vunpack.c.l.b16 %v575
    %v592 = vunpack.c.l.b16 %v576
    %v593 = vunpack.c.l.b16 %v577
    %v594 = vpack.c.b16 %v587, %v586
    %v595 = vpack.c.b16 %v589, %v588
    %v596 = vpack.c.b16 %v591, %v590
    %v597 = vpack.c.b16 %v593, %v592
    %v603 = vsel %vm337, %v567, 0
    %v606 = vsel %vm337, %v568, 0
    %v609 = vsel %vm337, %v569, 0
    %611 = vmatprep.subr.bf16.mxu0 0
    %612 = vmatpush1.bf16.msra.mxu0 0
    %613 = vmatprep.subr.bf16.mxu0 0
    %614 = vmatpush1.bf16.msra.mxu0 0
    %615 = vmatprep.subr.bf16.mxu0 0
    %616 = vmatpush1.bf16.msra.mxu0 0
    %617 = vmatprep.subr.bf16.mxu0 0
    %618 = vmatpush1.bf16.msra.mxu0 0
    %619 = vmatprep.subr.bf16.mxu0 0
    %620 = vmatpush1.bf16.msra.mxu0 %v597
    %621 = vmatprep.subr.bf16.mxu0 0
    %622 = vmatpush1.bf16.msra.mxu0 %v596
    %623 = vmatprep.subr.bf16.mxu0 0
    %624 = vmatpush1.bf16.msra.mxu0 %v595
    %625 = vmatprep.subr.bf16.mxu0 0
    %626 = vmatpush1.bf16.msra.mxu0 %v594
    %627 = vmatprep.subr.bf16.mxu0 0
    %628 = vmatpush2.bf16.msra.mxu0 0
    %629 = vmatprep.subr.bf16.mxu0 0
    %630 = vmatpush2.bf16.msra.mxu0 0
    %631 = vmatprep.subr.bf16.mxu0 0
    %632 = vmatpush2.bf16.msra.mxu0 0
    %633 = vmatprep.subr.bf16.mxu0 0
    %634 = vmatpush2.bf16.msra.mxu0 0
    %635 = vmatprep.subr.bf16.mxu0 0
    %636 = vmatpush2.bf16.msra.mxu0 0
    %637 = vmatprep.subr.bf16.mxu0 0
    %638 = vmatpush2.bf16.msra.mxu0 0
    %639 = vmatprep.subr.bf16.mxu0 0
    %640 = vmatpush2.bf16.msra.mxu0 0
    %641 = vmatprep.subr.bf16.mxu0 0
    %642 = vmatpush2.bf16.msra.mxu0 0
    %643 = vmatprep.mubr.bf16.mxu0 0
    %644 = vmatmul.mubr.bf16.gmra.mxu0 %v603
    %v645 = vpop.f32.mrf.mxu0
    %v646 = vadd.f32 0.0, %v645
    %v647 = vpop.f32.mrf.mxu0
    %v648 = vpop.f32.mrf.mxu0
    %v649 = vadd.f32 0.0, %v648
    %v650 = vpop.f32.mrf.mxu0
    %651 = vmatprep.mubr.bf16.mxu0 0
    %652 = vmatmul.mubr.bf16.gmra.mxu0 %v606
    %v653 = vpop.f32.mrf.mxu0
    %v654 = vadd.f32 0.0, %v653
    %v655 = vpop.f32.mrf.mxu0
    %v656 = vpop.f32.mrf.mxu0
    %v657 = vadd.f32 0.0, %v656
    %v658 = vpop.f32.mrf.mxu0
    %659 = vmatprep.mubr.bf16.mxu0 0
    %660 = vmatmul.mubr.bf16.gmra.mxu0 %v609
    %v661 = vpop.f32.mrf.mxu0
    %v662 = vadd.f32 0.0, %v661
    %v663 = vpop.f32.mrf.mxu0
    %v664 = vpop.f32.mrf.mxu0
    %v665 = vpop.f32.mrf.mxu0
    %666 = vdwg.mxu0
    %s667 = scalar_lea.vmem [#allocation7], 32
    %v668 = vld [vmem:[%s667] sm:$0xf]
    %v669 = vld [vmem:[%s667 + $0x4] sm:$0xf]
    %v670 = vld [vmem:[%s667 + $0x8] sm:$0xf]
    %v671 = vld [vmem:[%s667 + $0xc] sm:$0xf]
    %v672 = vld [vmem:[%s667 + $0x10] sm:$0xf]
    %v673 = vld [vmem:[%s667 + $0x14] sm:$0xf]
    %v674 = vld [vmem:[%s667 + $0x18] sm:$0xf]
    %v675 = vld [vmem:[%s667 + $0x1c] sm:$0xf]
    %v684 = vunpack.c.l.b16 %v668
    %v685 = vunpack.c.l.b16 %v669
    %v686 = vunpack.c.l.b16 %v670
    %v687 = vunpack.c.l.b16 %v671
    %v688 = vunpack.c.l.b16 %v672
    %v689 = vunpack.c.l.b16 %v673
    %v690 = vunpack.c.l.b16 %v674
    %v691 = vunpack.c.l.b16 %v675
    %v692 = vpack.c.b16 %v685, %v684
    %v693 = vpack.c.b16 %v687, %v686
    %v694 = vpack.c.b16 %v689, %v688
    %v695 = vpack.c.b16 %v691, %v690
    %700 = vmatprep.subr.bf16.mxu0 0
    %701 = vmatpush1.bf16.msra.mxu0 0
    %702 = vmatprep.subr.bf16.mxu0 0
    %703 = vmatpush1.bf16.msra.mxu0 0
    %704 = vmatprep.subr.bf16.mxu0 0
    %705 = vmatpush1.bf16.msra.mxu0 0
    %706 = vmatprep.subr.bf16.mxu0 0
    %707 = vmatpush1.bf16.msra.mxu0 0
    %708 = vmatprep.subr.bf16.mxu0 0
    %709 = vmatpush1.bf16.msra.mxu0 %v695
    %710 = vmatprep.subr.bf16.mxu0 0
    %711 = vmatpush1.bf16.msra.mxu0 %v694
    %712 = vmatprep.subr.bf16.mxu0 0
    %713 = vmatpush1.bf16.msra.mxu0 %v693
    %714 = vmatprep.subr.bf16.mxu0 0
    %715 = vmatpush1.bf16.msra.mxu0 %v692
    %716 = vmatprep.subr.bf16.mxu0 0
    %717 = vmatpush2.bf16.msra.mxu0 0
    %718 = vmatprep.subr.bf16.mxu0 0
    %719 = vmatpush2.bf16.msra.mxu0 0
    %720 = vmatprep.subr.bf16.mxu0 0
    %721 = vmatpush2.bf16.msra.mxu0 0
    %722 = vmatprep.subr.bf16.mxu0 0
    %723 = vmatpush2.bf16.msra.mxu0 0
    %724 = vmatprep.subr.bf16.mxu0 0
    %725 = vmatpush2.bf16.msra.mxu0 0
    %726 = vmatprep.subr.bf16.mxu0 0
    %727 = vmatpush2.bf16.msra.mxu0 0
    %728 = vmatprep.subr.bf16.mxu0 0
    %729 = vmatpush2.bf16.msra.mxu0 0
    %730 = vmatprep.subr.bf16.mxu0 0
    %731 = vmatpush2.bf16.msra.mxu0 0
    %732 = vmatprep.mubr.bf16.mxu0 0
    %733 = vmatmul.mubr.bf16.gmra.mxu0 %v603
    %v734 = vpop.f32.mrf.mxu0
    %v735 = vadd.f32 0.0, %v734
    %v736 = vpop.f32.mrf.mxu0
    %v737 = vpop.f32.mrf.mxu0
    %v738 = vadd.f32 0.0, %v737
    %v739 = vpop.f32.mrf.mxu0
    %740 = vmatprep.mubr.bf16.mxu0 0
    %741 = vmatmul.mubr.bf16.gmra.mxu0 %v606
    %v742 = vpop.f32.mrf.mxu0
    %v743 = vadd.f32 0.0, %v742
    %v744 = vpop.f32.mrf.mxu0
    %v745 = vpop.f32.mrf.mxu0
    %v746 = vadd.f32 0.0, %v745
    %v747 = vpop.f32.mrf.mxu0
    %748 = vmatprep.mubr.bf16.mxu0 0
    %749 = vmatmul.mubr.bf16.gmra.mxu0 %v609
    %v750 = vpop.f32.mrf.mxu0
    %v751 = vadd.f32 0.0, %v750
    %v752 = vpop.f32.mrf.mxu0
    %v753 = vpop.f32.mrf.mxu0
    %v754 = vpop.f32.mrf.mxu0
    %755 = vdwg.mxu0
    %s756 = scalar_lea.vmem [#allocation7], 64
    %v757 = vld [vmem:[%s756] sm:$0xf]
    %v758 = vld [vmem:[%s756 + $0x4] sm:$0xf]
    %v759 = vld [vmem:[%s756 + $0x8] sm:$0xf]
    %v760 = vld [vmem:[%s756 + $0xc] sm:$0xf]
    %v761 = vld [vmem:[%s756 + $0x10] sm:$0xf]
    %v762 = vld [vmem:[%s756 + $0x14] sm:$0xf]
    %v763 = vld [vmem:[%s756 + $0x18] sm:$0xf]
    %v764 = vld [vmem:[%s756 + $0x1c] sm:$0xf]
    %v773 = vunpack.c.l.b16 %v757
    %v774 = vunpack.c.l.b16 %v758
    %v775 = vunpack.c.l.b16 %v759
    %v776 = vunpack.c.l.b16 %v760
    %v777 = vunpack.c.l.b16 %v761
    %v778 = vunpack.c.l.b16 %v762
    %v779 = vunpack.c.l.b16 %v763
    %v780 = vunpack.c.l.b16 %v764
    %v781 = vpack.c.b16 %v774, %v773
    %v782 = vpack.c.b16 %v776, %v775
    %v783 = vpack.c.b16 %v778, %v777
    %v784 = vpack.c.b16 %v780, %v779
    %789 = vmatprep.subr.bf16.mxu0 0
    %790 = vmatpush1.bf16.msra.mxu0 0
    %791 = vmatprep.subr.bf16.mxu0 0
    %792 = vmatpush1.bf16.msra.mxu0 0
    %793 = vmatprep.subr.bf16.mxu0 0
    %794 = vmatpush1.bf16.msra.mxu0 0
    %795 = vmatprep.subr.bf16.mxu0 0
    %796 = vmatpush1.bf16.msra.mxu0 0
    %797 = vmatprep.subr.bf16.mxu0 0
    %798 = vmatpush1.bf16.msra.mxu0 %v784
    %799 = vmatprep.subr.bf16.mxu0 0
    %800 = vmatpush1.bf16.msra.mxu0 %v783
    %801 = vmatprep.subr.bf16.mxu0 0
    %802 = vmatpush1.bf16.msra.mxu0 %v782
    %803 = vmatprep.subr.bf16.mxu0 0
    %804 = vmatpush1.bf16.msra.mxu0 %v781
    %805 = vmatprep.subr.bf16.mxu0 0
    %806 = vmatpush2.bf16.msra.mxu0 0
    %807 = vmatprep.subr.bf16.mxu0 0
    %808 = vmatpush2.bf16.msra.mxu0 0
    %809 = vmatprep.subr.bf16.mxu0 0
    %810 = vmatpush2.bf16.msra.mxu0 0
    %811 = vmatprep.subr.bf16.mxu0 0
    %812 = vmatpush2.bf16.msra.mxu0 0
    %813 = vmatprep.subr.bf16.mxu0 0
    %814 = vmatpush2.bf16.msra.mxu0 0
    %815 = vmatprep.subr.bf16.mxu0 0
    %816 = vmatpush2.bf16.msra.mxu0 0
    %817 = vmatprep.subr.bf16.mxu0 0
    %818 = vmatpush2.bf16.msra.mxu0 0
    %819 = vmatprep.subr.bf16.mxu0 0
    %820 = vmatpush2.bf16.msra.mxu0 0
    %821 = vmatprep.mubr.bf16.mxu0 0
    %822 = vmatmul.mubr.bf16.gmra.mxu0 %v603
    %v823 = vpop.f32.mrf.mxu0
    %v824 = vadd.f32 0.0, %v823
    %v825 = vpop.f32.mrf.mxu0
    %v826 = vpop.f32.mrf.mxu0
    %v827 = vadd.f32 0.0, %v826
    %v828 = vpop.f32.mrf.mxu0
    %829 = vmatprep.mubr.bf16.mxu0 0
    %830 = vmatmul.mubr.bf16.gmra.mxu0 %v606
    %v831 = vpop.f32.mrf.mxu0
    %v832 = vadd.f32 0.0, %v831
    %v833 = vpop.f32.mrf.mxu0
    %v834 = vpop.f32.mrf.mxu0
    %v835 = vadd.f32 0.0, %v834
    %v836 = vpop.f32.mrf.mxu0
    %837 = vmatprep.mubr.bf16.mxu0 0
    %838 = vmatmul.mubr.bf16.gmra.mxu0 %v609
    %v839 = vpop.f32.mrf.mxu0
    %v840 = vadd.f32 0.0, %v839
    %v841 = vpop.f32.mrf.mxu0
    %v842 = vpop.f32.mrf.mxu0
    %v843 = vpop.f32.mrf.mxu0
    %844 = vdwg.mxu0
    %vm850 = vcmask 1040384
    %v851 = vrot.slane %v646, 7
    %v852 = vrot.slane %v649, 7
    %v853 = vsel %vm850, %v851, %v852
    %v854 = vrot.slane %v654, 7
    %v855 = vsel %vm850, %v852, %v854
    %v856 = vrot.slane %v657, 7
    %v857 = vsel %vm850, %v854, %v856
    %v858 = vrot.slane %v662, 7
    %v859 = vsel %vm850, %v856, %v858
    %v865 = vsel %vm850, 0.0, %v851
    %v866 = vadd.f32 %v865, %v735
    %v867 = vadd.f32 %v853, %v738
    %v868 = vadd.f32 %v855, %v743
    %v869 = vadd.f32 %v857, %v746
    %v870 = vadd.f32 %v859, %v751
    %vm876 = vcmask 1046528
    %v877 = vrot.slane %v824, 1
    %v878 = vrot.slane %v827, 1
    %v879 = vsel %vm876, %v877, %v878
    %v880 = vrot.slane %v832, 1
    %v881 = vsel %vm876, %v878, %v880
    %v882 = vrot.slane %v835, 1
    %v883 = vsel %vm876, %v880, %v882
    %v884 = vrot.slane %v840, 1
    %v885 = vsel %vm876, %v882, %v884
    %vm891 = vcmask 1042432
    %v892 = vsel %vm891, %v884, 0.0
    %v893 = vadd.f32 %v866, %v879
    %v894 = vadd.f32 %v867, %v881
    %v895 = vadd.f32 %v868, %v883
    %v896 = vadd.f32 %v869, %v885
    %v897 = vadd.f32 %v870, %v892
    %v899 = vlaneseq
    %v900 = vshrl.u32 %v899, 7
    %v901 = vsub.s32 0, %v900
    %v902 = vrot.slane %v566, %v901
    %v904 = vadd.f32 %v893, %v902
    %v905 = vadd.f32 %v894, %v902
    %v906 = vadd.f32 %v895, %v902
    %v907 = vadd.f32 %v896, %v902
    %v908 = vadd.f32 %v897, %v902
    %v909 = vmul.f32 %v904, %v327
    %v910 = vmul.f32 %v905, %v328
    %v911 = vmul.f32 %v906, %v329
    %v912 = vmul.f32 %v907, %v330
    %v913 = vmul.f32 %v908, %v331
    %v914 = vxor.u32 %v909, 2147483648
    %v915 = vxor.u32 %v910, 2147483648
    %v916 = vxor.u32 %v911, 2147483648
    %v917 = vxor.u32 %v912, 2147483648
    %v918 = vxor.u32 %v913, 2147483648
    %v919 = vmul.f32 %v914, 1.442695
    %v920 = vpow.pop %v919
    %v921 = vmul.f32 %v915, 1.442695
    %v922 = vpow.pop %v921
    %v923 = vmul.f32 %v916, 1.442695
    %v924 = vpow.pop %v923
    %v925 = vmul.f32 %v917, 1.442695
    %v926 = vpow.pop %v925
    %v927 = vmul.f32 %v918, 1.442695
    %v928 = vpow.pop %v927
    %v929 = vadd.f32 %v920, 1.0
    %v930 = vadd.f32 %v922, 1.0
    %v931 = vadd.f32 %v924, 1.0
    %v932 = vadd.f32 %v926, 1.0
    %v933 = vadd.f32 %v928, 1.0
    %v934 = vrcp.pop %v929
    %v935 = vmul.f32 1.0, %v934
    %v936 = vrcp.pop %v930
    %v937 = vmul.f32 1.0, %v936
    %v938 = vrcp.pop %v931
    %v939 = vmul.f32 1.0, %v938
    %v940 = vrcp.pop %v932
    %v941 = vmul.f32 1.0, %v940
    %v942 = vrcp.pop %v933
    %v943 = vmul.f32 1.0, %v942
    %v944 = vmul.f32 %v909, %v935
    %v945 = vmul.f32 %v910, %v937
    %v946 = vmul.f32 %v911, %v939
    %v947 = vmul.f32 %v912, %v941
    %v948 = vmul.f32 %v913, %v943
    %v949 = vld [vmem:[#allocation10] sm:$0x1]
    %v950 = vpack.c.bf16 %v945, %v944
    %v951 = vpack.c.bf16 %v947, %v946
    %v952 = vpack.c.bf16 %v948, %v948
    %v953 = vld [vmem:[%s6] sm:$0xf]
    %v954 = vld [vmem:[%s6 + $0x4] sm:$0xf]
    %v955 = vld [vmem:[%s6 + $0x8] sm:$0xf]
    %v956 = vld [vmem:[%s6 + $0xc] sm:$0xf]
    %v957 = vld [vmem:[%s6 + $0x10] sm:$0xf]
    %v958 = vld [vmem:[%s6 + $0x14] sm:$0xf]
    %v959 = vld [vmem:[%s6 + $0x18] sm:$0xf]
    %v960 = vld [vmem:[%s6 + $0x1c] sm:$0xf]
    %v961 = vld [vmem:[%s6 + $0x20] sm:$0xf]
    %v962 = vld [vmem:[%s6 + $0x24] sm:$0xf]
    %v963 = vld [vmem:[%s6 + $0x28] sm:$0xf]
    %v964 = vld [vmem:[%s6 + $0x2c] sm:$0xf]
    %v965 = vld [vmem:[%s6 + $0x30] sm:$0xf]
    %v966 = vld [vmem:[%s6 + $0x34] sm:$0xf]
    %v967 = vld [vmem:[%s6 + $0x38] sm:$0xf]
    %v968 = vld [vmem:[%s6 + $0x3c] sm:$0xf]
    %v985 = vunpack.c.l.b16 %v953
    %v986 = vunpack.c.l.b16 %v954
    %v987 = vunpack.c.l.b16 %v955
    %v988 = vunpack.c.l.b16 %v956
    %v989 = vunpack.c.l.b16 %v957
    %v990 = vunpack.c.l.b16 %v958
    %v991 = vunpack.c.l.b16 %v959
    %v992 = vunpack.c.l.b16 %v960
    %v993 = vunpack.c.l.b16 %v961
    %v994 = vunpack.c.l.b16 %v962
    %v995 = vunpack.c.l.b16 %v963
    %v996 = vunpack.c.l.b16 %v964
    %v997 = vunpack.c.l.b16 %v965
    %v998 = vunpack.c.l.b16 %v966
    %v999 = vunpack.c.l.b16 %v967
    %v1000 = vunpack.c.l.b16 %v968
    %v1001 = vpack.c.b16 %v986, %v985
    %v1002 = vpack.c.b16 %v988, %v987
    %v1003 = vpack.c.b16 %v990, %v989
    %v1004 = vpack.c.b16 %v992, %v991
    %v1005 = vpack.c.b16 %v994, %v993
    %v1006 = vpack.c.b16 %v996, %v995
    %v1007 = vpack.c.b16 %v998, %v997
    %v1008 = vpack.c.b16 %v1000, %v999
    %1017 = vmatprep.subr.bf16.mxu0 0
    %1018 = vmatpush1.bf16.msra.mxu0 %v1008
    %1019 = vmatprep.subr.bf16.mxu0 0
    %1020 = vmatpush1.bf16.msra.mxu0 %v1007
    %1021 = vmatprep.subr.bf16.mxu0 0
    %1022 = vmatpush1.bf16.msra.mxu0 %v1006
    %1023 = vmatprep.subr.bf16.mxu0 0
    %1024 = vmatpush1.bf16.msra.mxu0 %v1005
    %1025 = vmatprep.subr.bf16.mxu0 0
    %1026 = vmatpush1.bf16.msra.mxu0 %v1004
    %1027 = vmatprep.subr.bf16.mxu0 0
    %1028 = vmatpush1.bf16.msra.mxu0 %v1003
    %1029 = vmatprep.subr.bf16.mxu0 0
    %1030 = vmatpush1.bf16.msra.mxu0 %v1002
    %1031 = vmatprep.subr.bf16.mxu0 0
    %1032 = vmatpush1.bf16.msra.mxu0 %v1001
    %1033 = vmatprep.subr.bf16.mxu0 0
    %1034 = vmatpush2.bf16.msra.mxu0 0
    %1035 = vmatprep.subr.bf16.mxu0 0
    %1036 = vmatpush2.bf16.msra.mxu0 0
    %1037 = vmatprep.subr.bf16.mxu0 0
    %1038 = vmatpush2.bf16.msra.mxu0 0
    %1039 = vmatprep.subr.bf16.mxu0 0
    %1040 = vmatpush2.bf16.msra.mxu0 0
    %1041 = vmatprep.subr.bf16.mxu0 0
    %1042 = vmatpush2.bf16.msra.mxu0 0
    %1043 = vmatprep.subr.bf16.mxu0 0
    %1044 = vmatpush2.bf16.msra.mxu0 0
    %1045 = vmatprep.subr.bf16.mxu0 0
    %1046 = vmatpush2.bf16.msra.mxu0 0
    %1047 = vmatprep.subr.bf16.mxu0 0
    %1048 = vmatpush2.bf16.msra.mxu0 0
    %1049 = vmatprep.mubr.bf16.mxu0 0
    %1050 = vmatmul.mubr.bf16.gmra.mxu0 %v950
    %v1051 = vpop.f32.mrf.mxu0
    %v1052 = vadd.f32 0.0, %v1051
    %v1053 = vpop.f32.mrf.mxu0
    %v1054 = vpop.f32.mrf.mxu0
    %v1055 = vadd.f32 0.0, %v1054
    %v1056 = vpop.f32.mrf.mxu0
    %1057 = vmatprep.mubr.bf16.mxu0 0
    %1058 = vmatmul.mubr.bf16.gmra.mxu0 %v951
    %v1059 = vpop.f32.mrf.mxu0
    %v1060 = vadd.f32 0.0, %v1059
    %v1061 = vpop.f32.mrf.mxu0
    %v1062 = vpop.f32.mrf.mxu0
    %v1063 = vadd.f32 0.0, %v1062
    %v1064 = vpop.f32.mrf.mxu0
    %1065 = vmatprep.mubr.bf16.mxu0 0
    %1066 = vmatmul.mubr.bf16.gmra.mxu0 %v952
    %v1067 = vpop.f32.mrf.mxu0
    %v1068 = vadd.f32 0.0, %v1067
    %v1069 = vpop.f32.mrf.mxu0
    %v1070 = vpop.f32.mrf.mxu0
    %v1071 = vpop.f32.mrf.mxu0
    %1072 = vdwg.mxu0
    %s1073 = scalar_lea.vmem %s6, 64
    %v1074 = vld [vmem:[%s1073] sm:$0xf]
    %v1075 = vld [vmem:[%s1073 + $0x4] sm:$0xf]
    %v1076 = vld [vmem:[%s1073 + $0x8] sm:$0xf]
    %v1077 = vld [vmem:[%s1073 + $0xc] sm:$0xf]
    %v1078 = vld [vmem:[%s1073 + $0x10] sm:$0xf]
    %v1079 = vld [vmem:[%s1073 + $0x14] sm:$0xf]
    %v1080 = vld [vmem:[%s1073 + $0x18] sm:$0xf]
    %v1081 = vld [vmem:[%s1073 + $0x1c] sm:$0xf]
    %v1082 = vld [vmem:[%s1073 + $0x20] sm:$0xf]
    %v1083 = vld [vmem:[%s1073 + $0x24] sm:$0xf]
    %v1084 = vld [vmem:[%s1073 + $0x28] sm:$0xf]
    %v1085 = vld [vmem:[%s1073 + $0x2c] sm:$0xf]
    %v1086 = vld [vmem:[%s1073 + $0x30] sm:$0xf]
    %v1087 = vld [vmem:[%s1073 + $0x34] sm:$0xf]
    %v1088 = vld [vmem:[%s1073 + $0x38] sm:$0xf]
    %v1089 = vld [vmem:[%s1073 + $0x3c] sm:$0xf]
    %v1106 = vunpack.c.l.b16 %v1074
    %v1107 = vunpack.c.l.b16 %v1075
    %v1108 = vunpack.c.l.b16 %v1076
    %v1109 = vunpack.c.l.b16 %v1077
    %v1110 = vunpack.c.l.b16 %v1078
    %v1111 = vunpack.c.l.b16 %v1079
    %v1112 = vunpack.c.l.b16 %v1080
    %v1113 = vunpack.c.l.b16 %v1081
    %v1114 = vunpack.c.l.b16 %v1082
    %v1115 = vunpack.c.l.b16 %v1083
    %v1116 = vunpack.c.l.b16 %v1084
    %v1117 = vunpack.c.l.b16 %v1085
    %v1118 = vunpack.c.l.b16 %v1086
    %v1119 = vunpack.c.l.b16 %v1087
    %v1120 = vunpack.c.l.b16 %v1088
    %v1121 = vunpack.c.l.b16 %v1089
    %v1122 = vpack.c.b16 %v1107, %v1106
    %v1123 = vpack.c.b16 %v1109, %v1108
    %v1124 = vpack.c.b16 %v1111, %v1110
    %v1125 = vpack.c.b16 %v1113, %v1112
    %v1126 = vpack.c.b16 %v1115, %v1114
    %v1127 = vpack.c.b16 %v1117, %v1116
    %v1128 = vpack.c.b16 %v1119, %v1118
    %v1129 = vpack.c.b16 %v1121, %v1120
    %1138 = vmatprep.subr.bf16.mxu0 0
    %1139 = vmatpush1.bf16.msra.mxu0 %v1129
    %1140 = vmatprep.subr.bf16.mxu0 0
    %1141 = vmatpush1.bf16.msra.mxu0 %v1128
    %1142 = vmatprep.subr.bf16.mxu0 0
    %1143 = vmatpush1.bf16.msra.mxu0 %v1127
    %1144 = vmatprep.subr.bf16.mxu0 0
    %1145 = vmatpush1.bf16.msra.mxu0 %v1126
    %1146 = vmatprep.subr.bf16.mxu0 0
    %1147 = vmatpush1.bf16.msra.mxu0 %v1125
    %1148 = vmatprep.subr.bf16.mxu0 0
    %1149 = vmatpush1.bf16.msra.mxu0 %v1124
    %1150 = vmatprep.subr.bf16.mxu0 0
    %1151 = vmatpush1.bf16.msra.mxu0 %v1123
    %1152 = vmatprep.subr.bf16.mxu0 0
    %1153 = vmatpush1.bf16.msra.mxu0 %v1122
    %1154 = vmatprep.subr.bf16.mxu0 0
    %1155 = vmatpush2.bf16.msra.mxu0 0
    %1156 = vmatprep.subr.bf16.mxu0 0
    %1157 = vmatpush2.bf16.msra.mxu0 0
    %1158 = vmatprep.subr.bf16.mxu0 0
    %1159 = vmatpush2.bf16.msra.mxu0 0
    %1160 = vmatprep.subr.bf16.mxu0 0
    %1161 = vmatpush2.bf16.msra.mxu0 0
    %1162 = vmatprep.subr.bf16.mxu0 0
    %1163 = vmatpush2.bf16.msra.mxu0 0
    %1164 = vmatprep.subr.bf16.mxu0 0
    %1165 = vmatpush2.bf16.msra.mxu0 0
    %1166 = vmatprep.subr.bf16.mxu0 0
    %1167 = vmatpush2.bf16.msra.mxu0 0
    %1168 = vmatprep.subr.bf16.mxu0 0
    %1169 = vmatpush2.bf16.msra.mxu0 0
    %1170 = vmatprep.mubr.bf16.mxu0 0
    %1171 = vmatmul.mubr.bf16.gmra.mxu0 %v950
    %v1172 = vpop.f32.mrf.mxu0
    %v1173 = vadd.f32 0.0, %v1172
    %v1174 = vpop.f32.mrf.mxu0
    %v1175 = vpop.f32.mrf.mxu0
    %v1176 = vadd.f32 0.0, %v1175
    %v1177 = vpop.f32.mrf.mxu0
    %1178 = vmatprep.mubr.bf16.mxu0 0
    %1179 = vmatmul.mubr.bf16.gmra.mxu0 %v951
    %v1180 = vpop.f32.mrf.mxu0
    %v1181 = vadd.f32 0.0, %v1180
    %v1182 = vpop.f32.mrf.mxu0
    %v1183 = vpop.f32.mrf.mxu0
    %v1184 = vadd.f32 0.0, %v1183
    %v1185 = vpop.f32.mrf.mxu0
    %1186 = vmatprep.mubr.bf16.mxu0 0
    %1187 = vmatmul.mubr.bf16.gmra.mxu0 %v952
    %v1188 = vpop.f32.mrf.mxu0
    %v1189 = vadd.f32 0.0, %v1188
    %v1190 = vpop.f32.mrf.mxu0
    %v1191 = vpop.f32.mrf.mxu0
    %v1192 = vpop.f32.mrf.mxu0
    %1193 = vdwg.mxu0
    %s1194 = scalar_lea.vmem %s6, 128
    %v1195 = vld [vmem:[%s1194] sm:$0xf]
    %v1196 = vld [vmem:[%s1194 + $0x4] sm:$0xf]
    %v1197 = vld [vmem:[%s1194 + $0x8] sm:$0xf]
    %v1198 = vld [vmem:[%s1194 + $0xc] sm:$0xf]
    %v1199 = vld [vmem:[%s1194 + $0x10] sm:$0xf]
    %v1200 = vld [vmem:[%s1194 + $0x14] sm:$0xf]
    %v1201 = vld [vmem:[%s1194 + $0x18] sm:$0xf]
    %v1202 = vld [vmem:[%s1194 + $0x1c] sm:$0xf]
    %v1203 = vld [vmem:[%s1194 + $0x20] sm:$0xf]
    %v1204 = vld [vmem:[%s1194 + $0x24] sm:$0xf]
    %v1205 = vld [vmem:[%s1194 + $0x28] sm:$0xf]
    %v1206 = vld [vmem:[%s1194 + $0x2c] sm:$0xf]
    %v1207 = vld [vmem:[%s1194 + $0x30] sm:$0xf]
    %v1208 = vld [vmem:[%s1194 + $0x34] sm:$0xf]
    %v1209 = vld [vmem:[%s1194 + $0x38] sm:$0xf]
    %v1210 = vld [vmem:[%s1194 + $0x3c] sm:$0xf]
    %v1227 = vunpack.c.l.b16 %v1195
    %v1228 = vunpack.c.l.b16 %v1196
    %v1229 = vunpack.c.l.b16 %v1197
    %v1230 = vunpack.c.l.b16 %v1198
    %v1231 = vunpack.c.l.b16 %v1199
    %v1232 = vunpack.c.l.b16 %v1200
    %v1233 = vunpack.c.l.b16 %v1201
    %v1234 = vunpack.c.l.b16 %v1202
    %v1235 = vunpack.c.l.b16 %v1203
    %v1236 = vunpack.c.l.b16 %v1204
    %v1237 = vunpack.c.l.b16 %v1205
    %v1238 = vunpack.c.l.b16 %v1206
    %v1239 = vunpack.c.l.b16 %v1207
    %v1240 = vunpack.c.l.b16 %v1208
    %v1241 = vunpack.c.l.b16 %v1209
    %v1242 = vunpack.c.l.b16 %v1210
    %v1243 = vpack.c.b16 %v1228, %v1227
    %v1244 = vpack.c.b16 %v1230, %v1229
    %v1245 = vpack.c.b16 %v1232, %v1231
    %v1246 = vpack.c.b16 %v1234, %v1233
    %v1247 = vpack.c.b16 %v1236, %v1235
    %v1248 = vpack.c.b16 %v1238, %v1237
    %v1249 = vpack.c.b16 %v1240, %v1239
    %v1250 = vpack.c.b16 %v1242, %v1241
    %1259 = vmatprep.subr.bf16.mxu0 0
    %1260 = vmatpush1.bf16.msra.mxu0 %v1250
    %1261 = vmatprep.subr.bf16.mxu0 0
    %1262 = vmatpush1.bf16.msra.mxu0 %v1249
    %1263 = vmatprep.subr.bf16.mxu0 0
    %1264 = vmatpush1.bf16.msra.mxu0 %v1248
    %1265 = vmatprep.subr.bf16.mxu0 0
    %1266 = vmatpush1.bf16.msra.mxu0 %v1247
    %1267 = vmatprep.subr.bf16.mxu0 0
    %1268 = vmatpush1.bf16.msra.mxu0 %v1246
    %1269 = vmatprep.subr.bf16.mxu0 0
    %1270 = vmatpush1.bf16.msra.mxu0 %v1245
    %1271 = vmatprep.subr.bf16.mxu0 0
    %1272 = vmatpush1.bf16.msra.mxu0 %v1244
    %1273 = vmatprep.subr.bf16.mxu0 0
    %1274 = vmatpush1.bf16.msra.mxu0 %v1243
    %1275 = vmatprep.subr.bf16.mxu0 0
    %1276 = vmatpush2.bf16.msra.mxu0 0
    %1277 = vmatprep.subr.bf16.mxu0 0
    %1278 = vmatpush2.bf16.msra.mxu0 0
    %1279 = vmatprep.subr.bf16.mxu0 0
    %1280 = vmatpush2.bf16.msra.mxu0 0
    %1281 = vmatprep.subr.bf16.mxu0 0
    %1282 = vmatpush2.bf16.msra.mxu0 0
    %1283 = vmatprep.subr.bf16.mxu0 0
    %1284 = vmatpush2.bf16.msra.mxu0 0
    %1285 = vmatprep.subr.bf16.mxu0 0
    %1286 = vmatpush2.bf16.msra.mxu0 0
    %1287 = vmatprep.subr.bf16.mxu0 0
    %1288 = vmatpush2.bf16.msra.mxu0 0
    %1289 = vmatprep.subr.bf16.mxu0 0
    %1290 = vmatpush2.bf16.msra.mxu0 0
    %1291 = vmatprep.mubr.bf16.mxu0 0
    %1292 = vmatmul.mubr.bf16.gmra.mxu0 %v950
    %v1293 = vpop.f32.mrf.mxu0
    %v1294 = vadd.f32 0.0, %v1293
    %v1295 = vpop.f32.mrf.mxu0
    %v1296 = vpop.f32.mrf.mxu0
    %v1297 = vadd.f32 0.0, %v1296
    %v1298 = vpop.f32.mrf.mxu0
    %1299 = vmatprep.mubr.bf16.mxu0 0
    %1300 = vmatmul.mubr.bf16.gmra.mxu0 %v951
    %v1301 = vpop.f32.mrf.mxu0
    %v1302 = vadd.f32 0.0, %v1301
    %v1303 = vpop.f32.mrf.mxu0
    %v1304 = vpop.f32.mrf.mxu0
    %v1305 = vadd.f32 0.0, %v1304
    %v1306 = vpop.f32.mrf.mxu0
    %1307 = vmatprep.mubr.bf16.mxu0 0
    %1308 = vmatmul.mubr.bf16.gmra.mxu0 %v952
    %v1309 = vpop.f32.mrf.mxu0
    %v1310 = vadd.f32 0.0, %v1309
    %v1311 = vpop.f32.mrf.mxu0
    %v1312 = vpop.f32.mrf.mxu0
    %v1313 = vpop.f32.mrf.mxu0
    %1314 = vdwg.mxu0
    %v1320 = vrot.slane %v1052, 7
    %v1321 = vrot.slane %v1055, 7
    %v1322 = vsel %vm850, %v1320, %v1321
    %v1323 = vrot.slane %v1060, 7
    %v1324 = vsel %vm850, %v1321, %v1323
    %v1325 = vrot.slane %v1063, 7
    %v1326 = vsel %vm850, %v1323, %v1325
    %v1327 = vrot.slane %v1068, 7
    %v1328 = vsel %vm850, %v1325, %v1327
    %v1334 = vsel %vm850, 0.0, %v1320
    %v1335 = vadd.f32 %v1334, %v1173
    %v1336 = vadd.f32 %v1322, %v1176
    %v1337 = vadd.f32 %v1324, %v1181
    %v1338 = vadd.f32 %v1326, %v1184
    %v1339 = vadd.f32 %v1328, %v1189
    %v1345 = vrot.slane %v1294, 1
    %v1346 = vrot.slane %v1297, 1
    %v1347 = vsel %vm876, %v1345, %v1346
    %v1348 = vrot.slane %v1302, 1
    %v1349 = vsel %vm876, %v1346, %v1348
    %v1350 = vrot.slane %v1305, 1
    %v1351 = vsel %vm876, %v1348, %v1350
    %v1352 = vrot.slane %v1310, 1
    %v1353 = vsel %vm876, %v1350, %v1352
    %v1359 = vsel %vm891, %v1352, 0.0
    %v1360 = vadd.f32 %v1335, %v1347
    %v1361 = vadd.f32 %v1336, %v1349
    %v1362 = vadd.f32 %v1337, %v1351
    %v1363 = vadd.f32 %v1338, %v1353
    %v1364 = vadd.f32 %v1339, %v1359
    %v1366 = vlaneseq
    %v1367 = vshrl.u32 %v1366, 7
    %v1368 = vsub.s32 0, %v1367
    %v1369 = vrot.slane %v949, %v1368
    %v1371 = vadd.f32 %v1360, %v1369
    %v1372 = vadd.f32 %v1361, %v1369
    %v1373 = vadd.f32 %v1362, %v1369
    %v1374 = vadd.f32 %v1363, %v1369
    %v1375 = vadd.f32 %v1364, %v1369
    %v1376 = vmul.f32 %v1371, %v327
    %v1377 = vmul.f32 %v1372, %v328
    %v1378 = vmul.f32 %v1373, %v329
    %v1379 = vmul.f32 %v1374, %v330
    %v1380 = vmul.f32 %v1375, %v331
    %v1381 = vpack.c.bf16 %v333, %v332
    %v1382 = vpack.c.bf16 %v335, %v334
    %v1383 = vpack.c.bf16 %v336, %v336
    %v1384 = vld [vmem:[#allocation11] sm:$0xf]
    %v1385 = vld [vmem:[#allocation11 + $0x4] sm:$0xf]
    %v1386 = vld [vmem:[#allocation11 + $0x8] sm:$0xf]
    %v1387 = vld [vmem:[#allocation11 + $0xc] sm:$0xf]
    %v1388 = vld [vmem:[#allocation11 + $0x10] sm:$0xf]
    %v1389 = vld [vmem:[#allocation11 + $0x14] sm:$0xf]
    %v1390 = vld [vmem:[#allocation11 + $0x18] sm:$0xf]
    %v1391 = vld [vmem:[#allocation11 + $0x1c] sm:$0xf]
    %v1392 = vld [vmem:[#allocation13] sm:$0x1]
    %v1394 = vlaneseq
    %v1395 = vshrl.u32 %v1394, 7
    %v1396 = vsub.s32 0, %v1395
    %v1397 = vrot.slane %v1392, %v1396
    %v1407 = vunpack.c.l.b16 %v1384
    %v1408 = vunpack.c.l.b16 %v1385
    %v1409 = vunpack.c.l.b16 %v1386
    %v1410 = vunpack.c.l.b16 %v1387
    %v1411 = vunpack.c.l.b16 %v1388
    %v1412 = vunpack.c.l.b16 %v1389
    %v1413 = vunpack.c.l.b16 %v1390
    %v1414 = vunpack.c.l.b16 %v1391
    %v1415 = vpack.c.b16 %v1408, %v1407
    %v1416 = vpack.c.b16 %v1410, %v1409
    %v1417 = vpack.c.b16 %v1412, %v1411
    %v1418 = vpack.c.b16 %v1414, %v1413
    %v1424 = vsel %vm337, %v1381, 0
    %v1427 = vsel %vm337, %v1382, 0
    %v1430 = vsel %vm337, %v1383, 0
    %1432 = vmatprep.subr.bf16.mxu0 0
    %1433 = vmatpush1.bf16.msra.mxu0 0
    %1434 = vmatprep.subr.bf16.mxu0 0
    %1435 = vmatpush1.bf16.msra.mxu0 0
    %1436 = vmatprep.subr.bf16.mxu0 0
    %1437 = vmatpush1.bf16.msra.mxu0 0
    %1438 = vmatprep.subr.bf16.mxu0 0
    %1439 = vmatpush1.bf16.msra.mxu0 0
    %1440 = vmatprep.subr.bf16.mxu0 0
    %1441 = vmatpush1.bf16.msra.mxu0 %v1418
    %1442 = vmatprep.subr.bf16.mxu0 0
    %1443 = vmatpush1.bf16.msra.mxu0 %v1417
    %1444 = vmatprep.subr.bf16.mxu0 0
    %1445 = vmatpush1.bf16.msra.mxu0 %v1416
    %1446 = vmatprep.subr.bf16.mxu0 0
    %1447 = vmatpush1.bf16.msra.mxu0 %v1415
    %1448 = vmatprep.subr.bf16.mxu0 0
    %1449 = vmatpush2.bf16.msra.mxu0 0
    %1450 = vmatprep.subr.bf16.mxu0 0
    %1451 = vmatpush2.bf16.msra.mxu0 0
    %1452 = vmatprep.subr.bf16.mxu0 0
    %1453 = vmatpush2.bf16.msra.mxu0 0
    %1454 = vmatprep.subr.bf16.mxu0 0
    %1455 = vmatpush2.bf16.msra.mxu0 0
    %1456 = vmatprep.subr.bf16.mxu0 0
    %1457 = vmatpush2.bf16.msra.mxu0 0
    %1458 = vmatprep.subr.bf16.mxu0 0
    %1459 = vmatpush2.bf16.msra.mxu0 0
    %1460 = vmatprep.subr.bf16.mxu0 0
    %1461 = vmatpush2.bf16.msra.mxu0 0
    %1462 = vmatprep.subr.bf16.mxu0 0
    %1463 = vmatpush2.bf16.msra.mxu0 0
    %1464 = vmatprep.mubr.bf16.mxu0 0
    %1465 = vmatmul.mubr.bf16.gmra.mxu0 %v1424
    %v1466 = vpop.f32.mrf.mxu0
    %v1467 = vadd.f32 %v1397, %v1466
    %v1468 = vpop.f32.mrf.mxu0
    %v1469 = vpop.f32.mrf.mxu0
    %v1470 = vadd.f32 %v1397, %v1469
    %v1471 = vpop.f32.mrf.mxu0
    %1472 = vmatprep.mubr.bf16.mxu0 0
    %1473 = vmatmul.mubr.bf16.gmra.mxu0 %v1427
    %v1474 = vpop.f32.mrf.mxu0
    %v1475 = vadd.f32 %v1397, %v1474
    %v1476 = vpop.f32.mrf.mxu0
    %v1477 = vpop.f32.mrf.mxu0
    %v1478 = vadd.f32 %v1397, %v1477
    %v1479 = vpop.f32.mrf.mxu0
    %1480 = vmatprep.mubr.bf16.mxu0 0
    %1481 = vmatmul.mubr.bf16.gmra.mxu0 %v1430
    %v1482 = vpop.f32.mrf.mxu0
    %v1483 = vadd.f32 %v1397, %v1482
    %v1484 = vpop.f32.mrf.mxu0
    %v1485 = vpop.f32.mrf.mxu0
    %v1486 = vpop.f32.mrf.mxu0
    %1487 = vdwg.mxu0
    %v1488 = vmul.f32 %v1467, %v327
    %v1489 = vmul.f32 %v1470, %v328
    %v1490 = vmul.f32 %v1475, %v329
    %v1491 = vmul.f32 %v1478, %v330
    %v1492 = vmul.f32 %v1483, %v331
    %v1493 = vadd.f32 %v1376, %v1488
    %v1494 = vadd.f32 %v1377, %v1489
    %v1495 = vadd.f32 %v1378, %v1490
    %v1496 = vadd.f32 %v1379, %v1491
    %v1497 = vadd.f32 %v1380, %v1492
    %1498 = vst [vmem:[#allocation22 - $0x1] sm:$0xfe] %v1493
    %1499 = vst [vmem:[#allocation22 + $0x7] sm:$0xff] %v1494
    %1500 = vst [vmem:[#allocation22 + $0xf] sm:$0x1] %v1495
    %s1501 = scalar_lea.vmem [#allocation22], 16
    %1502 = vst [vmem:[%s1501 - $0x3] sm:$0xf8] %v1495
    %1503 = vst [vmem:[%s1501 + $0x5] sm:$0xff] %v1496
    %1504 = vst [vmem:[%s1501 + $0xd] sm:$0x7] %v1497
    %v1505 = vadd.f32 %v1493, %v1494
    %v1506 = vadd.f32 %v1505, %v1495
    %v1507 = vadd.f32 %v1506, %v1496
    %vm1508 = vcmask 1043456
    %v1509 = vsel %vm1508, %v1497, 0.0
    %v1510 = vadd.f32 %v1507, %v1509
    %v1511 = vrot.slane %v1510, 4
    %v1512 = vadd.f32 %v1510, %v1511
    %v1513 = vrot.slane %v1512, 2
    %v1514 = vadd.f32 %v1512, %v1513
    %v1515 = vrot.slane %v1514, 1
    %v1516 = vadd.f32 %v1514, %v1515
    %v1517 = vmul.f32 %v1493, %v1493
    %v1518 = vmul.f32 %v1494, %v1494
    %v1519 = vmul.f32 %v1495, %v1495
    %v1520 = vmul.f32 %v1496, %v1496
    %v1521 = vmul.f32 %v1497, %v1497
    %v1522 = vadd.f32 %v1517, %v1518
    %v1523 = vadd.f32 %v1522, %v1519
    %v1524 = vadd.f32 %v1523, %v1520
    %v1525 = vsel %vm1508, %v1521, 0.0
    %v1526 = vadd.f32 %v1524, %v1525
    %v1527 = vrot.slane %v1526, 4
    %v1528 = vadd.f32 %v1526, %v1527
    %v1529 = vrot.slane %v1528, 2
    %v1530 = vadd.f32 %v1528, %v1529
    %v1531 = vrot.slane %v1530, 1
    %v1532 = vadd.f32 %v1530, %v1531
    %v1533 = vld [vmem:[#allocation17] sm:$0xff]
    %v1534 = vld [vmem:[#allocation17 + $0x8] sm:$0xff]
    %v1535 = vld [vmem:[#allocation17 + $0x10] sm:$0xff]
    %v1536 = vld [vmem:[#allocation17 + $0x18] sm:$0xff]
    %v1537 = vld [vmem:[#allocation17 + $0x20] sm:$0xff]
    %v1538 = vld [vmem:[#allocation17 + $0x28] sm:$0xff]
    %v1539 = vld [vmem:[#allocation17 + $0x30] sm:$0xff]
    %v1540 = vld [vmem:[#allocation17 + $0x38] sm:$0xff]
    %v1541 = vld [vmem:[#allocation17 + $0x40] sm:$0xff]
    %v1542 = vld [vmem:[#allocation17 + $0x48] sm:$0xff]
    %v1543 = vld [vmem:[#allocation17 + $0x50] sm:$0xff]
    %v1544 = vld [vmem:[#allocation17 + $0x58] sm:$0xff]
    %v1545 = vld [vmem:[#allocation17 + $0x60] sm:$0xff]
    %v1546 = vld [vmem:[#allocation17 + $0x68] sm:$0xff]
    %v1547 = vld [vmem:[#allocation17 + $0x70] sm:$0xff]
    %v1548 = vld [vmem:[#allocation17 + $0x78] sm:$0xff]
    %1549 = vmatprep.subr.mxu0 0.0
    %1550 = vmatpush1.msra.mxu0 %v1548
    %1551 = vmatprep.subr.mxu0 0.0
    %1552 = vmatpush1.msra.mxu0 %v1547
    %1553 = vmatprep.subr.mxu0 0.0
    %1554 = vmatpush1.msra.mxu0 %v1546
    %1555 = vmatprep.subr.mxu0 0.0
    %1556 = vmatpush1.msra.mxu0 %v1545
    %1557 = vmatprep.subr.mxu0 0.0
    %1558 = vmatpush1.msra.mxu0 %v1544
    %1559 = vmatprep.subr.mxu0 0.0
    %1560 = vmatpush1.msra.mxu0 %v1543
    %1561 = vmatprep.subr.mxu0 0.0
    %1562 = vmatpush1.msra.mxu0 %v1542
    %1563 = vmatprep.subr.mxu0 0.0
    %1564 = vmatpush1.msra.mxu0 %v1541
    %1565 = vmatprep.subr.mxu0 0.0
    %1566 = vmatpush1.msra.mxu0 %v1540
    %1567 = vmatprep.subr.mxu0 0.0
    %1568 = vmatpush1.msra.mxu0 %v1539
    %1569 = vmatprep.subr.mxu0 0.0
    %1570 = vmatpush1.msra.mxu0 %v1538
    %1571 = vmatprep.subr.mxu0 0.0
    %1572 = vmatpush1.msra.mxu0 %v1537
    %1573 = vmatprep.subr.mxu0 0.0
    %1574 = vmatpush1.msra.mxu0 %v1536
    %1575 = vmatprep.subr.mxu0 0.0
    %1576 = vmatpush1.msra.mxu0 %v1535
    %1577 = vmatprep.subr.mxu0 0.0
    %1578 = vmatpush1.msra.mxu0 %v1534
    %1579 = vmatprep.subr.mxu0 0.0
    %1580 = vmatpush1.msra.mxu0 %v1533
    %1581 = vmatprep.subr.mxu0 0.0
    %1582 = vmatpush2.msra.mxu0 0.0
    %1583 = vmatprep.subr.mxu0 0.0
    %1584 = vmatpush2.msra.mxu0 0.0
    %1585 = vmatprep.subr.mxu0 0.0
    %1586 = vmatpush2.msra.mxu0 0.0
    %1587 = vmatprep.subr.mxu0 0.0
    %1588 = vmatpush2.msra.mxu0 0.0
    %1589 = vmatprep.subr.mxu0 0.0
    %1590 = vmatpush2.msra.mxu0 0.0
    %1591 = vmatprep.subr.mxu0 0.0
    %1592 = vmatpush2.msra.mxu0 0.0
    %1593 = vmatprep.subr.mxu0 0.0
    %1594 = vmatpush2.msra.mxu0 0.0
    %1595 = vmatprep.subr.mxu0 0.0
    %1596 = vmatpush2.msra.mxu0 0.0
    %1597 = vmatprep.subr.mxu0 0.0
    %1598 = vmatpush2.msra.mxu0 0.0
    %1599 = vmatprep.subr.mxu0 0.0
    %1600 = vmatpush2.msra.mxu0 0.0
    %1601 = vmatprep.subr.mxu0 0.0
    %1602 = vmatpush2.msra.mxu0 0.0
    %1603 = vmatprep.subr.mxu0 0.0
    %1604 = vmatpush2.msra.mxu0 0.0
    %1605 = vmatprep.subr.mxu0 0.0
    %1606 = vmatpush2.msra.mxu0 0.0
    %1607 = vmatprep.subr.mxu0 0.0
    %1608 = vmatpush2.msra.mxu0 0.0
    %1609 = vmatprep.subr.mxu0 0.0
    %1610 = vmatpush2.msra.mxu0 0.0
    %1611 = vmatprep.subr.mxu0 0.0
    %1612 = vmatpush2.msra.mxu0 0.0
    %1613 = vmatprep.mubr.f32.mxu0 0.0
    %1614 = vmatmul.mubr.f32.gmra.mxu0 %v1516
    %v1615 = vpop.f32.mrf.mxu0
    %v1616 = vadd.f32 0.0, %v1615
    %v1617 = vpop.f32.mrf.mxu0
    %1618 = vdwg.mxu0
    %1619 = vmatprep.subr.mxu0 0.0
    %1620 = vmatpush1.msra.mxu0 %v1548
    %1621 = vmatprep.subr.mxu0 0.0
    %1622 = vmatpush1.msra.mxu0 %v1547
    %1623 = vmatprep.subr.mxu0 0.0
    %1624 = vmatpush1.msra.mxu0 %v1546
    %1625 = vmatprep.subr.mxu0 0.0
    %1626 = vmatpush1.msra.mxu0 %v1545
    %1627 = vmatprep.subr.mxu0 0.0
    %1628 = vmatpush1.msra.mxu0 %v1544
    %1629 = vmatprep.subr.mxu0 0.0
    %1630 = vmatpush1.msra.mxu0 %v1543
    %1631 = vmatprep.subr.mxu0 0.0
    %1632 = vmatpush1.msra.mxu0 %v1542
    %1633 = vmatprep.subr.mxu0 0.0
    %1634 = vmatpush1.msra.mxu0 %v1541
    %1635 = vmatprep.subr.mxu0 0.0
    %1636 = vmatpush1.msra.mxu0 %v1540
    %1637 = vmatprep.subr.mxu0 0.0
    %1638 = vmatpush1.msra.mxu0 %v1539
    %1639 = vmatprep.subr.mxu0 0.0
    %1640 = vmatpush1.msra.mxu0 %v1538
    %1641 = vmatprep.subr.mxu0 0.0
    %1642 = vmatpush1.msra.mxu0 %v1537
    %1643 = vmatprep.subr.mxu0 0.0
    %1644 = vmatpush1.msra.mxu0 %v1536
    %1645 = vmatprep.subr.mxu0 0.0
    %1646 = vmatpush1.msra.mxu0 %v1535
    %1647 = vmatprep.subr.mxu0 0.0
    %1648 = vmatpush1.msra.mxu0 %v1534
    %1649 = vmatprep.subr.mxu0 0.0
    %1650 = vmatpush1.msra.mxu0 %v1533
    %1651 = vmatprep.subr.mxu0 0.0
    %1652 = vmatpush2.msra.mxu0 0.0
    %1653 = vmatprep.subr.mxu0 0.0
    %1654 = vmatpush2.msra.mxu0 0.0
    %1655 = vmatprep.subr.mxu0 0.0
    %1656 = vmatpush2.msra.mxu0 0.0
    %1657 = vmatprep.subr.mxu0 0.0
    %1658 = vmatpush2.msra.mxu0 0.0
    %1659 = vmatprep.subr.mxu0 0.0
    %1660 = vmatpush2.msra.mxu0 0.0
    %1661 = vmatprep.subr.mxu0 0.0
    %1662 = vmatpush2.msra.mxu0 0.0
    %1663 = vmatprep.subr.mxu0 0.0
    %1664 = vmatpush2.msra.mxu0 0.0
    %1665 = vmatprep.subr.mxu0 0.0
    %1666 = vmatpush2.msra.mxu0 0.0
    %1667 = vmatprep.subr.mxu0 0.0
    %1668 = vmatpush2.msra.mxu0 0.0
    %1669 = vmatprep.subr.mxu0 0.0
    %1670 = vmatpush2.msra.mxu0 0.0
    %1671 = vmatprep.subr.mxu0 0.0
    %1672 = vmatpush2.msra.mxu0 0.0
    %1673 = vmatprep.subr.mxu0 0.0
    %1674 = vmatpush2.msra.mxu0 0.0
    %1675 = vmatprep.subr.mxu0 0.0
    %1676 = vmatpush2.msra.mxu0 0.0
    %1677 = vmatprep.subr.mxu0 0.0
    %1678 = vmatpush2.msra.mxu0 0.0
    %1679 = vmatprep.subr.mxu0 0.0
    %1680 = vmatpush2.msra.mxu0 0.0
    %1681 = vmatprep.subr.mxu0 0.0
    %1682 = vmatpush2.msra.mxu0 0.0
    %1683 = vmatprep.mubr.f32.mxu0 0.0
    %1684 = vmatmul.mubr.f32.gmra.mxu0 %v1532
    %v1685 = vpop.f32.mrf.mxu0
    %v1686 = vadd.f32 0.0, %v1685
    %v1687 = vpop.f32.mrf.mxu0
    %1688 = vdwg.mxu0
    %v1689 = vmul.f32 %v1616, 0.001953125
    %v1690 = vmul.f32 %v1686, 0.001953125
    %v1691 = vmul.f32 %v1689, %v1689
    %v1692 = vsub.f32 %v1690, %v1691
    %v1693 = vld [vmem:[#allocation14] sm:$0x1]
    %v1694 = vadd.f32 %v1692, 1e-05
    %v1695 = vrsqrt.pop %v1694
    %v1696 = vmul.f32 %v1693, %v1695
    %v1697 = vld [vmem:[#allocation16] sm:$0x1]
    %v1698 = vmul.f32 %v1689, %v1696
    %v1699 = vsub.f32 %v1697, %v1698
    %v1701 = vlaneseq
    %v1702 = vshrl.u32 %v1701, 7
    %v1703 = vsub.s32 0, %v1702
    %v1704 = vrot.slane %v1696, %v1703
    %v1706 = vmul.f32 %v1493, %v1704
    %v1707 = vmul.f32 %v1494, %v1704
    %v1708 = vmul.f32 %v1495, %v1704
    %v1709 = vmul.f32 %v1496, %v1704
    %v1710 = vmul.f32 %v1497, %v1704
    %v1712 = vlaneseq
    %v1713 = vshrl.u32 %v1712, 7
    %v1714 = vsub.s32 0, %v1713
    %v1715 = vrot.slane %v1699, %v1714
    %v1717 = vadd.f32 %v1706, %v1715
    %v1718 = vadd.f32 %v1707, %v1715
    %v1719 = vadd.f32 %v1708, %v1715
    %v1720 = vadd.f32 %v1709, %v1715
    %v1721 = vadd.f32 %v1710, %v1715
    %v1722 = vmul.f32 %v1717, %v327
    %v1723 = vmul.f32 %v1718, %v328
    %v1724 = vmul.f32 %v1719, %v329
    %v1725 = vmul.f32 %v1720, %v330
    %v1726 = vmul.f32 %v1721, %v331
    %v1727 = vld [vmem:[%s14] sm:$0x1]
    %v1728 = vpack.c.bf16 %v1723, %v1722
    %v1729 = vpack.c.bf16 %v1725, %v1724
    %v1730 = vpack.c.bf16 %v1726, %v1726
    %v1731 = vld [vmem:[#allocation19] sm:$0xf]
    %v1732 = vld [vmem:[#allocation19 + $0x4] sm:$0xf]
    %v1733 = vld [vmem:[#allocation19 + $0x8] sm:$0xf]
    %v1734 = vld [vmem:[#allocation19 + $0xc] sm:$0xf]
    %v1735 = vld [vmem:[#allocation19 + $0x10] sm:$0xf]
    %v1736 = vld [vmem:[#allocation19 + $0x14] sm:$0xf]
    %v1737 = vld [vmem:[#allocation19 + $0x18] sm:$0xf]
    %v1738 = vld [vmem:[#allocation19 + $0x1c] sm:$0xf]
    %v1739 = vld [vmem:[#allocation19 + $0x20] sm:$0xf]
    %v1740 = vld [vmem:[#allocation19 + $0x24] sm:$0xf]
    %v1741 = vld [vmem:[#allocation19 + $0x28] sm:$0xf]
    %v1742 = vld [vmem:[#allocation19 + $0x2c] sm:$0xf]
    %v1743 = vld [vmem:[#allocation19 + $0x30] sm:$0xf]
    %v1744 = vld [vmem:[#allocation19 + $0x34] sm:$0xf]
    %v1745 = vld [vmem:[#allocation19 + $0x38] sm:$0xf]
    %v1746 = vld [vmem:[#allocation19 + $0x3c] sm:$0xf]
    %v1763 = vunpack.c.l.b16 %v1731
    %v1764 = vunpack.c.l.b16 %v1732
    %v1765 = vunpack.c.l.b16 %v1733
    %v1766 = vunpack.c.l.b16 %v1734
    %v1767 = vunpack.c.l.b16 %v1735
    %v1768 = vunpack.c.l.b16 %v1736
    %v1769 = vunpack.c.l.b16 %v1737
    %v1770 = vunpack.c.l.b16 %v1738
    %v1771 = vunpack.c.l.b16 %v1739
    %v1772 = vunpack.c.l.b16 %v1740
    %v1773 = vunpack.c.l.b16 %v1741
    %v1774 = vunpack.c.l.b16 %v1742
    %v1775 = vunpack.c.l.b16 %v1743
    %v1776 = vunpack.c.l.b16 %v1744
    %v1777 = vunpack.c.l.b16 %v1745
    %v1778 = vunpack.c.l.b16 %v1746
    %v1779 = vpack.c.b16 %v1764, %v1763
    %v1780 = vpack.c.b16 %v1766, %v1765
    %v1781 = vpack.c.b16 %v1768, %v1767
    %v1782 = vpack.c.b16 %v1770, %v1769
    %v1783 = vpack.c.b16 %v1772, %v1771
    %v1784 = vpack.c.b16 %v1774, %v1773
    %v1785 = vpack.c.b16 %v1776, %v1775
    %v1786 = vpack.c.b16 %v1778, %v1777
    %1795 = vmatprep.subr.bf16.mxu0 0
    %1796 = vmatpush1.bf16.msra.mxu0 %v1786
    %1797 = vmatprep.subr.bf16.mxu0 0
    %1798 = vmatpush1.bf16.msra.mxu0 %v1785
    %1799 = vmatprep.subr.bf16.mxu0 0
    %1800 = vmatpush1.bf16.msra.mxu0 %v1784
    %1801 = vmatprep.subr.bf16.mxu0 0
    %1802 = vmatpush1.bf16.msra.mxu0 %v1783
    %1803 = vmatprep.subr.bf16.mxu0 0
    %1804 = vmatpush1.bf16.msra.mxu0 %v1782
    %1805 = vmatprep.subr.bf16.mxu0 0
    %1806 = vmatpush1.bf16.msra.mxu0 %v1781
    %1807 = vmatprep.subr.bf16.mxu0 0
    %1808 = vmatpush1.bf16.msra.mxu0 %v1780
    %1809 = vmatprep.subr.bf16.mxu0 0
    %1810 = vmatpush1.bf16.msra.mxu0 %v1779
    %1811 = vmatprep.subr.bf16.mxu0 0
    %1812 = vmatpush2.bf16.msra.mxu0 0
    %1813 = vmatprep.subr.bf16.mxu0 0
    %1814 = vmatpush2.bf16.msra.mxu0 0
    %1815 = vmatprep.subr.bf16.mxu0 0
    %1816 = vmatpush2.bf16.msra.mxu0 0
    %1817 = vmatprep.subr.bf16.mxu0 0
    %1818 = vmatpush2.bf16.msra.mxu0 0
    %1819 = vmatprep.subr.bf16.mxu0 0
    %1820 = vmatpush2.bf16.msra.mxu0 0
    %1821 = vmatprep.subr.bf16.mxu0 0
    %1822 = vmatpush2.bf16.msra.mxu0 0
    %1823 = vmatprep.subr.bf16.mxu0 0
    %1824 = vmatpush2.bf16.msra.mxu0 0
    %1825 = vmatprep.subr.bf16.mxu0 0
    %1826 = vmatpush2.bf16.msra.mxu0 0
    %1827 = vmatprep.mubr.bf16.mxu0 0
    %1828 = vmatmul.mubr.bf16.gmra.mxu0 %v1728
    %v1829 = vpop.f32.mrf.mxu0
    %v1830 = vadd.f32 0.0, %v1829
    %v1831 = vpop.f32.mrf.mxu0
    %v1832 = vpop.f32.mrf.mxu0
    %v1833 = vadd.f32 0.0, %v1832
    %v1834 = vpop.f32.mrf.mxu0
    %1835 = vmatprep.mubr.bf16.mxu0 0
    %1836 = vmatmul.mubr.bf16.gmra.mxu0 %v1729
    %v1837 = vpop.f32.mrf.mxu0
    %v1838 = vadd.f32 0.0, %v1837
    %v1839 = vpop.f32.mrf.mxu0
    %v1840 = vpop.f32.mrf.mxu0
    %v1841 = vadd.f32 0.0, %v1840
    %v1842 = vpop.f32.mrf.mxu0
    %1843 = vmatprep.mubr.bf16.mxu0 0
    %1844 = vmatmul.mubr.bf16.gmra.mxu0 %v1730
    %v1845 = vpop.f32.mrf.mxu0
    %v1846 = vadd.f32 0.0, %v1845
    %v1847 = vpop.f32.mrf.mxu0
    %v1848 = vpop.f32.mrf.mxu0
    %v1849 = vpop.f32.mrf.mxu0
    %1850 = vdwg.mxu0
    %s1851 = scalar_lea.vmem [#allocation19], 64
    %v1852 = vld [vmem:[%s1851] sm:$0xf]
    %v1853 = vld [vmem:[%s1851 + $0x4] sm:$0xf]
    %v1854 = vld [vmem:[%s1851 + $0x8] sm:$0xf]
    %v1855 = vld [vmem:[%s1851 + $0xc] sm:$0xf]
    %v1856 = vld [vmem:[%s1851 + $0x10] sm:$0xf]
    %v1857 = vld [vmem:[%s1851 + $0x14] sm:$0xf]
    %v1858 = vld [vmem:[%s1851 + $0x18] sm:$0xf]
    %v1859 = vld [vmem:[%s1851 + $0x1c] sm:$0xf]
    %v1860 = vld [vmem:[%s1851 + $0x20] sm:$0xf]
    %v1861 = vld [vmem:[%s1851 + $0x24] sm:$0xf]
    %v1862 = vld [vmem:[%s1851 + $0x28] sm:$0xf]
    %v1863 = vld [vmem:[%s1851 + $0x2c] sm:$0xf]
    %v1864 = vld [vmem:[%s1851 + $0x30] sm:$0xf]
    %v1865 = vld [vmem:[%s1851 + $0x34] sm:$0xf]
    %v1866 = vld [vmem:[%s1851 + $0x38] sm:$0xf]
    %v1867 = vld [vmem:[%s1851 + $0x3c] sm:$0xf]
    %v1884 = vunpack.c.l.b16 %v1852
    %v1885 = vunpack.c.l.b16 %v1853
    %v1886 = vunpack.c.l.b16 %v1854
    %v1887 = vunpack.c.l.b16 %v1855
    %v1888 = vunpack.c.l.b16 %v1856
    %v1889 = vunpack.c.l.b16 %v1857
    %v1890 = vunpack.c.l.b16 %v1858
    %v1891 = vunpack.c.l.b16 %v1859
    %v1892 = vunpack.c.l.b16 %v1860
    %v1893 = vunpack.c.l.b16 %v1861
    %v1894 = vunpack.c.l.b16 %v1862
    %v1895 = vunpack.c.l.b16 %v1863
    %v1896 = vunpack.c.l.b16 %v1864
    %v1897 = vunpack.c.l.b16 %v1865
    %v1898 = vunpack.c.l.b16 %v1866
    %v1899 = vunpack.c.l.b16 %v1867
    %v1900 = vpack.c.b16 %v1885, %v1884
    %v1901 = vpack.c.b16 %v1887, %v1886
    %v1902 = vpack.c.b16 %v1889, %v1888
    %v1903 = vpack.c.b16 %v1891, %v1890
    %v1904 = vpack.c.b16 %v1893, %v1892
    %v1905 = vpack.c.b16 %v1895, %v1894
    %v1906 = vpack.c.b16 %v1897, %v1896
    %v1907 = vpack.c.b16 %v1899, %v1898
    %1916 = vmatprep.subr.bf16.mxu0 0
    %1917 = vmatpush1.bf16.msra.mxu0 %v1907
    %1918 = vmatprep.subr.bf16.mxu0 0
    %1919 = vmatpush1.bf16.msra.mxu0 %v1906
    %1920 = vmatprep.subr.bf16.mxu0 0
    %1921 = vmatpush1.bf16.msra.mxu0 %v1905
    %1922 = vmatprep.subr.bf16.mxu0 0
    %1923 = vmatpush1.bf16.msra.mxu0 %v1904
    %1924 = vmatprep.subr.bf16.mxu0 0
    %1925 = vmatpush1.bf16.msra.mxu0 %v1903
    %1926 = vmatprep.subr.bf16.mxu0 0
    %1927 = vmatpush1.bf16.msra.mxu0 %v1902
    %1928 = vmatprep.subr.bf16.mxu0 0
    %1929 = vmatpush1.bf16.msra.mxu0 %v1901
    %1930 = vmatprep.subr.bf16.mxu0 0
    %1931 = vmatpush1.bf16.msra.mxu0 %v1900
    %1932 = vmatprep.subr.bf16.mxu0 0
    %1933 = vmatpush2.bf16.msra.mxu0 0
    %1934 = vmatprep.subr.bf16.mxu0 0
    %1935 = vmatpush2.bf16.msra.mxu0 0
    %1936 = vmatprep.subr.bf16.mxu0 0
    %1937 = vmatpush2.bf16.msra.mxu0 0
    %1938 = vmatprep.subr.bf16.mxu0 0
    %1939 = vmatpush2.bf16.msra.mxu0 0
    %1940 = vmatprep.subr.bf16.mxu0 0
    %1941 = vmatpush2.bf16.msra.mxu0 0
    %1942 = vmatprep.subr.bf16.mxu0 0
    %1943 = vmatpush2.bf16.msra.mxu0 0
    %1944 = vmatprep.subr.bf16.mxu0 0
    %1945 = vmatpush2.bf16.msra.mxu0 0
    %1946 = vmatprep.subr.bf16.mxu0 0
    %1947 = vmatpush2.bf16.msra.mxu0 0
    %1948 = vmatprep.mubr.bf16.mxu0 0
    %1949 = vmatmul.mubr.bf16.gmra.mxu0 %v1728
    %v1950 = vpop.f32.mrf.mxu0
    %v1951 = vadd.f32 0.0, %v1950
    %v1952 = vpop.f32.mrf.mxu0
    %v1953 = vpop.f32.mrf.mxu0
    %v1954 = vadd.f32 0.0, %v1953
    %v1955 = vpop.f32.mrf.mxu0
    %1956 = vmatprep.mubr.bf16.mxu0 0
    %1957 = vmatmul.mubr.bf16.gmra.mxu0 %v1729
    %v1958 = vpop.f32.mrf.mxu0
    %v1959 = vadd.f32 0.0, %v1958
    %v1960 = vpop.f32.mrf.mxu0
    %v1961 = vpop.f32.mrf.mxu0
    %v1962 = vadd.f32 0.0, %v1961
    %v1963 = vpop.f32.mrf.mxu0
    %1964 = vmatprep.mubr.bf16.mxu0 0
    %1965 = vmatmul.mubr.bf16.gmra.mxu0 %v1730
    %v1966 = vpop.f32.mrf.mxu0
    %v1967 = vadd.f32 0.0, %v1966
    %v1968 = vpop.f32.mrf.mxu0
    %v1969 = vpop.f32.mrf.mxu0
    %v1970 = vpop.f32.mrf.mxu0
    %1971 = vdwg.mxu0
    %s1972 = scalar_lea.vmem [#allocation19], 128
    %v1973 = vld [vmem:[%s1972] sm:$0xf]
    %v1974 = vld [vmem:[%s1972 + $0x4] sm:$0xf]
    %v1975 = vld [vmem:[%s1972 + $0x8] sm:$0xf]
    %v1976 = vld [vmem:[%s1972 + $0xc] sm:$0xf]
    %v1977 = vld [vmem:[%s1972 + $0x10] sm:$0xf]
    %v1978 = vld [vmem:[%s1972 + $0x14] sm:$0xf]
    %v1979 = vld [vmem:[%s1972 + $0x18] sm:$0xf]
    %v1980 = vld [vmem:[%s1972 + $0x1c] sm:$0xf]
    %v1981 = vld [vmem:[%s1972 + $0x20] sm:$0xf]
    %v1982 = vld [vmem:[%s1972 + $0x24] sm:$0xf]
    %v1983 = vld [vmem:[%s1972 + $0x28] sm:$0xf]
    %v1984 = vld [vmem:[%s1972 + $0x2c] sm:$0xf]
    %v1985 = vld [vmem:[%s1972 + $0x30] sm:$0xf]
    %v1986 = vld [vmem:[%s1972 + $0x34] sm:$0xf]
    %v1987 = vld [vmem:[%s1972 + $0x38] sm:$0xf]
    %v1988 = vld [vmem:[%s1972 + $0x3c] sm:$0xf]
    %v2005 = vunpack.c.l.b16 %v1973
    %v2006 = vunpack.c.l.b16 %v1974
    %v2007 = vunpack.c.l.b16 %v1975
    %v2008 = vunpack.c.l.b16 %v1976
    %v2009 = vunpack.c.l.b16 %v1977
    %v2010 = vunpack.c.l.b16 %v1978
    %v2011 = vunpack.c.l.b16 %v1979
    %v2012 = vunpack.c.l.b16 %v1980
    %v2013 = vunpack.c.l.b16 %v1981
    %v2014 = vunpack.c.l.b16 %v1982
    %v2015 = vunpack.c.l.b16 %v1983
    %v2016 = vunpack.c.l.b16 %v1984
    %v2017 = vunpack.c.l.b16 %v1985
    %v2018 = vunpack.c.l.b16 %v1986
    %v2019 = vunpack.c.l.b16 %v1987
    %v2020 = vunpack.c.l.b16 %v1988
    %v2021 = vpack.c.b16 %v2006, %v2005
    %v2022 = vpack.c.b16 %v2008, %v2007
    %v2023 = vpack.c.b16 %v2010, %v2009
    %v2024 = vpack.c.b16 %v2012, %v2011
    %v2025 = vpack.c.b16 %v2014, %v2013
    %v2026 = vpack.c.b16 %v2016, %v2015
    %v2027 = vpack.c.b16 %v2018, %v2017
    %v2028 = vpack.c.b16 %v2020, %v2019
    %2037 = vmatprep.subr.bf16.mxu0 0
    %2038 = vmatpush1.bf16.msra.mxu0 %v2028
    %2039 = vmatprep.subr.bf16.mxu0 0
    %2040 = vmatpush1.bf16.msra.mxu0 %v2027
    %2041 = vmatprep.subr.bf16.mxu0 0
    %2042 = vmatpush1.bf16.msra.mxu0 %v2026
    %2043 = vmatprep.subr.bf16.mxu0 0
    %2044 = vmatpush1.bf16.msra.mxu0 %v2025
    %2045 = vmatprep.subr.bf16.mxu0 0
    %2046 = vmatpush1.bf16.msra.mxu0 %v2024
    %2047 = vmatprep.subr.bf16.mxu0 0
    %2048 = vmatpush1.bf16.msra.mxu0 %v2023
    %2049 = vmatprep.subr.bf16.mxu0 0
    %2050 = vmatpush1.bf16.msra.mxu0 %v2022
    %2051 = vmatprep.subr.bf16.mxu0 0
    %2052 = vmatpush1.bf16.msra.mxu0 %v2021
    %2053 = vmatprep.subr.bf16.mxu0 0
    %2054 = vmatpush2.bf16.msra.mxu0 0
    %2055 = vmatprep.subr.bf16.mxu0 0
    %2056 = vmatpush2.bf16.msra.mxu0 0
    %2057 = vmatprep.subr.bf16.mxu0 0
    %2058 = vmatpush2.bf16.msra.mxu0 0
    %2059 = vmatprep.subr.bf16.mxu0 0
    %2060 = vmatpush2.bf16.msra.mxu0 0
    %2061 = vmatprep.subr.bf16.mxu0 0
    %2062 = vmatpush2.bf16.msra.mxu0 0
    %2063 = vmatprep.subr.bf16.mxu0 0
    %2064 = vmatpush2.bf16.msra.mxu0 0
    %2065 = vmatprep.subr.bf16.mxu0 0
    %2066 = vmatpush2.bf16.msra.mxu0 0
    %2067 = vmatprep.subr.bf16.mxu0 0
    %2068 = vmatpush2.bf16.msra.mxu0 0
    %2069 = vmatprep.mubr.bf16.mxu0 0
    %2070 = vmatmul.mubr.bf16.gmra.mxu0 %v1728
    %v2071 = vpop.f32.mrf.mxu0
    %v2072 = vadd.f32 0.0, %v2071
    %v2073 = vpop.f32.mrf.mxu0
    %v2074 = vpop.f32.mrf.mxu0
    %v2075 = vadd.f32 0.0, %v2074
    %v2076 = vpop.f32.mrf.mxu0
    %2077 = vmatprep.mubr.bf16.mxu0 0
    %2078 = vmatmul.mubr.bf16.gmra.mxu0 %v1729
    %v2079 = vpop.f32.mrf.mxu0
    %v2080 = vadd.f32 0.0, %v2079
    %v2081 = vpop.f32.mrf.mxu0
    %v2082 = vpop.f32.mrf.mxu0
    %v2083 = vadd.f32 0.0, %v2082
    %v2084 = vpop.f32.mrf.mxu0
    %2085 = vmatprep.mubr.bf16.mxu0 0
    %2086 = vmatmul.mubr.bf16.gmra.mxu0 %v1730
    %v2087 = vpop.f32.mrf.mxu0
    %v2088 = vadd.f32 0.0, %v2087
    %v2089 = vpop.f32.mrf.mxu0
    %v2090 = vpop.f32.mrf.mxu0
    %v2091 = vpop.f32.mrf.mxu0
    %2092 = vdwg.mxu0
    %v2098 = vrot.slane %v1830, 7
    %v2099 = vrot.slane %v1833, 7
    %v2100 = vsel %vm850, %v2098, %v2099
    %v2101 = vrot.slane %v1838, 7
    %v2102 = vsel %vm850, %v2099, %v2101
    %v2103 = vrot.slane %v1841, 7
    %v2104 = vsel %vm850, %v2101, %v2103
    %v2105 = vrot.slane %v1846, 7
    %v2106 = vsel %vm850, %v2103, %v2105
    %v2112 = vsel %vm850, 0.0, %v2098
    %v2113 = vadd.f32 %v2112, %v1951
    %v2114 = vadd.f32 %v2100, %v1954
    %v2115 = vadd.f32 %v2102, %v1959
    %v2116 = vadd.f32 %v2104, %v1962
    %v2117 = vadd.f32 %v2106, %v1967
    %v2123 = vrot.slane %v2072, 1
    %v2124 = vrot.slane %v2075, 1
    %v2125 = vsel %vm876, %v2123, %v2124
    %v2126 = vrot.slane %v2080, 1
    %v2127 = vsel %vm876, %v2124, %v2126
    %v2128 = vrot.slane %v2083, 1
    %v2129 = vsel %vm876, %v2126, %v2128
    %v2130 = vrot.slane %v2088, 1
    %v2131 = vsel %vm876, %v2128, %v2130
    %v2137 = vsel %vm891, %v2130, 0.0
    %v2138 = vadd.f32 %v2113, %v2125
    %v2139 = vadd.f32 %v2114, %v2127
    %v2140 = vadd.f32 %v2115, %v2129
    %v2141 = vadd.f32 %v2116, %v2131
    %v2142 = vadd.f32 %v2117, %v2137
    %v2144 = vlaneseq
    %v2145 = vshrl.u32 %v2144, 7
    %v2146 = vsub.s32 0, %v2145
    %v2147 = vrot.slane %v1727, %v2146
    %v2149 = vadd.f32 %v2138, %v2147
    %v2150 = vadd.f32 %v2139, %v2147
    %v2151 = vadd.f32 %v2140, %v2147
    %v2152 = vadd.f32 %v2141, %v2147
    %v2153 = vadd.f32 %v2142, %v2147
    %v2154 = vmul.f32 %v2149, %v327
    %v2155 = vmul.f32 %v2150, %v328
    %v2156 = vmul.f32 %v2151, %v329
    %v2157 = vmul.f32 %v2152, %v330
    %v2158 = vmul.f32 %v2153, %v331
    %v2159 = vxor.u32 %v2154, 2147483648
    %v2160 = vxor.u32 %v2155, 2147483648
    %v2161 = vxor.u32 %v2156, 2147483648
    %v2162 = vxor.u32 %v2157, 2147483648
    %v2163 = vxor.u32 %v2158, 2147483648
    %v2164 = vmul.f32 %v2159, 1.442695
    %v2165 = vpow.pop %v2164
    %v2166 = vmul.f32 %v2160, 1.442695
    %v2167 = vpow.pop %v2166
    %v2168 = vmul.f32 %v2161, 1.442695
    %v2169 = vpow.pop %v2168
    %v2170 = vmul.f32 %v2162, 1.442695
    %v2171 = vpow.pop %v2170
    %v2172 = vmul.f32 %v2163, 1.442695
    %v2173 = vpow.pop %v2172
    %v2174 = vadd.f32 %v2165, 1.0
    %v2175 = vadd.f32 %v2167, 1.0
    %v2176 = vadd.f32 %v2169, 1.0
    %v2177 = vadd.f32 %v2171, 1.0
    %v2178 = vadd.f32 %v2173, 1.0
    %v2179 = vrcp.pop %v2174
    %v2180 = vmul.f32 1.0, %v2179
    %v2181 = vrcp.pop %v2175
    %v2182 = vmul.f32 1.0, %v2181
    %v2183 = vrcp.pop %v2176
    %v2184 = vmul.f32 1.0, %v2183
    %v2185 = vrcp.pop %v2177
    %v2186 = vmul.f32 1.0, %v2185
    %v2187 = vrcp.pop %v2178
    %v2188 = vmul.f32 1.0, %v2187
    %v2189 = vmul.f32 %v2154, %v2180
    %v2190 = vmul.f32 %v2155, %v2182
    %v2191 = vmul.f32 %v2156, %v2184
    %v2192 = vmul.f32 %v2157, %v2186
    %v2193 = vmul.f32 %v2158, %v2188
    %v2194 = vld [vmem:[%s16] sm:$0x1]
    %v2195 = vpack.c.bf16 %v2190, %v2189
    %v2196 = vpack.c.bf16 %v2192, %v2191
    %v2197 = vpack.c.bf16 %v2193, %v2193
    %v2198 = vld [vmem:[#allocation20] sm:$0xf]
    %v2199 = vld [vmem:[#allocation20 + $0x4] sm:$0xf]
    %v2200 = vld [vmem:[#allocation20 + $0x8] sm:$0xf]
    %v2201 = vld [vmem:[#allocation20 + $0xc] sm:$0xf]
    %v2202 = vld [vmem:[#allocation20 + $0x10] sm:$0xf]
    %v2203 = vld [vmem:[#allocation20 + $0x14] sm:$0xf]
    %v2204 = vld [vmem:[#allocation20 + $0x18] sm:$0xf]
    %v2205 = vld [vmem:[#allocation20 + $0x1c] sm:$0xf]
    %v2206 = vld [vmem:[#allocation20 + $0x20] sm:$0xf]
    %v2207 = vld [vmem:[#allocation20 + $0x24] sm:$0xf]
    %v2208 = vld [vmem:[#allocation20 + $0x28] sm:$0xf]
    %v2209 = vld [vmem:[#allocation20 + $0x2c] sm:$0xf]
    %v2210 = vld [vmem:[#allocation20 + $0x30] sm:$0xf]
    %v2211 = vld [vmem:[#allocation20 + $0x34] sm:$0xf]
    %v2212 = vld [vmem:[#allocation20 + $0x38] sm:$0xf]
    %v2213 = vld [vmem:[#allocation20 + $0x3c] sm:$0xf]
    %v2230 = vunpack.c.l.b16 %v2198
    %v2231 = vunpack.c.l.b16 %v2199
    %v2232 = vunpack.c.l.b16 %v2200
    %v2233 = vunpack.c.l.b16 %v2201
    %v2234 = vunpack.c.l.b16 %v2202
    %v2235 = vunpack.c.l.b16 %v2203
    %v2236 = vunpack.c.l.b16 %v2204
    %v2237 = vunpack.c.l.b16 %v2205
    %v2238 = vunpack.c.l.b16 %v2206
    %v2239 = vunpack.c.l.b16 %v2207
    %v2240 = vunpack.c.l.b16 %v2208
    %v2241 = vunpack.c.l.b16 %v2209
    %v2242 = vunpack.c.l.b16 %v2210
    %v2243 = vunpack.c.l.b16 %v2211
    %v2244 = vunpack.c.l.b16 %v2212
    %v2245 = vunpack.c.l.b16 %v2213
    %v2246 = vpack.c.b16 %v2231, %v2230
    %v2247 = vpack.c.b16 %v2233, %v2232
    %v2248 = vpack.c.b16 %v2235, %v2234
    %v2249 = vpack.c.b16 %v2237, %v2236
    %v2250 = vpack.c.b16 %v2239, %v2238
    %v2251 = vpack.c.b16 %v2241, %v2240
    %v2252 = vpack.c.b16 %v2243, %v2242
    %v2253 = vpack.c.b16 %v2245, %v2244
    %2262 = vmatprep.subr.bf16.mxu0 0
    %2263 = vmatpush1.bf16.msra.mxu0 %v2253
    %2264 = vmatprep.subr.bf16.mxu0 0
    %2265 = vmatpush1.bf16.msra.mxu0 %v2252
    %2266 = vmatprep.subr.bf16.mxu0 0
    %2267 = vmatpush1.bf16.msra.mxu0 %v2251
    %2268 = vmatprep.subr.bf16.mxu0 0
    %2269 = vmatpush1.bf16.msra.mxu0 %v2250
    %2270 = vmatprep.subr.bf16.mxu0 0
    %2271 = vmatpush1.bf16.msra.mxu0 %v2249
    %2272 = vmatprep.subr.bf16.mxu0 0
    %2273 = vmatpush1.bf16.msra.mxu0 %v2248
    %2274 = vmatprep.subr.bf16.mxu0 0
    %2275 = vmatpush1.bf16.msra.mxu0 %v2247
    %2276 = vmatprep.subr.bf16.mxu0 0
    %2277 = vmatpush1.bf16.msra.mxu0 %v2246
    %2278 = vmatprep.subr.bf16.mxu0 0
    %2279 = vmatpush2.bf16.msra.mxu0 0
    %2280 = vmatprep.subr.bf16.mxu0 0
    %2281 = vmatpush2.bf16.msra.mxu0 0
    %2282 = vmatprep.subr.bf16.mxu0 0
    %2283 = vmatpush2.bf16.msra.mxu0 0
    %2284 = vmatprep.subr.bf16.mxu0 0
    %2285 = vmatpush2.bf16.msra.mxu0 0
    %2286 = vmatprep.subr.bf16.mxu0 0
    %2287 = vmatpush2.bf16.msra.mxu0 0
    %2288 = vmatprep.subr.bf16.mxu0 0
    %2289 = vmatpush2.bf16.msra.mxu0 0
    %2290 = vmatprep.subr.bf16.mxu0 0
    %2291 = vmatpush2.bf16.msra.mxu0 0
    %2292 = vmatprep.subr.bf16.mxu0 0
    %2293 = vmatpush2.bf16.msra.mxu0 0
    %2294 = vmatprep.mubr.bf16.mxu0 0
    %2295 = vmatmul.mubr.bf16.gmra.mxu0 %v2195
    %v2296 = vpop.f32.mrf.mxu0
    %v2297 = vadd.f32 0.0, %v2296
    %v2298 = vpop.f32.mrf.mxu0
    %v2299 = vpop.f32.mrf.mxu0
    %v2300 = vadd.f32 0.0, %v2299
    %v2301 = vpop.f32.mrf.mxu0
    %2302 = vmatprep.mubr.bf16.mxu0 0
    %2303 = vmatmul.mubr.bf16.gmra.mxu0 %v2196
    %v2304 = vpop.f32.mrf.mxu0
    %v2305 = vadd.f32 0.0, %v2304
    %v2306 = vpop.f32.mrf.mxu0
    %v2307 = vpop.f32.mrf.mxu0
    %v2308 = vadd.f32 0.0, %v2307
    %v2309 = vpop.f32.mrf.mxu0
    %2310 = vmatprep.mubr.bf16.mxu0 0
    %2311 = vmatmul.mubr.bf16.gmra.mxu0 %v2197
    %v2312 = vpop.f32.mrf.mxu0
    %v2313 = vadd.f32 0.0, %v2312
    %v2314 = vpop.f32.mrf.mxu0
    %v2315 = vpop.f32.mrf.mxu0
    %v2316 = vpop.f32.mrf.mxu0
    %2317 = vdwg.mxu0
    %s2318 = scalar_lea.vmem [#allocation20], 64
    %v2319 = vld [vmem:[%s2318] sm:$0xf]
    %v2320 = vld [vmem:[%s2318 + $0x4] sm:$0xf]
    %v2321 = vld [vmem:[%s2318 + $0x8] sm:$0xf]
    %v2322 = vld [vmem:[%s2318 + $0xc] sm:$0xf]
    %v2323 = vld [vmem:[%s2318 + $0x10] sm:$0xf]
    %v2324 = vld [vmem:[%s2318 + $0x14] sm:$0xf]
    %v2325 = vld [vmem:[%s2318 + $0x18] sm:$0xf]
    %v2326 = vld [vmem:[%s2318 + $0x1c] sm:$0xf]
    %v2327 = vld [vmem:[%s2318 + $0x20] sm:$0xf]
    %v2328 = vld [vmem:[%s2318 + $0x24] sm:$0xf]
    %v2329 = vld [vmem:[%s2318 + $0x28] sm:$0xf]
    %v2330 = vld [vmem:[%s2318 + $0x2c] sm:$0xf]
    %v2331 = vld [vmem:[%s2318 + $0x30] sm:$0xf]
    %v2332 = vld [vmem:[%s2318 + $0x34] sm:$0xf]
    %v2333 = vld [vmem:[%s2318 + $0x38] sm:$0xf]
    %v2334 = vld [vmem:[%s2318 + $0x3c] sm:$0xf]
    %v2351 = vunpack.c.l.b16 %v2319
    %v2352 = vunpack.c.l.b16 %v2320
    %v2353 = vunpack.c.l.b16 %v2321
    %v2354 = vunpack.c.l.b16 %v2322
    %v2355 = vunpack.c.l.b16 %v2323
    %v2356 = vunpack.c.l.b16 %v2324
    %v2357 = vunpack.c.l.b16 %v2325
    %v2358 = vunpack.c.l.b16 %v2326
    %v2359 = vunpack.c.l.b16 %v2327
    %v2360 = vunpack.c.l.b16 %v2328
    %v2361 = vunpack.c.l.b16 %v2329
    %v2362 = vunpack.c.l.b16 %v2330
    %v2363 = vunpack.c.l.b16 %v2331
    %v2364 = vunpack.c.l.b16 %v2332
    %v2365 = vunpack.c.l.b16 %v2333
    %v2366 = vunpack.c.l.b16 %v2334
    %v2367 = vpack.c.b16 %v2352, %v2351
    %v2368 = vpack.c.b16 %v2354, %v2353
    %v2369 = vpack.c.b16 %v2356, %v2355
    %v2370 = vpack.c.b16 %v2358, %v2357
    %v2371 = vpack.c.b16 %v2360, %v2359
    %v2372 = vpack.c.b16 %v2362, %v2361
    %v2373 = vpack.c.b16 %v2364, %v2363
    %v2374 = vpack.c.b16 %v2366, %v2365
    %2383 = vmatprep.subr.bf16.mxu0 0
    %2384 = vmatpush1.bf16.msra.mxu0 %v2374
    %2385 = vmatprep.subr.bf16.mxu0 0
    %2386 = vmatpush1.bf16.msra.mxu0 %v2373
    %2387 = vmatprep.subr.bf16.mxu0 0
    %2388 = vmatpush1.bf16.msra.mxu0 %v2372
    %2389 = vmatprep.subr.bf16.mxu0 0
    %2390 = vmatpush1.bf16.msra.mxu0 %v2371
    %2391 = vmatprep.subr.bf16.mxu0 0
    %2392 = vmatpush1.bf16.msra.mxu0 %v2370
    %2393 = vmatprep.subr.bf16.mxu0 0
    %2394 = vmatpush1.bf16.msra.mxu0 %v2369
    %2395 = vmatprep.subr.bf16.mxu0 0
    %2396 = vmatpush1.bf16.msra.mxu0 %v2368
    %2397 = vmatprep.subr.bf16.mxu0 0
    %2398 = vmatpush1.bf16.msra.mxu0 %v2367
    %2399 = vmatprep.subr.bf16.mxu0 0
    %2400 = vmatpush2.bf16.msra.mxu0 0
    %2401 = vmatprep.subr.bf16.mxu0 0
    %2402 = vmatpush2.bf16.msra.mxu0 0
    %2403 = vmatprep.subr.bf16.mxu0 0
    %2404 = vmatpush2.bf16.msra.mxu0 0
    %2405 = vmatprep.subr.bf16.mxu0 0
    %2406 = vmatpush2.bf16.msra.mxu0 0
    %2407 = vmatprep.subr.bf16.mxu0 0
    %2408 = vmatpush2.bf16.msra.mxu0 0
    %2409 = vmatprep.subr.bf16.mxu0 0
    %2410 = vmatpush2.bf16.msra.mxu0 0
    %2411 = vmatprep.subr.bf16.mxu0 0
    %2412 = vmatpush2.bf16.msra.mxu0 0
    %2413 = vmatprep.subr.bf16.mxu0 0
    %2414 = vmatpush2.bf16.msra.mxu0 0
    %2415 = vmatprep.mubr.bf16.mxu0 0
    %2416 = vmatmul.mubr.bf16.gmra.mxu0 %v2195
    %v2417 = vpop.f32.mrf.mxu0
    %v2418 = vadd.f32 0.0, %v2417
    %v2419 = vpop.f32.mrf.mxu0
    %v2420 = vpop.f32.mrf.mxu0
    %v2421 = vadd.f32 0.0, %v2420
    %v2422 = vpop.f32.mrf.mxu0
    %2423 = vmatprep.mubr.bf16.mxu0 0
    %2424 = vmatmul.mubr.bf16.gmra.mxu0 %v2196
    %v2425 = vpop.f32.mrf.mxu0
    %v2426 = vadd.f32 0.0, %v2425
    %v2427 = vpop.f32.mrf.mxu0
    %v2428 = vpop.f32.mrf.mxu0
    %v2429 = vadd.f32 0.0, %v2428
    %v2430 = vpop.f32.mrf.mxu0
    %2431 = vmatprep.mubr.bf16.mxu0 0
    %2432 = vmatmul.mubr.bf16.gmra.mxu0 %v2197
    %v2433 = vpop.f32.mrf.mxu0
    %v2434 = vadd.f32 0.0, %v2433
    %v2435 = vpop.f32.mrf.mxu0
    %v2436 = vpop.f32.mrf.mxu0
    %v2437 = vpop.f32.mrf.mxu0
    %2438 = vdwg.mxu0
    %s2439 = scalar_lea.vmem [#allocation20], 128
    %v2440 = vld [vmem:[%s2439] sm:$0xf]
    %v2441 = vld [vmem:[%s2439 + $0x4] sm:$0xf]
    %v2442 = vld [vmem:[%s2439 + $0x8] sm:$0xf]
    %v2443 = vld [vmem:[%s2439 + $0xc] sm:$0xf]
    %v2444 = vld [vmem:[%s2439 + $0x10] sm:$0xf]
    %v2445 = vld [vmem:[%s2439 + $0x14] sm:$0xf]
    %v2446 = vld [vmem:[%s2439 + $0x18] sm:$0xf]
    %v2447 = vld [vmem:[%s2439 + $0x1c] sm:$0xf]
    %v2448 = vld [vmem:[%s2439 + $0x20] sm:$0xf]
    %v2449 = vld [vmem:[%s2439 + $0x24] sm:$0xf]
    %v2450 = vld [vmem:[%s2439 + $0x28] sm:$0xf]
    %v2451 = vld [vmem:[%s2439 + $0x2c] sm:$0xf]
    %v2452 = vld [vmem:[%s2439 + $0x30] sm:$0xf]
    %v2453 = vld [vmem:[%s2439 + $0x34] sm:$0xf]
    %v2454 = vld [vmem:[%s2439 + $0x38] sm:$0xf]
    %v2455 = vld [vmem:[%s2439 + $0x3c] sm:$0xf]
    %v2472 = vunpack.c.l.b16 %v2440
    %v2473 = vunpack.c.l.b16 %v2441
    %v2474 = vunpack.c.l.b16 %v2442
    %v2475 = vunpack.c.l.b16 %v2443
    %v2476 = vunpack.c.l.b16 %v2444
    %v2477 = vunpack.c.l.b16 %v2445
    %v2478 = vunpack.c.l.b16 %v2446
    %v2479 = vunpack.c.l.b16 %v2447
    %v2480 = vunpack.c.l.b16 %v2448
    %v2481 = vunpack.c.l.b16 %v2449
    %v2482 = vunpack.c.l.b16 %v2450
    %v2483 = vunpack.c.l.b16 %v2451
    %v2484 = vunpack.c.l.b16 %v2452
    %v2485 = vunpack.c.l.b16 %v2453
    %v2486 = vunpack.c.l.b16 %v2454
    %v2487 = vunpack.c.l.b16 %v2455
    %v2488 = vpack.c.b16 %v2473, %v2472
    %v2489 = vpack.c.b16 %v2475, %v2474
    %v2490 = vpack.c.b16 %v2477, %v2476
    %v2491 = vpack.c.b16 %v2479, %v2478
    %v2492 = vpack.c.b16 %v2481, %v2480
    %v2493 = vpack.c.b16 %v2483, %v2482
    %v2494 = vpack.c.b16 %v2485, %v2484
    %v2495 = vpack.c.b16 %v2487, %v2486
    %2504 = vmatprep.subr.bf16.mxu0 0
    %2505 = vmatpush1.bf16.msra.mxu0 %v2495
    %2506 = vmatprep.subr.bf16.mxu0 0
    %2507 = vmatpush1.bf16.msra.mxu0 %v2494
    %2508 = vmatprep.subr.bf16.mxu0 0
    %2509 = vmatpush1.bf16.msra.mxu0 %v2493
    %2510 = vmatprep.subr.bf16.mxu0 0
    %2511 = vmatpush1.bf16.msra.mxu0 %v2492
    %2512 = vmatprep.subr.bf16.mxu0 0
    %2513 = vmatpush1.bf16.msra.mxu0 %v2491
    %2514 = vmatprep.subr.bf16.mxu0 0
    %2515 = vmatpush1.bf16.msra.mxu0 %v2490
    %2516 = vmatprep.subr.bf16.mxu0 0
    %2517 = vmatpush1.bf16.msra.mxu0 %v2489
    %2518 = vmatprep.subr.bf16.mxu0 0
    %2519 = vmatpush1.bf16.msra.mxu0 %v2488
    %2520 = vmatprep.subr.bf16.mxu0 0
    %2521 = vmatpush2.bf16.msra.mxu0 0
    %2522 = vmatprep.subr.bf16.mxu0 0
    %2523 = vmatpush2.bf16.msra.mxu0 0
    %2524 = vmatprep.subr.bf16.mxu0 0
    %2525 = vmatpush2.bf16.msra.mxu0 0
    %2526 = vmatprep.subr.bf16.mxu0 0
    %2527 = vmatpush2.bf16.msra.mxu0 0
    %2528 = vmatprep.subr.bf16.mxu0 0
    %2529 = vmatpush2.bf16.msra.mxu0 0
    %2530 = vmatprep.subr.bf16.mxu0 0
    %2531 = vmatpush2.bf16.msra.mxu0 0
    %2532 = vmatprep.subr.bf16.mxu0 0
    %2533 = vmatpush2.bf16.msra.mxu0 0
    %2534 = vmatprep.subr.bf16.mxu0 0
    %2535 = vmatpush2.bf16.msra.mxu0 0
    %2536 = vmatprep.mubr.bf16.mxu0 0
    %2537 = vmatmul.mubr.bf16.gmra.mxu0 %v2195
    %v2538 = vpop.f32.mrf.mxu0
    %v2539 = vadd.f32 0.0, %v2538
    %v2540 = vpop.f32.mrf.mxu0
    %v2541 = vpop.f32.mrf.mxu0
    %v2542 = vadd.f32 0.0, %v2541
    %v2543 = vpop.f32.mrf.mxu0
    %2544 = vmatprep.mubr.bf16.mxu0 0
    %2545 = vmatmul.mubr.bf16.gmra.mxu0 %v2196
    %v2546 = vpop.f32.mrf.mxu0
    %v2547 = vadd.f32 0.0, %v2546
    %v2548 = vpop.f32.mrf.mxu0
    %v2549 = vpop.f32.mrf.mxu0
    %v2550 = vadd.f32 0.0, %v2549
    %v2551 = vpop.f32.mrf.mxu0
    %2552 = vmatprep.mubr.bf16.mxu0 0
    %2553 = vmatmul.mubr.bf16.gmra.mxu0 %v2197
    %v2554 = vpop.f32.mrf.mxu0
    %v2555 = vadd.f32 0.0, %v2554
    %v2556 = vpop.f32.mrf.mxu0
    %v2557 = vpop.f32.mrf.mxu0
    %v2558 = vpop.f32.mrf.mxu0
    %2559 = vdwg.mxu0
    %v2565 = vrot.slane %v2297, 7
    %v2566 = vrot.slane %v2300, 7
    %v2567 = vsel %vm850, %v2565, %v2566
    %v2568 = vrot.slane %v2305, 7
    %v2569 = vsel %vm850, %v2566, %v2568
    %v2570 = vrot.slane %v2308, 7
    %v2571 = vsel %vm850, %v2568, %v2570
    %v2572 = vrot.slane %v2313, 7
    %v2573 = vsel %vm850, %v2570, %v2572
    %v2579 = vsel %vm850, 0.0, %v2565
    %v2580 = vadd.f32 %v2579, %v2418
    %v2581 = vadd.f32 %v2567, %v2421
    %v2582 = vadd.f32 %v2569, %v2426
    %v2583 = vadd.f32 %v2571, %v2429
    %v2584 = vadd.f32 %v2573, %v2434
    %v2590 = vrot.slane %v2539, 1
    %v2591 = vrot.slane %v2542, 1
    %v2592 = vsel %vm876, %v2590, %v2591
    %v2593 = vrot.slane %v2547, 1
    %v2594 = vsel %vm876, %v2591, %v2593
    %v2595 = vrot.slane %v2550, 1
    %v2596 = vsel %vm876, %v2593, %v2595
    %v2597 = vrot.slane %v2555, 1
    %v2598 = vsel %vm876, %v2595, %v2597
    %v2604 = vsel %vm891, %v2597, 0.0
    %v2605 = vadd.f32 %v2580, %v2592
    %v2606 = vadd.f32 %v2581, %v2594
    %v2607 = vadd.f32 %v2582, %v2596
    %v2608 = vadd.f32 %v2583, %v2598
    %v2609 = vadd.f32 %v2584, %v2604
    %v2611 = vlaneseq
    %v2612 = vshrl.u32 %v2611, 7
    %v2613 = vsub.s32 0, %v2612
    %v2614 = vrot.slane %v2194, %v2613
    %v2616 = vadd.f32 %v2605, %v2614
    %v2617 = vadd.f32 %v2606, %v2614
    %v2618 = vadd.f32 %v2607, %v2614
    %v2619 = vadd.f32 %v2608, %v2614
    %v2620 = vadd.f32 %v2609, %v2614
    %v2621 = vmul.f32 %v2616, %v327
    %v2622 = vmul.f32 %v2617, %v328
    %v2623 = vmul.f32 %v2618, %v329
    %v2624 = vmul.f32 %v2619, %v330
    %v2625 = vmul.f32 %v2620, %v331
    %v2626 = vadd.f32 %v2621, %v1493
    %v2627 = vadd.f32 %v2622, %v1494
    %v2628 = vadd.f32 %v2623, %v1495
    %v2629 = vadd.f32 %v2624, %v1496
    %v2630 = vadd.f32 %v2625, %v1497
    %2631 = vst [vmem:[#allocation23 - $0x1] sm:$0xfe] %v2626
    %2632 = vst [vmem:[#allocation23 + $0x7] sm:$0xff] %v2627
    %2633 = vst [vmem:[#allocation23 + $0xf] sm:$0x1] %v2628
    %s2634 = scalar_lea.vmem [#allocation23], 16
    %2635 = vst [vmem:[%s2634 - $0x3] sm:$0xf8] %v2628
    %2636 = vst [vmem:[%s2634 + $0x5] sm:$0xff] %v2629
    %2637 = vst [vmem:[%s2634 + $0xd] sm:$0x7] %v2630
    %v2638 = vld [vmem:[%s17] sm:$0xff]
    %v2639 = vld [vmem:[%s17 + $0x8] sm:$0xff]
    %vm2640 = vcmask 293888
    %v2642 = vsel %vm2640, %v2638, 0
    %v2645 = vsel %vm2640, %v2639, 0
    %v2648 = vsel %vm1508, %v2630, 0
    %2650 = vmatprep.subr.mxu0 0.0
    %2651 = vmatpush1.msra.mxu0 0.0
    %2652 = vmatprep.subr.mxu0 0.0
    %2653 = vmatpush1.msra.mxu0 0.0
    %2654 = vmatprep.subr.mxu0 0.0
    %2655 = vmatpush1.msra.mxu0 0.0
    %2656 = vmatprep.subr.mxu0 0.0
    %2657 = vmatpush1.msra.mxu0 0.0
    %2658 = vmatprep.subr.mxu0 0.0
    %2659 = vmatpush1.msra.mxu0 0.0
    %2660 = vmatprep.subr.mxu0 0.0
    %2661 = vmatpush1.msra.mxu0 0.0
    %2662 = vmatprep.subr.mxu0 0.0
    %2663 = vmatpush1.msra.mxu0 0.0
    %2664 = vmatprep.subr.mxu0 0.0
    %2665 = vmatpush1.msra.mxu0 0.0
    %2666 = vmatprep.subr.mxu0 0.0
    %2667 = vmatpush1.msra.mxu0 0.0
    %2668 = vmatprep.subr.mxu0 0.0
    %2669 = vmatpush1.msra.mxu0 0.0
    %2670 = vmatprep.subr.mxu0 0.0
    %2671 = vmatpush1.msra.mxu0 0.0
    %2672 = vmatprep.subr.mxu0 0.0
    %2673 = vmatpush1.msra.mxu0 %v2648
    %2674 = vmatprep.subr.mxu0 0.0
    %2675 = vmatpush1.msra.mxu0 %v2629
    %2676 = vmatprep.subr.mxu0 0.0
    %2677 = vmatpush1.msra.mxu0 %v2628
    %2678 = vmatprep.subr.mxu0 0.0
    %2679 = vmatpush1.msra.mxu0 %v2627
    %2680 = vmatprep.subr.mxu0 0.0
    %2681 = vmatpush1.msra.mxu0 %v2626
    %2682 = vmatprep.subr.mxu0 0.0
    %2683 = vmatpush2.msra.mxu0 0.0
    %2684 = vmatprep.subr.mxu0 0.0
    %2685 = vmatpush2.msra.mxu0 0.0
    %2686 = vmatprep.subr.mxu0 0.0
    %2687 = vmatpush2.msra.mxu0 0.0
    %2688 = vmatprep.subr.mxu0 0.0
    %2689 = vmatpush2.msra.mxu0 0.0
    %2690 = vmatprep.subr.mxu0 0.0
    %2691 = vmatpush2.msra.mxu0 0.0
    %2692 = vmatprep.subr.mxu0 0.0
    %2693 = vmatpush2.msra.mxu0 0.0
    %2694 = vmatprep.subr.mxu0 0.0
    %2695 = vmatpush2.msra.mxu0 0.0
    %2696 = vmatprep.subr.mxu0 0.0
    %2697 = vmatpush2.msra.mxu0 0.0
    %2698 = vmatprep.subr.mxu0 0.0
    %2699 = vmatpush2.msra.mxu0 0.0
    %2700 = vmatprep.subr.mxu0 0.0
    %2701 = vmatpush2.msra.mxu0 0.0
    %2702 = vmatprep.subr.mxu0 0.0
    %2703 = vmatpush2.msra.mxu0 0.0
    %2704 = vmatprep.subr.mxu0 0.0
    %2705 = vmatpush2.msra.mxu0 0.0
    %2706 = vmatprep.subr.mxu0 0.0
    %2707 = vmatpush2.msra.mxu0 0.0
    %2708 = vmatprep.subr.mxu0 0.0
    %2709 = vmatpush2.msra.mxu0 0.0
    %2710 = vmatprep.subr.mxu0 0.0
    %2711 = vmatpush2.msra.mxu0 0.0
    %2712 = vmatprep.subr.mxu0 0.0
    %2713 = vmatpush2.msra.mxu0 0.0
    %2714 = vmatprep.mubr.f32.mxu0 0.0
    %2715 = vmatmul.mubr.f32.gmra.mxu0 %v2642
    %v2716 = vpop.f32.mrf.mxu0
    %v2717 = vadd.f32 0.0, %v2716
    %v2718 = vpop.f32.mrf.mxu0
    %2719 = vmatprep.mubr.f32.mxu0 0.0
    %2720 = vmatmul.mubr.f32.gmra.mxu0 %v2645
    %v2721 = vpop.f32.mrf.mxu0
    %v2722 = vadd.f32 0.0, %v2721
    %v2723 = vpop.f32.mrf.mxu0
    %2724 = vdwg.mxu0
    %v2725 = vld [vmem:[%s18] sm:$0xff]
    %v2726 = vld [vmem:[%s18 + $0x8] sm:$0xff]
    %v2727 = vld [vmem:[%s18 + $0x10] sm:$0xff]
    %v2728 = vld [vmem:[%s18 + $0x18] sm:$0xff]
    %v2729 = vld [vmem:[%s18 + $0x20] sm:$0xff]
    %v2730 = vld [vmem:[%s18 + $0x28] sm:$0xff]
    %v2731 = vld [vmem:[%s18 + $0x30] sm:$0xff]
    %v2732 = vld [vmem:[%s18 + $0x38] sm:$0xff]
    %v2733 = vld [vmem:[%s18 + $0x40] sm:$0xff]
    %v2734 = vld [vmem:[%s18 + $0x48] sm:$0xff]
    %v2735 = vld [vmem:[%s18 + $0x50] sm:$0xff]
    %v2736 = vld [vmem:[%s18 + $0x58] sm:$0xff]
    %v2737 = vld [vmem:[%s18 + $0x60] sm:$0xff]
    %v2738 = vld [vmem:[%s18 + $0x68] sm:$0xff]
    %v2739 = vld [vmem:[%s18 + $0x70] sm:$0xff]
    %v2740 = vld [vmem:[%s18 + $0x78] sm:$0xff]
    %2741 = vmatprep.subr.mxu0 0.0
    %2742 = vmatpush1.msra.mxu0 %v2740
    %2743 = vmatprep.subr.mxu0 0.0
    %2744 = vmatpush1.msra.mxu0 %v2739
    %2745 = vmatprep.subr.mxu0 0.0
    %2746 = vmatpush1.msra.mxu0 %v2738
    %2747 = vmatprep.subr.mxu0 0.0
    %2748 = vmatpush1.msra.mxu0 %v2737
    %2749 = vmatprep.subr.mxu0 0.0
    %2750 = vmatpush1.msra.mxu0 %v2736
    %2751 = vmatprep.subr.mxu0 0.0
    %2752 = vmatpush1.msra.mxu0 %v2735
    %2753 = vmatprep.subr.mxu0 0.0
    %2754 = vmatpush1.msra.mxu0 %v2734
    %2755 = vmatprep.subr.mxu0 0.0
    %2756 = vmatpush1.msra.mxu0 %v2733
    %2757 = vmatprep.subr.mxu0 0.0
    %2758 = vmatpush1.msra.mxu0 %v2732
    %2759 = vmatprep.subr.mxu0 0.0
    %2760 = vmatpush1.msra.mxu0 %v2731
    %2761 = vmatprep.subr.mxu0 0.0
    %2762 = vmatpush1.msra.mxu0 %v2730
    %2763 = vmatprep.subr.mxu0 0.0
    %2764 = vmatpush1.msra.mxu0 %v2729
    %2765 = vmatprep.subr.mxu0 0.0
    %2766 = vmatpush1.msra.mxu0 %v2728
    %2767 = vmatprep.subr.mxu0 0.0
    %2768 = vmatpush1.msra.mxu0 %v2727
    %2769 = vmatprep.subr.mxu0 0.0
    %2770 = vmatpush1.msra.mxu0 %v2726
    %2771 = vmatprep.subr.mxu0 0.0
    %2772 = vmatpush1.msra.mxu0 %v2725
    %2773 = vmatprep.subr.mxu0 0.0
    %2774 = vmatpush2.msra.mxu0 0.0
    %2775 = vmatprep.subr.mxu0 0.0
    %2776 = vmatpush2.msra.mxu0 0.0
    %2777 = vmatprep.subr.mxu0 0.0
    %2778 = vmatpush2.msra.mxu0 0.0
    %2779 = vmatprep.subr.mxu0 0.0
    %2780 = vmatpush2.msra.mxu0 0.0
    %2781 = vmatprep.subr.mxu0 0.0
    %2782 = vmatpush2.msra.mxu0 0.0
    %2783 = vmatprep.subr.mxu0 0.0
    %2784 = vmatpush2.msra.mxu0 0.0
    %2785 = vmatprep.subr.mxu0 0.0
    %2786 = vmatpush2.msra.mxu0 0.0
    %2787 = vmatprep.subr.mxu0 0.0
    %2788 = vmatpush2.msra.mxu0 0.0
    %2789 = vmatprep.subr.mxu0 0.0
    %2790 = vmatpush2.msra.mxu0 0.0
    %2791 = vmatprep.subr.mxu0 0.0
    %2792 = vmatpush2.msra.mxu0 0.0
    %2793 = vmatprep.subr.mxu0 0.0
    %2794 = vmatpush2.msra.mxu0 0.0
    %2795 = vmatprep.subr.mxu0 0.0
    %2796 = vmatpush2.msra.mxu0 0.0
    %2797 = vmatprep.subr.mxu0 0.0
    %2798 = vmatpush2.msra.mxu0 0.0
    %2799 = vmatprep.subr.mxu0 0.0
    %2800 = vmatpush2.msra.mxu0 0.0
    %2801 = vmatprep.subr.mxu0 0.0
    %2802 = vmatpush2.msra.mxu0 0.0
    %2803 = vmatprep.subr.mxu0 0.0
    %2804 = vmatpush2.msra.mxu0 0.0
    %2805 = vmatprep.mubr.f32.mxu0 0.0
    %2806 = vmatmul.mubr.f32.gmra.mxu0 %v2717
    %v2807 = vpop.f32.mrf.mxu0
    %v2808 = vadd.f32 0.0, %v2807
    %v2809 = vpop.f32.mrf.mxu0
    %2810 = vmatprep.mubr.f32.mxu0 0.0
    %2811 = vmatmul.mubr.f32.gmra.mxu0 %v2722
    %v2812 = vpop.f32.mrf.mxu0
    %v2813 = vadd.f32 0.0, %v2812
    %v2814 = vpop.f32.mrf.mxu0
    %2815 = vdwg.mxu0
    %v2816 = vmul.f32 %v2808, 0.25
    %v2817 = vmul.f32 %v2813, 0.25
    %2818 = vst.msk [vmem:[#allocation25] sm:$0xff] %vm337, %v2816
    %s2819 = scalar_lea.vmem [#allocation25], 8
    %2820 = vst.msk [vmem:[%s2819] sm:$0xff] %vm337, %v2817
    // Predicated region
    $region126: #{tpu_custom_call.1} parent=1 // pred_check
      _
    $region127: #{tpu_custom_call.1} parent=1 // pred_check_branch
      %2822 = sbr.rel (0) target = $region129
    $region128: #{tpu_custom_call.1} parent=1 // pred_region
      %s2824 = ssub.s32 512, 512
      %2825 = vsyncadd [#allocation4], %s2824
      %s2826 = sshll.u32 [#allocation22], 4
      %s2827 = int_to_ptr.vmem [resolvable:$true] %s2826
      %2832 = dma.vmem_to_hbm [thread:$0]  %s2827, 512, %s19, [#allocation4], 128, 128, 8
    $region129: #{tpu_custom_call.1} parent=1 // pred_fallthru
      _
    // Predicated region
    $region130: #{tpu_custom_call.1} parent=1 // pred_check
      _
    $region131: #{tpu_custom_call.1} parent=1 // pred_check_branch
      %2834 = sbr.rel (0) target = $region133
    $region132: #{tpu_custom_call.1} parent=1 // pred_region
      %s2836 = ssub.s32 512, 512
      %2837 = vsyncadd [#allocation24], %s2836
      %s2838 = sshll.u32 [#allocation23], 4
      %s2839 = int_to_ptr.vmem [resolvable:$true] %s2838
      %2844 = dma.vmem_to_hbm [thread:$0]  %s2839, 512, %s20, [#allocation24], 128, 128, 8
    $region133: #{tpu_custom_call.1} parent=1 // pred_fallthru
      _
    // Predicated region
    $region134: #{tpu_custom_call.1} parent=1 // pred_check
      _
    $region135: #{tpu_custom_call.1} parent=1 // pred_check_branch
      %2846 = sbr.rel (0) target = $region137
    $region136: #{tpu_custom_call.1} parent=1 // pred_region
      %s2848 = ssub.s32 256, 256
      %2849 = vsyncadd [#allocation24], %s2848
      %s2850 = sshll.u32 [#allocation25], 4
      %s2851 = int_to_ptr.vmem [resolvable:$true] %s2850
      %2856 = dma.vmem_to_hbm [thread:$0]  %s2851, 256, %s21, [#allocation24], 128, 128, 8
    $region137: #{tpu_custom_call.1} parent=1 // pred_fallthru
      _
    // Predicated region
    $region138: #{tpu_custom_call.1} parent=1 // pred_check
      _
    $region139: #{tpu_custom_call.1} parent=1 // pred_check_branch
      %2858 = sbr.rel (0) target = $region141
    $region140: #{tpu_custom_call.1} parent=1 // pred_region
      %2859 = dma.done [#allocation4], 512
    $region141: #{tpu_custom_call.1} parent=1 // pred_fallthru
      _
    // Predicated region
    $region142: #{tpu_custom_call.1} parent=1 // pred_check
      _
    $region143: #{tpu_custom_call.1} parent=1 // pred_check_branch
      %2861 = sbr.rel (0) target = $region145
    $region144: #{tpu_custom_call.1} parent=1 // pred_region
      %2862 = dma.done [#allocation24], 512
    $region145: #{tpu_custom_call.1} parent=1 // pred_fallthru
      _
    // Predicated region
    $region146: #{tpu_custom_call.1} parent=1 // pred_check
      _
    $region147: #{tpu_custom_call.1} parent=1 // pred_check_branch
      %2864 = sbr.rel (0) target = $region149
    $region148: #{tpu_custom_call.1} parent=1 // pred_region
      %2865 = dma.done [#allocation24], 256
    $region149: #{tpu_custom_call.1} parent=1 // pred_fallthru
      _
    %2866 = vsyncpa [#allocation3], 1
    %2867 = vsyncpa [#allocation6], 1
    %2868 = vsyncpa [#allocation9], 1
    %2869 = vsyncpa [#allocation12], 1
    %2870 = vsyncpa [#allocation15], 1
    %2871 = vsyncpa [#allocation18], 1
    %2872 = vsyncpa [#allocation21], 1
    %2873 = vsyncpa [#allocation4], 1
    %2874 = vsyncpa [#allocation24], 1

</llo_original>
